<compile_context>
chip_gen: v6e
topology: v6e:2x2x1
jax: 0.10.0
libtpu: 0.0.40
codegen_flags: <defaults>
</compile_context>

<pallas_src>
import functools
import math

import jax
import jax.numpy as jnp
from jax import lax
from jax.experimental import pallas as pl
from jax.experimental.pallas import tpu as pltpu


# ---------------------------------------------------------------------------
# Synthetic full-octree helpers (plain JAX glue, mirrors octree.xyzb /
# octree.search_xyzb for a fully populated octree).
# ---------------------------------------------------------------------------
_GRID = jnp.array(
    [[0, 0, 0], [0, 0, 1], [0, 1, 0], [0, 1, 1],
     [1, 0, 0], [1, 0, 1], [1, 1, 0], [1, 1, 1]], dtype=jnp.int32)


def _xyz2key(x, y, z, depth):
  key = jnp.zeros_like(x)
  for b in range(depth):
    key = key | (((x >> b) & 1) << (3 * b + 2))
    key = key | (((y >> b) & 1) << (3 * b + 1))
    key = key | (((z >> b) & 1) << (3 * b + 0))
  return key


def _key2xyz(key, depth):
  x = jnp.zeros_like(key)
  y = jnp.zeros_like(key)
  z = jnp.zeros_like(key)
  for b in range(depth):
    x = x | (((key >> (3 * b + 2)) & 1) << b)
    y = y | (((key >> (3 * b + 1)) & 1) << b)
    z = z | (((key >> (3 * b + 0)) & 1) << b)
  return x, y, z


def full_octree_xyzb(depth, batch_size):
  """xyzb of all nodes of a full octree at `depth` (Morton / z-order)."""
  n_per_batch = 8 ** depth
  n = jnp.arange(batch_size * n_per_batch, dtype=jnp.int32)
  batch = n // n_per_batch
  key = n % n_per_batch
  x, y, z = _key2xyz(key, depth)
  return x, y, z, batch


def full_octree_search(xyz, batch, depth):
  """search_xyzb for a full octree: -1 for out-of-bound coords."""
  bound = 2 ** depth
  in_bound = jnp.all((xyz >= 0) & (xyz < bound), axis=1)
  key = _xyz2key(xyz[:, 0], xyz[:, 1], xyz[:, 2], depth)
  idx = batch * (8 ** depth) + key
  return jnp.where(in_bound, idx, -1).astype(jnp.int32)


def trilinear_neighbors(pts, depth):
  """Per-point 8 neighbor node indices (or -1) and trilinear weights."""
  xyzf = pts[:, :3] - 0.5
  xyzi = jnp.floor(xyzf)
  frac = xyzf - xyzi                                            # [N, 3]
  xyzn = xyzi[:, None, :].astype(jnp.int32) + _GRID[None]       # [N, 8, 3]
  batch = jnp.broadcast_to(pts[:, 3:4].astype(jnp.int32),
                           (pts.shape[0], 8))                   # [N, 8]
  idx = full_octree_search(xyzn.reshape(-1, 3), batch.reshape(-1), depth)
  idx = idx.reshape(-1, 8)
  w = jnp.abs(jnp.prod(1.0 - _GRID[None].astype(jnp.float32)
                       - frac[:, None, :], axis=2))             # [N, 8]
  return idx, w.astype(jnp.float32)


# ---------------------------------------------------------------------------
# Pallas kernel: per-point gather of 8 neighbor rows + VPU weighted sum.
# ---------------------------------------------------------------------------
def _upsample_kernel(idx_ref, w_ref, data_ref, out_ref, *, tile_pts, fold):
  """Pure gather-FMA over the 8 trilinear neighbors of each point.

  idx_ref : SMEM int32 [Npad*8]      flattened, pre-clamped neighbor indices
  w_ref   : VMEM f32   [tile_pts, 8] pre-masked, pre-normalized weights
  data_ref: VMEM       [H, C]        all node features at the source depth
  out_ref : VMEM       [tile_pts//fold, fold*C]  lane-dense packed output
  """
  c = data_ref.shape[1]
  n_groups = tile_pts // fold
  # First idx entry of this tile; hoisted so per-neighbor offsets are static
  # additions on top of one dynamic per-group value.
  base8 = pl.program_id(0) * (tile_pts * 8)

  def group_body(g, carry):
    goff = base8 + g * (fold * 8)
    # `fold` consecutive points are packed into one lane-dense output row
    # (fold * C is a multiple of 128), so stores / output DMA stay dense.
    for j in range(fold):                                     # static unroll
      p = g * fold + j                                        # point in tile
      wrow = w_ref[pl.ds(p, 1), :].astype(jnp.float32)        # (1, 8), one load
      acc = jnp.zeros((1, c), jnp.float32)
      for k in range(8):                                      # static unroll
        t = idx_ref[goff + j * 8 + k]                         # SMEM scalar
        row = data_ref[pl.ds(t, 1), :].astype(jnp.float32)    # dynamic row
        acc = acc + wrow[:, k:k + 1] * row                    # VPU fma
      out_ref[pl.ds(g, 1), j * c:(j + 1) * c] = acc.astype(out_ref.dtype)
    return carry

  lax.fori_loop(0, n_groups, group_body, 0)


def octree_linear_upsample_pallas(data, idx, weight, *, tile_pts=512):
  """out[p] = sum_k w[p,k]*data[idx[p,k]] / (sum_k valid w[p,k] + 1e-12)."""
  npt, nk = idx.shape
  assert nk == 8
  h, c = data.shape

  # Fold the validity mask, index clamp and the 1/(sum w + 1e-12) normalizer
  # into the weights up front.  This is cheap fused XLA elementwise work (it
  # sits next to the trilinear-weight computation) and removes compare /
  # select / clamp / reciprocal work from the kernel's serial gather loop,
  # whose scalar path is the bottleneck.
  valid = idx >= 0
  wv = jnp.where(valid, weight.astype(jnp.float32), 0.0)
  norm = jnp.sum(wv, axis=1, keepdims=True)
  w_n = wv / (norm + 1e-12)
  idx_c = jnp.clip(jnp.where(valid, idx, 0), 0, h - 1).astype(jnp.int32)

  # Pack `fold` points per output row so the last output dim is a multiple of
  # 128 (lane-dense stores + dense output DMA).
  fold = 128 // math.gcd(c, 128)
  unit = 8 * fold                   # keeps the out-block sublane dim % 8 == 0
  tile_pts = min(tile_pts, pl.cdiv(npt, unit) * unit)
  tile_pts = max(unit, (tile_pts // unit) * unit)
  npad = pl.cdiv(npt, tile_pts) * tile_pts

  # Pad the tail tile with zero-weight neighbors (idx 0, w 0): padded rows
  # come out as exact zeros and are sliced off afterwards.
  pad = npad - npt
  idx_p = jnp.pad(idx_c, ((0, pad), (0, 0)))
  w_p = jnp.pad(w_n, ((0, pad), (0, 0)))
  idx_flat = idx_p.reshape(-1)      # scalar-prefetched into SMEM

  out_rows, out_cols = npad // fold, fold * c

  # Explicit scoped-VMEM budget: resident feature table + tile buffers (with
  # lane padding) + headroom, clamped so the config stays feasible across
  # v5e / v6e / v7x.
  itemsize = jnp.dtype(data.dtype).itemsize
  c_pad = pl.cdiv(c, 128) * 128
  vmem_bytes = (2 * h * c_pad * itemsize            # node features
                + 2 * tile_pts * 128 * 4            # weight tiles (lane padded)
                + 2 * (tile_pts // fold) * out_cols * itemsize
                + (4 << 20))                        # headroom
  vmem_limit = int(min(max(vmem_bytes, 32 << 20), 100 << 20))

  kernel = functools.partial(_upsample_kernel, tile_pts=tile_pts, fold=fold)
  out = pl.pallas_call(
      kernel,
      out_shape=jax.ShapeDtypeStruct((out_rows, out_cols), data.dtype),
      grid_spec=pltpu.PrefetchScalarGridSpec(
          num_scalar_prefetch=1,                    # idx_flat -> SMEM scalars
          grid=(npad // tile_pts,),
          in_specs=[
              pl.BlockSpec((tile_pts, 8), lambda i, idx_s: (i, 0)),   # weights
              pl.BlockSpec((h, c), lambda i, idx_s: (0, 0)),          # features
          ],
          out_specs=pl.BlockSpec((tile_pts // fold, out_cols),
                                 lambda i, idx_s: (i, 0)),
      ),
      compiler_params=pltpu.CompilerParams(
          dimension_semantics=("parallel",),
          vmem_limit_bytes=vmem_limit),
  )(idx_flat, w_p, data)

  # Unfold the lane-packed rows back to [N_pts, C] (layout-compatible reshape).
  return out.reshape(npad, c)[:npt]


# ---------------------------------------------------------------------------
# Module-level wrapper matching OctreeUpsample.forward (linear, nempty=False).
# ---------------------------------------------------------------------------
class OctreeUpsample:
  def __init__(self, method="linear", nempty=False):
    assert method == "linear" and not nempty
    self.method = method
    self.nempty = nempty

  def __call__(self, data, depth, batch_size, target_depth=None):
    if target_depth is None:
      target_depth = depth + 1
    if target_depth == depth:
      return data
    assert target_depth >= depth
    x, y, z, b = full_octree_xyzb(target_depth, batch_size)
    pts = jnp.stack([x, y, z, b], axis=1).astype(jnp.float32)
    pts = pts.at[:, :3].set((pts[:, :3] + 0.5) * 2.0 ** (depth - target_depth))
    idx, w = trilinear_neighbors(pts, depth)
    return octree_linear_upsample_pallas(data, idx, w)


# ---------------------------------------------------------------------------
# Plain-JAX reference for verification (exact octree_linear_pts semantics).
# ---------------------------------------------------------------------------
def _reference(data, idx, w):
  valid = idx >= 0
  wv = jnp.where(valid, w, 0.0)
  gathered = data[jnp.clip(idx, 0, data.shape[0] - 1)]          # [N, 8, C]
  out = jnp.sum(wv[..., None] * gathered.astype(jnp.float32), axis=1)
  norm = jnp.sum(wv, axis=1, keepdims=True)
  return out / (norm + 1e-12)


def _run_case(key, depth, target_depth, batch_size, channels):
  nnum_depth = batch_size * 8 ** depth
  data = jax.random.normal(key, (nnum_depth, channels), dtype=jnp.float32)

  upsample = OctreeUpsample(method="linear", nempty=False)
  out = upsample(data, depth, batch_size, target_depth)
  out = jax.block_until_ready(out)

  x, y, z, b = full_octree_xyzb(target_depth, batch_size)
  pts = jnp.stack([x, y, z, b], axis=1).astype(jnp.float32)
  pts = pts.at[:, :3].set((pts[:, :3] + 0.5) * 2.0 ** (depth - target_depth))
  idx, w = trilinear_neighbors(pts, depth)
  ref = _reference(data, idx, w)

  assert out.shape == (batch_size * 8 ** target_depth, channels)
  err = float(jnp.max(jnp.abs(out - ref)))
  assert jnp.allclose(out, ref, atol=1e-4, rtol=1e-4), err


if __name__ == "__main__":
  key = jax.random.PRNGKey(0)
  k0, k1 = jax.random.split(key)

  # Small case: depth 1 -> 2, batch 2, C=8 (fold=16 lane packing).
  _run_case(k0, depth=1, target_depth=2, batch_size=2, channels=8)
  # Slightly larger case: depth 2 -> 3, batch 1, C=32 (fold=4 lane packing).
  _run_case(k1, depth=2, target_depth=3, batch_size=1, channels=32)

  print("KERNEL_OK")
</pallas_src>

<mosaic_0001>
module attributes {stable_mosaic.version = 11 : i64} {
  func.func @_upsample_kernel(%arg0: i32, %arg1: memref<1024xi32, #tpu.memory_space<smem>>, %arg2: memref<128x8xf32, #tpu.memory_space<vmem>>, %arg3: memref<16x8xf32, #tpu.memory_space<vmem>>, %arg4: memref<8x128xf32, #tpu.memory_space<vmem>>) attributes {dimension_semantics = [#tpu.dimension_semantics<parallel>], iteration_bounds = array<i64: 1>, scalar_prefetch = 1 : i64, scratch_operands = 0 : i64, tpu.core_type = #tpu.core_type<tc>, window_params = [{transform_indices = @transform_0, window_bounds = array<i64: 128, 8>}, {pipeline_mode = #tpu.pipeline_mode<synchronous>, transform_indices = @transform_1, window_bounds = array<i64: 16, 8>}, {transform_indices = @transform_2, window_bounds = array<i64: 8, 128>}]} {
    %c1024_i32 = arith.constant 1024 : i32
    %0 = arith.muli %arg0, %c1024_i32 : i32
    %c0_i32 = arith.constant 0 : i32
    %c8_i32 = arith.constant 8 : i32
    %1 = arith.addi %c0_i32, %c8_i32 : i32
    %c1_i32 = arith.constant 1 : i32
    scf.for %arg5 = %c0_i32 to %1 step %c1_i32  : i32 {
      %c128_i32 = arith.constant 128 : i32
      %2 = arith.muli %arg5, %c128_i32 : i32
      %3 = arith.addi %0, %2 : i32
      %c16_i32 = arith.constant 16 : i32
      %4 = arith.muli %arg5, %c16_i32 : i32
      %c0_i32_1 = arith.constant 0 : i32
      %5 = arith.addi %4, %c0_i32_1 : i32
      %6 = arith.index_cast %5 : i32 to index
      %c0 = arith.constant 0 : index
      %7 = vector.load %arg2[%6, %c0] : memref<128x8xf32, #tpu.memory_space<vmem>>, vector<1x8xf32>
      %cst = arith.constant 0.000000e+00 : f32
      %8 = vector.broadcast %cst : f32 to vector<1x8xf32>
      %c0_i32_2 = arith.constant 0 : i32
      %9 = arith.addi %3, %c0_i32_2 : i32
      %c0_i32_3 = arith.constant 0 : i32
      %10 = arith.addi %9, %c0_i32_3 : i32
      %11 = arith.index_cast %10 : i32 to index
      %12 = memref.load %arg1[%11] : memref<1024xi32, #tpu.memory_space<smem>>
      %13 = arith.index_cast %12 : i32 to index
      %c0_4 = arith.constant 0 : index
      %14 = vector.load %arg3[%13, %c0_4] : memref<16x8xf32, #tpu.memory_space<vmem>>, vector<1x8xf32>
      %15 = vector.extract_strided_slice %7 {offsets = [0, 0], sizes = [1, 1], strides = [1, 1]} : vector<1x8xf32> to vector<1x1xf32>
      %16 = vector.broadcast %15 : vector<1x1xf32> to vector<1x8xf32>
      %17 = arith.mulf %16, %14 : vector<1x8xf32>
      %18 = arith.addf %8, %17 : vector<1x8xf32>
      %c0_i32_5 = arith.constant 0 : i32
      %19 = arith.addi %3, %c0_i32_5 : i32
      %c1_i32_6 = arith.constant 1 : i32
      %20 = arith.addi %19, %c1_i32_6 : i32
      %21 = arith.index_cast %20 : i32 to index
      %22 = memref.load %arg1[%21] : memref<1024xi32, #tpu.memory_space<smem>>
      %23 = arith.index_cast %22 : i32 to index
      %c0_7 = arith.constant 0 : index
      %24 = vector.load %arg3[%23, %c0_7] : memref<16x8xf32, #tpu.memory_space<vmem>>, vector<1x8xf32>
      %25 = vector.extract_strided_slice %7 {offsets = [0, 1], sizes = [1, 1], strides = [1, 1]} : vector<1x8xf32> to vector<1x1xf32>
      %26 = vector.broadcast %25 : vector<1x1xf32> to vector<1x8xf32>
      %27 = arith.mulf %26, %24 : vector<1x8xf32>
      %28 = arith.addf %18, %27 : vector<1x8xf32>
      %c0_i32_8 = arith.constant 0 : i32
      %29 = arith.addi %3, %c0_i32_8 : i32
      %c2_i32 = arith.constant 2 : i32
      %30 = arith.addi %29, %c2_i32 : i32
      %31 = arith.index_cast %30 : i32 to index
      %32 = memref.load %arg1[%31] : memref<1024xi32, #tpu.memory_space<smem>>
      %33 = arith.index_cast %32 : i32 to index
      %c0_9 = arith.constant 0 : index
      %34 = vector.load %arg3[%33, %c0_9] : memref<16x8xf32, #tpu.memory_space<vmem>>, vector<1x8xf32>
      %35 = vector.extract_strided_slice %7 {offsets = [0, 2], sizes = [1, 1], strides = [1, 1]} : vector<1x8xf32> to vector<1x1xf32>
      %36 = vector.broadcast %35 : vector<1x1xf32> to vector<1x8xf32>
      %37 = arith.mulf %36, %34 : vector<1x8xf32>
      %38 = arith.addf %28, %37 : vector<1x8xf32>
      %c0_i32_10 = arith.constant 0 : i32
      %39 = arith.addi %3, %c0_i32_10 : i32
      %c3_i32 = arith.constant 3 : i32
      %40 = arith.addi %39, %c3_i32 : i32
      %41 = arith.index_cast %40 : i32 to index
      %42 = memref.load %arg1[%41] : memref<1024xi32, #tpu.memory_space<smem>>
      %43 = arith.index_cast %42 : i32 to index
      %c0_11 = arith.constant 0 : index
      %44 = vector.load %arg3[%43, %c0_11] : memref<16x8xf32, #tpu.memory_space<vmem>>, vector<1x8xf32>
      %45 = vector.extract_strided_slice %7 {offsets = [0, 3], sizes = [1, 1], strides = [1, 1]} : vector<1x8xf32> to vector<1x1xf32>
      %46 = vector.broadcast %45 : vector<1x1xf32> to vector<1x8xf32>
      %47 = arith.mulf %46, %44 : vector<1x8xf32>
      %48 = arith.addf %38, %47 : vector<1x8xf32>
      %c0_i32_12 = arith.constant 0 : i32
      %49 = arith.addi %3, %c0_i32_12 : i32
      %c4_i32 = arith.constant 4 : i32
      %50 = arith.addi %49, %c4_i32 : i32
      %51 = arith.index_cast %50 : i32 to index
      %52 = memref.load %arg1[%51] : memref<1024xi32, #tpu.memory_space<smem>>
      %53 = arith.index_cast %52 : i32 to index
      %c0_13 = arith.constant 0 : index
      %54 = vector.load %arg3[%53, %c0_13] : memref<16x8xf32, #tpu.memory_space<vmem>>, vector<1x8xf32>
      %55 = vector.extract_strided_slice %7 {offsets = [0, 4], sizes = [1, 1], strides = [1, 1]} : vector<1x8xf32> to vector<1x1xf32>
      %56 = vector.broadcast %55 : vector<1x1xf32> to vector<1x8xf32>
      %57 = arith.mulf %56, %54 : vector<1x8xf32>
      %58 = arith.addf %48, %57 : vector<1x8xf32>
      %c0_i32_14 = arith.constant 0 : i32
      %59 = arith.addi %3, %c0_i32_14 : i32
      %c5_i32 = arith.constant 5 : i32
      %60 = arith.addi %59, %c5_i32 : i32
      %61 = arith.index_cast %60 : i32 to index
      %62 = memref.load %arg1[%61] : memref<1024xi32, #tpu.memory_space<smem>>
      %63 = arith.index_cast %62 : i32 to index
      %c0_15 = arith.constant 0 : index
      %64 = vector.load %arg3[%63, %c0_15] : memref<16x8xf32, #tpu.memory_space<vmem>>, vector<1x8xf32>
      %65 = vector.extract_strided_slice %7 {offsets = [0, 5], sizes = [1, 1], strides = [1, 1]} : vector<1x8xf32> to vector<1x1xf32>
      %66 = vector.broadcast %65 : vector<1x1xf32> to vector<1x8xf32>
      %67 = arith.mulf %66, %64 : vector<1x8xf32>
      %68 = arith.addf %58, %67 : vector<1x8xf32>
      %c0_i32_16 = arith.constant 0 : i32
      %69 = arith.addi %3, %c0_i32_16 : i32
      %c6_i32 = arith.constant 6 : i32
      %70 = arith.addi %69, %c6_i32 : i32
      %71 = arith.index_cast %70 : i32 to index
      %72 = memref.load %arg1[%71] : memref<1024xi32, #tpu.memory_space<smem>>
      %73 = arith.index_cast %72 : i32 to index
      %c0_17 = arith.constant 0 : index
      %74 = vector.load %arg3[%73, %c0_17] : memref<16x8xf32, #tpu.memory_space<vmem>>, vector<1x8xf32>
      %75 = vector.extract_strided_slice %7 {offsets = [0, 6], sizes = [1, 1], strides = [1, 1]} : vector<1x8xf32> to vector<1x1xf32>
      %76 = vector.broadcast %75 : vector<1x1xf32> to vector<1x8xf32>
      %77 = arith.mulf %76, %74 : vector<1x8xf32>
      %78 = arith.addf %68, %77 : vector<1x8xf32>
      %c0_i32_18 = arith.constant 0 : i32
      %79 = arith.addi %3, %c0_i32_18 : i32
      %c7_i32 = arith.constant 7 : i32
      %80 = arith.addi %79, %c7_i32 : i32
      %81 = arith.index_cast %80 : i32 to index
      %82 = memref.load %arg1[%81] : memref<1024xi32, #tpu.memory_space<smem>>
      %83 = arith.index_cast %82 : i32 to index
      %c0_19 = arith.constant 0 : index
      %84 = vector.load %arg3[%83, %c0_19] : memref<16x8xf32, #tpu.memory_space<vmem>>, vector<1x8xf32>
      %85 = vector.extract_strided_slice %7 {offsets = [0, 7], sizes = [1, 1], strides = [1, 1]} : vector<1x8xf32> to vector<1x1xf32>
      %86 = vector.broadcast %85 : vector<1x1xf32> to vector<1x8xf32>
      %87 = arith.mulf %86, %84 : vector<1x8xf32>
      %88 = arith.addf %78, %87 : vector<1x8xf32>
      %89 = arith.index_cast %arg5 : i32 to index
      %c0_20 = arith.constant 0 : index
      %90 = vector.load %arg4[%89, %c0_20] : memref<8x128xf32, #tpu.memory_space<vmem>>, vector<1x8xf32>
      tpu.vector_store %arg4[%89, %c0_20], %88 {strides = array<i32>} : memref<8x128xf32, #tpu.memory_space<vmem>>, vector<1x8xf32>,
      %c16_i32_21 = arith.constant 16 : i32
      %91 = arith.muli %arg5, %c16_i32_21 : i32
      %c1_i32_22 = arith.constant 1 : i32
      %92 = arith.addi %91, %c1_i32_22 : i32
      %93 = arith.index_cast %92 : i32 to index
      %c0_23 = arith.constant 0 : index
      %94 = vector.load %arg2[%93, %c0_23] : memref<128x8xf32, #tpu.memory_space<vmem>>, vector<1x8xf32>
      %cst_24 = arith.constant 0.000000e+00 : f32
      %95 = vector.broadcast %cst_24 : f32 to vector<1x8xf32>
      %c8_i32_25 = arith.constant 8 : i32
      %96 = arith.addi %3, %c8_i32_25 : i32
      %c0_i32_26 = arith.constant 0 : i32
      %97 = arith.addi %96, %c0_i32_26 : i32
      %98 = arith.index_cast %97 : i32 to index
      %99 = memref.load %arg1[%98] : memref<1024xi32, #tpu.memory_space<smem>>
      %100 = arith.index_cast %99 : i32 to index
      %c0_27 = arith.constant 0 : index
      %101 = vector.load %arg3[%100, %c0_27] : memref<16x8xf32, #tpu.memory_space<vmem>>, vector<1x8xf32>
      %102 = vector.extract_strided_slice %94 {offsets = [0, 0], sizes = [1, 1], strides = [1, 1]} : vector<1x8xf32> to vector<1x1xf32>
      %103 = vector.broadcast %102 : vector<1x1xf32> to vector<1x8xf32>
      %104 = arith.mulf %103, %101 : vector<1x8xf32>
      %105 = arith.addf %95, %104 : vector<1x8xf32>
      %c8_i32_28 = arith.constant 8 : i32
      %106 = arith.addi %3, %c8_i32_28 : i32
      %c1_i32_29 = arith.constant 1 : i32
      %107 = arith.addi %106, %c1_i32_29 : i32
      %108 = arith.index_cast %107 : i32 to index
      %109 = memref.load %arg1[%108] : memref<1024xi32, #tpu.memory_space<smem>>
      %110 = arith.index_cast %109 : i32 to index
      %c0_30 = arith.constant 0 : index
      %111 = vector.load %arg3[%110, %c0_30] : memref<16x8xf32, #tpu.memory_space<vmem>>, vector<1x8xf32>
      %112 = vector.extract_strided_slice %94 {offsets = [0, 1], sizes = [1, 1], strides = [1, 1]} : vector<1x8xf32> to vector<1x1xf32>
      %113 = vector.broadcast %112 : vector<1x1xf32> to vector<1x8xf32>
      %114 = arith.mulf %113, %111 : vector<1x8xf32>
      %115 = arith.addf %105, %114 : vector<1x8xf32>
      %c8_i32_31 = arith.constant 8 : i32
      %116 = arith.addi %3, %c8_i32_31 : i32
      %c2_i32_32 = arith.constant 2 : i32
      %117 = arith.addi %116, %c2_i32_32 : i32
      %118 = arith.index_cast %117 : i32 to index
      %119 = memref.load %arg1[%118] : memref<1024xi32, #tpu.memory_space<smem>>
      %120 = arith.index_cast %119 : i32 to index
      %c0_33 = arith.constant 0 : index
      %121 = vector.load %arg3[%120, %c0_33] : memref<16x8xf32, #tpu.memory_space<vmem>>, vector<1x8xf32>
      %122 = vector.extract_strided_slice %94 {offsets = [0, 2], sizes = [1, 1], strides = [1, 1]} : vector<1x8xf32> to vector<1x1xf32>
      %123 = vector.broadcast %122 : vector<1x1xf32> to vector<1x8xf32>
      %124 = arith.mulf %123, %121 : vector<1x8xf32>
      %125 = arith.addf %115, %124 : vector<1x8xf32>
      %c8_i32_34 = arith.constant 8 : i32
      %126 = arith.addi %3, %c8_i32_34 : i32
      %c3_i32_35 = arith.constant 3 : i32
      %127 = arith.addi %126, %c3_i32_35 : i32
      %128 = arith.index_cast %127 : i32 to index
      %129 = memref.load %arg1[%128] : memref<1024xi32, #tpu.memory_space<smem>>
      %130 = arith.index_cast %129 : i32 to index
      %c0_36 = arith.constant 0 : index
      %131 = vector.load %arg3[%130, %c0_36] : memref<16x8xf32, #tpu.memory_space<vmem>>, vector<1x8xf32>
      %132 = vector.extract_strided_slice %94 {offsets = [0, 3], sizes = [1, 1], strides = [1, 1]} : vector<1x8xf32> to vector<1x1xf32>
      %133 = vector.broadcast %132 : vector<1x1xf32> to vector<1x8xf32>
      %134 = arith.mulf %133, %131 : vector<1x8xf32>
      %135 = arith.addf %125, %134 : vector<1x8xf32>
      %c8_i32_37 = arith.constant 8 : i32
      %136 = arith.addi %3, %c8_i32_37 : i32
      %c4_i32_38 = arith.constant 4 : i32
      %137 = arith.addi %136, %c4_i32_38 : i32
      %138 = arith.index_cast %137 : i32 to index
      %139 = memref.load %arg1[%138] : memref<1024xi32, #tpu.memory_space<smem>>
      %140 = arith.index_cast %139 : i32 to index
      %c0_39 = arith.constant 0 : index
      %141 = vector.load %arg3[%140, %c0_39] : memref<16x8xf32, #tpu.memory_space<vmem>>, vector<1x8xf32>
      %142 = vector.extract_strided_slice %94 {offsets = [0, 4], sizes = [1, 1], strides = [1, 1]} : vector<1x8xf32> to vector<1x1xf32>
      %143 = vector.broadcast %142 : vector<1x1xf32> to vector<1x8xf32>
      %144 = arith.mulf %143, %141 : vector<1x8xf32>
      %145 = arith.addf %135, %144 : vector<1x8xf32>
      %c8_i32_40 = arith.constant 8 : i32
      %146 = arith.addi %3, %c8_i32_40 : i32
      %c5_i32_41 = arith.constant 5 : i32
      %147 = arith.addi %146, %c5_i32_41 : i32
      %148 = arith.index_cast %147 : i32 to index
      %149 = memref.load %arg1[%148] : memref<1024xi32, #tpu.memory_space<smem>>
      %150 = arith.index_cast %149 : i32 to index
      %c0_42 = arith.constant 0 : index
      %151 = vector.load %arg3[%150, %c0_42] : memref<16x8xf32, #tpu.memory_space<vmem>>, vector<1x8xf32>
      %152 = vector.extract_strided_slice %94 {offsets = [0, 5], sizes = [1, 1], strides = [1, 1]} : vector<1x8xf32> to vector<1x1xf32>
      %153 = vector.broadcast %152 : vector<1x1xf32> to vector<1x8xf32>
      %154 = arith.mulf %153, %151 : vector<1x8xf32>
      %155 = arith.addf %145, %154 : vector<1x8xf32>
      %c8_i32_43 = arith.constant 8 : i32
      %156 = arith.addi %3, %c8_i32_43 : i32
      %c6_i32_44 = arith.constant 6 : i32
      %157 = arith.addi %156, %c6_i32_44 : i32
      %158 = arith.index_cast %157 : i32 to index
      %159 = memref.load %arg1[%158] : memref<1024xi32, #tpu.memory_space<smem>>
      %160 = arith.index_cast %159 : i32 to index
      %c0_45 = arith.constant 0 : index
      %161 = vector.load %arg3[%160, %c0_45] : memref<16x8xf32, #tpu.memory_space<vmem>>, vector<1x8xf32>
      %162 = vector.extract_strided_slice %94 {offsets = [0, 6], sizes = [1, 1], strides = [1, 1]} : vector<1x8xf32> to vector<1x1xf32>
      %163 = vector.broadcast %162 : vector<1x1xf32> to vector<1x8xf32>
      %164 = arith.mulf %163, %161 : vector<1x8xf32>
      %165 = arith.addf %155, %164 : vector<1x8xf32>
      %c8_i32_46 = arith.constant 8 : i32
      %166 = arith.addi %3, %c8_i32_46 : i32
      %c7_i32_47 = arith.constant 7 : i32
      %167 = arith.addi %166, %c7_i32_47 : i32
      %168 = arith.index_cast %167 : i32 to index
      %169 = memref.load %arg1[%168] : memref<1024xi32, #tpu.memory_space<smem>>
      %170 = arith.index_cast %169 : i32 to index
      %c0_48 = arith.constant 0 : index
      %171 = vector.load %arg3[%170, %c0_48] : memref<16x8xf32, #tpu.memory_space<vmem>>, vector<1x8xf32>
      %172 = vector.extract_strided_slice %94 {offsets = [0, 7], sizes = [1, 1], strides = [1, 1]} : vector<1x8xf32> to vector<1x1xf32>
      %173 = vector.broadcast %172 : vector<1x1xf32> to vector<1x8xf32>
      %174 = arith.mulf %173, %171 : vector<1x8xf32>
      %175 = arith.addf %165, %174 : vector<1x8xf32>
      %176 = arith.index_cast %arg5 : i32 to index
      %c8 = arith.constant 8 : index
      %177 = vector.load %arg4[%176, %c8] : memref<8x128xf32, #tpu.memory_space<vmem>>, vector<1x8xf32>
      tpu.vector_store %arg4[%176, %c8], %175 {strides = array<i32>} : memref<8x128xf32, #tpu.memory_space<vmem>>, vector<1x8xf32>,
      %c16_i32_49 = arith.constant 16 : i32
      %178 = arith.muli %arg5, %c16_i32_49 : i32
      %c2_i32_50 = arith.constant 2 : i32
      %179 = arith.addi %178, %c2_i32_50 : i32
      %180 = arith.index_cast %179 : i32 to index
      %c0_51 = arith.constant 0 : index
      %181 = vector.load %arg2[%180, %c0_51] : memref<128x8xf32, #tpu.memory_space<vmem>>, vector<1x8xf32>
      %cst_52 = arith.constant 0.000000e+00 : f32
      %182 = vector.broadcast %cst_52 : f32 to vector<1x8xf32>
      %c16_i32_53 = arith.constant 16 : i32
      %183 = arith.addi %3, %c16_i32_53 : i32
      %c0_i32_54 = arith.constant 0 : i32
      %184 = arith.addi %183, %c0_i32_54 : i32
      %185 = arith.index_cast %184 : i32 to index
      %186 = memref.load %arg1[%185] : memref<1024xi32, #tpu.memory_space<smem>>
      %187 = arith.index_cast %186 : i32 to index
      %c0_55 = arith.constant 0 : index
      %188 = vector.load %arg3[%187, %c0_55] : memref<16x8xf32, #tpu.memory_space<vmem>>, vector<1x8xf32>
      %189 = vector.extract_strided_slice %181 {offsets = [0, 0], sizes = [1, 1], strides = [1, 1]} : vector<1x8xf32> to vector<1x1xf32>
      %190 = vector.broadcast %189 : vector<1x1xf32> to vector<1x8xf32>
      %191 = arith.mulf %190, %188 : vector<1x8xf32>
      %192 = arith.addf %182, %191 : vector<1x8xf32>
      %c16_i32_56 = arith.constant 16 : i32
      %193 = arith.addi %3, %c16_i32_56 : i32
      %c1_i32_57 = arith.constant 1 : i32
      %194 = arith.addi %193, %c1_i32_57 : i32
      %195 = arith.index_cast %194 : i32 to index
      %196 = memref.load %arg1[%195] : memref<1024xi32, #tpu.memory_space<smem>>
      %197 = arith.index_cast %196 : i32 to index
      %c0_58 = arith.constant 0 : index
      %198 = vector.load %arg3[%197, %c0_58] : memref<16x8xf32, #tpu.memory_space<vmem>>, vector<1x8xf32>
      %199 = vector.extract_strided_slice %181 {offsets = [0, 1], sizes = [1, 1], strides = [1, 1]} : vector<1x8xf32> to vector<1x1xf32>
      %200 = vector.broadcast %199 : vector<1x1xf32> to vector<1x8xf32>
      %201 = arith.mulf %200, %198 : vector<1x8xf32>
      %202 = arith.addf %192, %201 : vector<1x8xf32>
      %c16_i32_59 = arith.constant 16 : i32
      %203 = arith.addi %3, %c16_i32_59 : i32
      %c2_i32_60 = arith.constant 2 : i32
      %204 = arith.addi %203, %c2_i32_60 : i32
      %205 = arith.index_cast %204 : i32 to index
      %206 = memref.load %arg1[%205] : memref<1024xi32, #tpu.memory_space<smem>>
      %207 = arith.index_cast %206 : i32 to index
      %c0_61 = arith.constant 0 : index
      %208 = vector.load %arg3[%207, %c0_61] : memref<16x8xf32, #tpu.memory_space<vmem>>, vector<1x8xf32>
      %209 = vector.extract_strided_slice %181 {offsets = [0, 2], sizes = [1, 1], strides = [1, 1]} : vector<1x8xf32> to vector<1x1xf32>
      %210 = vector.broadcast %209 : vector<1x1xf32> to vector<1x8xf32>
      %211 = arith.mulf %210, %208 : vector<1x8xf32>
      %212 = arith.addf %202, %211 : vector<1x8xf32>
      %c16_i32_62 = arith.constant 16 : i32
      %213 = arith.addi %3, %c16_i32_62 : i32
      %c3_i32_63 = arith.constant 3 : i32
      %214 = arith.addi %213, %c3_i32_63 : i32
      %215 = arith.index_cast %214 : i32 to index
      %216 = memref.load %arg1[%215] : memref<1024xi32, #tpu.memory_space<smem>>
      %217 = arith.index_cast %216 : i32 to index
      %c0_64 = arith.constant 0 : index
      %218 = vector.load %arg3[%217, %c0_64] : memref<16x8xf32, #tpu.memory_space<vmem>>, vector<1x8xf32>
      %219 = vector.extract_strided_slice %181 {offsets = [0, 3], sizes = [1, 1], strides = [1, 1]} : vector<1x8xf32> to vector<1x1xf32>
      %220 = vector.broadcast %219 : vector<1x1xf32> to vector<1x8xf32>
      %221 = arith.mulf %220, %218 : vector<1x8xf32>
      %222 = arith.addf %212, %221 : vector<1x8xf32>
      %c16_i32_65 = arith.constant 16 : i32
      %223 = arith.addi %3, %c16_i32_65 : i32
      %c4_i32_66 = arith.constant 4 : i32
      %224 = arith.addi %223, %c4_i32_66 : i32
      %225 = arith.index_cast %224 : i32 to index
      %226 = memref.load %arg1[%225] : memref<1024xi32, #tpu.memory_space<smem>>
      %227 = arith.index_cast %226 : i32 to index
      %c0_67 = arith.constant 0 : index
      %228 = vector.load %arg3[%227, %c0_67] : memref<16x8xf32, #tpu.memory_space<vmem>>, vector<1x8xf32>
      %229 = vector.extract_strided_slice %181 {offsets = [0, 4], sizes = [1, 1], strides = [1, 1]} : vector<1x8xf32> to vector<1x1xf32>
      %230 = vector.broadcast %229 : vector<1x1xf32> to vector<1x8xf32>
      %231 = arith.mulf %230, %228 : vector<1x8xf32>
      %232 = arith.addf %222, %231 : vector<1x8xf32>
      %c16_i32_68 = arith.constant 16 : i32
      %233 = arith.addi %3, %c16_i32_68 : i32
      %c5_i32_69 = arith.constant 5 : i32
      %234 = arith.addi %233, %c5_i32_69 : i32
      %235 = arith.index_cast %234 : i32 to index
      %236 = memref.load %arg1[%235] : memref<1024xi32, #tpu.memory_space<smem>>
      %237 = arith.index_cast %236 : i32 to index
      %c0_70 = arith.constant 0 : index
      %238 = vector.load %arg3[%237, %c0_70] : memref<16x8xf32, #tpu.memory_space<vmem>>, vector<1x8xf32>
      %239 = vector.extract_strided_slice %181 {offsets = [0, 5], sizes = [1, 1], strides = [1, 1]} : vector<1x8xf32> to vector<1x1xf32>
      %240 = vector.broadcast %239 : vector<1x1xf32> to vector<1x8xf32>
      %241 = arith.mulf %240, %238 : vector<1x8xf32>
      %242 = arith.addf %232, %241 : vector<1x8xf32>
      %c16_i32_71 = arith.constant 16 : i32
      %243 = arith.addi %3, %c16_i32_71 : i32
      %c6_i32_72 = arith.constant 6 : i32
      %244 = arith.addi %243, %c6_i32_72 : i32
      %245 = arith.index_cast %244 : i32 to index
      %246 = memref.load %arg1[%245] : memref<1024xi32, #tpu.memory_space<smem>>
      %247 = arith.index_cast %246 : i32 to index
      %c0_73 = arith.constant 0 : index
      %248 = vector.load %arg3[%247, %c0_73] : memref<16x8xf32, #tpu.memory_space<vmem>>, vector<1x8xf32>
      %249 = vector.extract_strided_slice %181 {offsets = [0, 6], sizes = [1, 1], strides = [1, 1]} : vector<1x8xf32> to vector<1x1xf32>
      %250 = vector.broadcast %249 : vector<1x1xf32> to vector<1x8xf32>
      %251 = arith.mulf %250, %248 : vector<1x8xf32>
      %252 = arith.addf %242, %251 : vector<1x8xf32>
      %c16_i32_74 = arith.constant 16 : i32
      %253 = arith.addi %3, %c16_i32_74 : i32
      %c7_i32_75 = arith.constant 7 : i32
      %254 = arith.addi %253, %c7_i32_75 : i32
      %255 = arith.index_cast %254 : i32 to index
      %256 = memref.load %arg1[%255] : memref<1024xi32, #tpu.memory_space<smem>>
      %257 = arith.index_cast %256 : i32 to index
      %c0_76 = arith.constant 0 : index
      %258 = vector.load %arg3[%257, %c0_76] : memref<16x8xf32, #tpu.memory_space<vmem>>, vector<1x8xf32>
      %259 = vector.extract_strided_slice %181 {offsets = [0, 7], sizes = [1, 1], strides = [1, 1]} : vector<1x8xf32> to vector<1x1xf32>
      %260 = vector.broadcast %259 : vector<1x1xf32> to vector<1x8xf32>
      %261 = arith.mulf %260, %258 : vector<1x8xf32>
      %262 = arith.addf %252, %261 : vector<1x8xf32>
      %263 = arith.index_cast %arg5 : i32 to index
      %c16 = arith.constant 16 : index
      %264 = vector.load %arg4[%263, %c16] : memref<8x128xf32, #tpu.memory_space<vmem>>, vector<1x8xf32>
      tpu.vector_store %arg4[%263, %c16], %262 {strides = array<i32>} : memref<8x128xf32, #tpu.memory_space<vmem>>, vector<1x8xf32>,
      %c16_i32_77 = arith.constant 16 : i32
      %265 = arith.muli %arg5, %c16_i32_77 : i32
      %c3_i32_78 = arith.constant 3 : i32
      %266 = arith.addi %265, %c3_i32_78 : i32
      %267 = arith.index_cast %266 : i32 to index
      %c0_79 = arith.constant 0 : index
      %268 = vector.load %arg2[%267, %c0_79] : memref<128x8xf32, #tpu.memory_space<vmem>>, vector<1x8xf32>
      %cst_80 = arith.constant 0.000000e+00 : f32
      %269 = vector.broadcast %cst_80 : f32 to vector<1x8xf32>
      %c24_i32 = arith.constant 24 : i32
      %270 = arith.addi %3, %c24_i32 : i32
      %c0_i32_81 = arith.constant 0 : i32
      %271 = arith.addi %270, %c0_i32_81 : i32
      %272 = arith.index_cast %271 : i32 to index
      %273 = memref.load %arg1[%272] : memref<1024xi32, #tpu.memory_space<smem>>
      %274 = arith.index_cast %273 : i32 to index
      %c0_82 = arith.constant 0 : index
      %275 = vector.load %arg3[%274, %c0_82] : memref<16x8xf32, #tpu.memory_space<vmem>>, vector<1x8xf32>
      %276 = vector.extract_strided_slice %268 {offsets = [0, 0], sizes = [1, 1], strides = [1, 1]} : vector<1x8xf32> to vector<1x1xf32>
      %277 = vector.broadcast %276 : vector<1x1xf32> to vector<1x8xf32>
      %278 = arith.mulf %277, %275 : vector<1x8xf32>
      %279 = arith.addf %269, %278 : vector<1x8xf32>
      %c24_i32_83 = arith.constant 24 : i32
      %280 = arith.addi %3, %c24_i32_83 : i32
      %c1_i32_84 = arith.constant 1 : i32
      %281 = arith.addi %280, %c1_i32_84 : i32
      %282 = arith.index_cast %281 : i32 to index
      %283 = memref.load %arg1[%282] : memref<1024xi32, #tpu.memory_space<smem>>
      %284 = arith.index_cast %283 : i32 to index
      %c0_85 = arith.constant 0 : index
      %285 = vector.load %arg3[%284, %c0_85] : memref<16x8xf32, #tpu.memory_space<vmem>>, vector<1x8xf32>
      %286 = vector.extract_strided_slice %268 {offsets = [0, 1], sizes = [1, 1], strides = [1, 1]} : vector<1x8xf32> to vector<1x1xf32>
      %287 = vector.broadcast %286 : vector<1x1xf32> to vector<1x8xf32>
      %288 = arith.mulf %287, %285 : vector<1x8xf32>
      %289 = arith.addf %279, %288 : vector<1x8xf32>
      %c24_i32_86 = arith.constant 24 : i32
      %290 = arith.addi %3, %c24_i32_86 : i32
      %c2_i32_87 = arith.constant 2 : i32
      %291 = arith.addi %290, %c2_i32_87 : i32
      %292 = arith.index_cast %291 : i32 to index
      %293 = memref.load %arg1[%292] : memref<1024xi32, #tpu.memory_space<smem>>
      %294 = arith.index_cast %293 : i32 to index
      %c0_88 = arith.constant 0 : index
      %295 = vector.load %arg3[%294, %c0_88] : memref<16x8xf32, #tpu.memory_space<vmem>>, vector<1x8xf32>
      %296 = vector.extract_strided_slice %268 {offsets = [0, 2], sizes = [1, 1], strides = [1, 1]} : vector<1x8xf32> to vector<1x1xf32>
      %297 = vector.broadcast %296 : vector<1x1xf32> to vector<1x8xf32>
      %298 = arith.mulf %297, %295 : vector<1x8xf32>
      %299 = arith.addf %289, %298 : vector<1x8xf32>
      %c24_i32_89 = arith.constant 24 : i32
      %300 = arith.addi %3, %c24_i32_89 : i32
      %c3_i32_90 = arith.constant 3 : i32
      %301 = arith.addi %300, %c3_i32_90 : i32
      %302 = arith.index_cast %301 : i32 to index
      %303 = memref.load %arg1[%302] : memref<1024xi32, #tpu.memory_space<smem>>
      %304 = arith.index_cast %303 : i32 to index
      %c0_91 = arith.constant 0 : index
      %305 = vector.load %arg3[%304, %c0_91] : memref<16x8xf32, #tpu.memory_space<vmem>>, vector<1x8xf32>
      %306 = vector.extract_strided_slice %268 {offsets = [0, 3], sizes = [1, 1], strides = [1, 1]} : vector<1x8xf32> to vector<1x1xf32>
      %307 = vector.broadcast %306 : vector<1x1xf32> to vector<1x8xf32>
      %308 = arith.mulf %307, %305 : vector<1x8xf32>
      %309 = arith.addf %299, %308 : vector<1x8xf32>
      %c24_i32_92 = arith.constant 24 : i32
      %310 = arith.addi %3, %c24_i32_92 : i32
      %c4_i32_93 = arith.constant 4 : i32
      %311 = arith.addi %310, %c4_i32_93 : i32
      %312 = arith.index_cast %311 : i32 to index
      %313 = memref.load %arg1[%312] : memref<1024xi32, #tpu.memory_space<smem>>
      %314 = arith.index_cast %313 : i32 to index
      %c0_94 = arith.constant 0 : index
      %315 = vector.load %arg3[%314, %c0_94] : memref<16x8xf32, #tpu.memory_space<vmem>>, vector<1x8xf32>
      %316 = vector.extract_strided_slice %268 {offsets = [0, 4], sizes = [1, 1], strides = [1, 1]} : vector<1x8xf32> to vector<1x1xf32>
      %317 = vector.broadcast %316 : vector<1x1xf32> to vector<1x8xf32>
      %318 = arith.mulf %317, %315 : vector<1x8xf32>
      %319 = arith.addf %309, %318 : vector<1x8xf32>
      %c24_i32_95 = arith.constant 24 : i32
      %320 = arith.addi %3, %c24_i32_95 : i32
      %c5_i32_96 = arith.constant 5 : i32
      %321 = arith.addi %320, %c5_i32_96 : i32
      %322 = arith.index_cast %321 : i32 to index
      %323 = memref.load %arg1[%322] : memref<1024xi32, #tpu.memory_space<smem>>
      %324 = arith.index_cast %323 : i32 to index
      %c0_97 = arith.constant 0 : index
      %325 = vector.load %arg3[%324, %c0_97] : memref<16x8xf32, #tpu.memory_space<vmem>>, vector<1x8xf32>
      %326 = vector.extract_strided_slice %268 {offsets = [0, 5], sizes = [1, 1], strides = [1, 1]} : vector<1x8xf32> to vector<1x1xf32>
      %327 = vector.broadcast %326 : vector<1x1xf32> to vector<1x8xf32>
      %328 = arith.mulf %327, %325 : vector<1x8xf32>
      %329 = arith.addf %319, %328 : vector<1x8xf32>
      %c24_i32_98 = arith.constant 24 : i32
      %330 = arith.addi %3, %c24_i32_98 : i32
      %c6_i32_99 = arith.constant 6 : i32
      %331 = arith.addi %330, %c6_i32_99 : i32
      %332 = arith.index_cast %331 : i32 to index
      %333 = memref.load %arg1[%332] : memref<1024xi32, #tpu.memory_space<smem>>
      %334 = arith.index_cast %333 : i32 to index
      %c0_100 = arith.constant 0 : index
      %335 = vector.load %arg3[%334, %c0_100] : memref<16x8xf32, #tpu.memory_space<vmem>>, vector<1x8xf32>
      %336 = vector.extract_strided_slice %268 {offsets = [0, 6], sizes = [1, 1], strides = [1, 1]} : vector<1x8xf32> to vector<1x1xf32>
      %337 = vector.broadcast %336 : vector<1x1xf32> to vector<1x8xf32>
      %338 = arith.mulf %337, %335 : vector<1x8xf32>
      %339 = arith.addf %329, %338 : vector<1x8xf32>
      %c24_i32_101 = arith.constant 24 : i32
      %340 = arith.addi %3, %c24_i32_101 : i32
      %c7_i32_102 = arith.constant 7 : i32
      %341 = arith.addi %340, %c7_i32_102 : i32
      %342 = arith.index_cast %341 : i32 to index
      %343 = memref.load %arg1[%342] : memref<1024xi32, #tpu.memory_space<smem>>
      %344 = arith.index_cast %343 : i32 to index
      %c0_103 = arith.constant 0 : index
      %345 = vector.load %arg3[%344, %c0_103] : memref<16x8xf32, #tpu.memory_space<vmem>>, vector<1x8xf32>
      %346 = vector.extract_strided_slice %268 {offsets = [0, 7], sizes = [1, 1], strides = [1, 1]} : vector<1x8xf32> to vector<1x1xf32>
      %347 = vector.broadcast %346 : vector<1x1xf32> to vector<1x8xf32>
      %348 = arith.mulf %347, %345 : vector<1x8xf32>
      %349 = arith.addf %339, %348 : vector<1x8xf32>
      %350 = arith.index_cast %arg5 : i32 to index
      %c24 = arith.constant 24 : index
      %351 = vector.load %arg4[%350, %c24] : memref<8x128xf32, #tpu.memory_space<vmem>>, vector<1x8xf32>
      tpu.vector_store %arg4[%350, %c24], %349 {strides = array<i32>} : memref<8x128xf32, #tpu.memory_space<vmem>>, vector<1x8xf32>,
      %c16_i32_104 = arith.constant 16 : i32
      %352 = arith.muli %arg5, %c16_i32_104 : i32
      %c4_i32_105 = arith.constant 4 : i32
      %353 = arith.addi %352, %c4_i32_105 : i32
      %354 = arith.index_cast %353 : i32 to index
      %c0_106 = arith.constant 0 : index
      %355 = vector.load %arg2[%354, %c0_106] : memref<128x8xf32, #tpu.memory_space<vmem>>, vector<1x8xf32>
      %cst_107 = arith.constant 0.000000e+00 : f32
      %356 = vector.broadcast %cst_107 : f32 to vector<1x8xf32>
      %c32_i32 = arith.constant 32 : i32
      %357 = arith.addi %3, %c32_i32 : i32
      %c0_i32_108 = arith.constant 0 : i32
      %358 = arith.addi %357, %c0_i32_108 : i32
      %359 = arith.index_cast %358 : i32 to index
      %360 = memref.load %arg1[%359] : memref<1024xi32, #tpu.memory_space<smem>>
      %361 = arith.index_cast %360 : i32 to index
      %c0_109 = arith.constant 0 : index
      %362 = vector.load %arg3[%361, %c0_109] : memref<16x8xf32, #tpu.memory_space<vmem>>, vector<1x8xf32>
      %363 = vector.extract_strided_slice %355 {offsets = [0, 0], sizes = [1, 1], strides = [1, 1]} : vector<1x8xf32> to vector<1x1xf32>
      %364 = vector.broadcast %363 : vector<1x1xf32> to vector<1x8xf32>
      %365 = arith.mulf %364, %362 : vector<1x8xf32>
      %366 = arith.addf %356, %365 : vector<1x8xf32>
      %c32_i32_110 = arith.constant 32 : i32
      %367 = arith.addi %3, %c32_i32_110 : i32
      %c1_i32_111 = arith.constant 1 : i32
      %368 = arith.addi %367, %c1_i32_111 : i32
      %369 = arith.index_cast %368 : i32 to index
      %370 = memref.load %arg1[%369] : memref<1024xi32, #tpu.memory_space<smem>>
      %371 = arith.index_cast %370 : i32 to index
      %c0_112 = arith.constant 0 : index
      %372 = vector.load %arg3[%371, %c0_112] : memref<16x8xf32, #tpu.memory_space<vmem>>, vector<1x8xf32>
      %373 = vector.extract_strided_slice %355 {offsets = [0, 1], sizes = [1, 1], strides = [1, 1]} : vector<1x8xf32> to vector<1x1xf32>
      %374 = vector.broadcast %373 : vector<1x1xf32> to vector<1x8xf32>
      %375 = arith.mulf %374, %372 : vector<1x8xf32>
      %376 = arith.addf %366, %375 : vector<1x8xf32>
      %c32_i32_113 = arith.constant 32 : i32
      %377 = arith.addi %3, %c32_i32_113 : i32
      %c2_i32_114 = arith.constant 2 : i32
      %378 = arith.addi %377, %c2_i32_114 : i32
      %379 = arith.index_cast %378 : i32 to index
      %380 = memref.load %arg1[%379] : memref<1024xi32, #tpu.memory_space<smem>>
      %381 = arith.index_cast %380 : i32 to index
      %c0_115 = arith.constant 0 : index
      %382 = vector.load %arg3[%381, %c0_115] : memref<16x8xf32, #tpu.memory_space<vmem>>, vector<1x8xf32>
      %383 = vector.extract_strided_slice %355 {offsets = [0, 2], sizes = [1, 1], strides = [1, 1]} : vector<1x8xf32> to vector<1x1xf32>
      %384 = vector.broadcast %383 : vector<1x1xf32> to vector<1x8xf32>
      %385 = arith.mulf %384, %382 : vector<1x8xf32>
      %386 = arith.addf %376, %385 : vector<1x8xf32>
      %c32_i32_116 = arith.constant 32 : i32
      %387 = arith.addi %3, %c32_i32_116 : i32
      %c3_i32_117 = arith.constant 3 : i32
      %388 = arith.addi %387, %c3_i32_117 : i32
      %389 = arith.index_cast %388 : i32 to index
      %390 = memref.load %arg1[%389] : memref<1024xi32, #tpu.memory_space<smem>>
      %391 = arith.index_cast %390 : i32 to index
      %c0_118 = arith.constant 0 : index
      %392 = vector.load %arg3[%391, %c0_118] : memref<16x8xf32, #tpu.memory_space<vmem>>, vector<1x8xf32>
      %393 = vector.extract_strided_slice %355 {offsets = [0, 3], sizes = [1, 1], strides = [1, 1]} : vector<1x8xf32> to vector<1x1xf32>
      %394 = vector.broadcast %393 : vector<1x1xf32> to vector<1x8xf32>
      %395 = arith.mulf %394, %392 : vector<1x8xf32>
      %396 = arith.addf %386, %395 : vector<1x8xf32>
      %c32_i32_119 = arith.constant 32 : i32
      %397 = arith.addi %3, %c32_i32_119 : i32
      %c4_i32_120 = arith.constant 4 : i32
      %398 = arith.addi %397, %c4_i32_120 : i32
      %399 = arith.index_cast %398 : i32 to index
      %400 = memref.load %arg1[%399] : memref<1024xi32, #tpu.memory_space<smem>>
      %401 = arith.index_cast %400 : i32 to index
      %c0_121 = arith.constant 0 : index
      %402 = vector.load %arg3[%401, %c0_121] : memref<16x8xf32, #tpu.memory_space<vmem>>, vector<1x8xf32>
      %403 = vector.extract_strided_slice %355 {offsets = [0, 4], sizes = [1, 1], strides = [1, 1]} : vector<1x8xf32> to vector<1x1xf32>
      %404 = vector.broadcast %403 : vector<1x1xf32> to vector<1x8xf32>
      %405 = arith.mulf %404, %402 : vector<1x8xf32>
      %406 = arith.addf %396, %405 : vector<1x8xf32>
      %c32_i32_122 = arith.constant 32 : i32
      %407 = arith.addi %3, %c32_i32_122 : i32
      %c5_i32_123 = arith.constant 5 : i32
      %408 = arith.addi %407, %c5_i32_123 : i32
      %409 = arith.index_cast %408 : i32 to index
      %410 = memref.load %arg1[%409] : memref<1024xi32, #tpu.memory_space<smem>>
      %411 = arith.index_cast %410 : i32 to index
      %c0_124 = arith.constant 0 : index
      %412 = vector.load %arg3[%411, %c0_124] : memref<16x8xf32, #tpu.memory_space<vmem>>, vector<1x8xf32>
      %413 = vector.extract_strided_slice %355 {offsets = [0, 5], sizes = [1, 1], strides = [1, 1]} : vector<1x8xf32> to vector<1x1xf32>
      %414 = vector.broadcast %413 : vector<1x1xf32> to vector<1x8xf32>
      %415 = arith.mulf %414, %412 : vector<1x8xf32>
      %416 = arith.addf %406, %415 : vector<1x8xf32>
      %c32_i32_125 = arith.constant 32 : i32
      %417 = arith.addi %3, %c32_i32_125 : i32
      %c6_i32_126 = arith.constant 6 : i32
      %418 = arith.addi %417, %c6_i32_126 : i32
      %419 = arith.index_cast %418 : i32 to index
      %420 = memref.load %arg1[%419] : memref<1024xi32, #tpu.memory_space<smem>>
      %421 = arith.index_cast %420 : i32 to index
      %c0_127 = arith.constant 0 : index
      %422 = vector.load %arg3[%421, %c0_127] : memref<16x8xf32, #tpu.memory_space<vmem>>, vector<1x8xf32>
      %423 = vector.extract_strided_slice %355 {offsets = [0, 6], sizes = [1, 1], strides = [1, 1]} : vector<1x8xf32> to vector<1x1xf32>
      %424 = vector.broadcast %423 : vector<1x1xf32> to vector<1x8xf32>
      %425 = arith.mulf %424, %422 : vector<1x8xf32>
      %426 = arith.addf %416, %425 : vector<1x8xf32>
      %c32_i32_128 = arith.constant 32 : i32
      %427 = arith.addi %3, %c32_i32_128 : i32
      %c7_i32_129 = arith.constant 7 : i32
      %428 = arith.addi %427, %c7_i32_129 : i32
      %429 = arith.index_cast %428 : i32 to index
      %430 = memref.load %arg1[%429] : memref<1024xi32, #tpu.memory_space<smem>>
      %431 = arith.index_cast %430 : i32 to index
      %c0_130 = arith.constant 0 : index
      %432 = vector.load %arg3[%431, %c0_130] : memref<16x8xf32, #tpu.memory_space<vmem>>, vector<1x8xf32>
      %433 = vector.extract_strided_slice %355 {offsets = [0, 7], sizes = [1, 1], strides = [1, 1]} : vector<1x8xf32> to vector<1x1xf32>
      %434 = vector.broadcast %433 : vector<1x1xf32> to vector<1x8xf32>
      %435 = arith.mulf %434, %432 : vector<1x8xf32>
      %436 = arith.addf %426, %435 : vector<1x8xf32>
      %437 = arith.index_cast %arg5 : i32 to index
      %c32 = arith.constant 32 : index
      %438 = vector.load %arg4[%437, %c32] : memref<8x128xf32, #tpu.memory_space<vmem>>, vector<1x8xf32>
      tpu.vector_store %arg4[%437, %c32], %436 {strides = array<i32>} : memref<8x128xf32, #tpu.memory_space<vmem>>, vector<1x8xf32>,
      %c16_i32_131 = arith.constant 16 : i32
      %439 = arith.muli %arg5, %c16_i32_131 : i32
      %c5_i32_132 = arith.constant 5 : i32
      %440 = arith.addi %439, %c5_i32_132 : i32
      %441 = arith.index_cast %440 : i32 to index
      %c0_133 = arith.constant 0 : index
      %442 = vector.load %arg2[%441, %c0_133] : memref<128x8xf32, #tpu.memory_space<vmem>>, vector<1x8xf32>
      %cst_134 = arith.constant 0.000000e+00 : f32
      %443 = vector.broadcast %cst_134 : f32 to vector<1x8xf32>
      %c40_i32 = arith.constant 40 : i32
      %444 = arith.addi %3, %c40_i32 : i32
      %c0_i32_135 = arith.constant 0 : i32
      %445 = arith.addi %444, %c0_i32_135 : i32
      %446 = arith.index_cast %445 : i32 to index
      %447 = memref.load %arg1[%446] : memref<1024xi32, #tpu.memory_space<smem>>
      %448 = arith.index_cast %447 : i32 to index
      %c0_136 = arith.constant 0 : index
      %449 = vector.load %arg3[%448, %c0_136] : memref<16x8xf32, #tpu.memory_space<vmem>>, vector<1x8xf32>
      %450 = vector.extract_strided_slice %442 {offsets = [0, 0], sizes = [1, 1], strides = [1, 1]} : vector<1x8xf32> to vector<1x1xf32>
      %451 = vector.broadcast %450 : vector<1x1xf32> to vector<1x8xf32>
      %452 = arith.mulf %451, %449 : vector<1x8xf32>
      %453 = arith.addf %443, %452 : vector<1x8xf32>
      %c40_i32_137 = arith.constant 40 : i32
      %454 = arith.addi %3, %c40_i32_137 : i32
      %c1_i32_138 = arith.constant 1 : i32
      %455 = arith.addi %454, %c1_i32_138 : i32
      %456 = arith.index_cast %455 : i32 to index
      %457 = memref.load %arg1[%456] : memref<1024xi32, #tpu.memory_space<smem>>
      %458 = arith.index_cast %457 : i32 to index
      %c0_139 = arith.constant 0 : index
      %459 = vector.load %arg3[%458, %c0_139] : memref<16x8xf32, #tpu.memory_space<vmem>>, vector<1x8xf32>
      %460 = vector.extract_strided_slice %442 {offsets = [0, 1], sizes = [1, 1], strides = [1, 1]} : vector<1x8xf32> to vector<1x1xf32>
      %461 = vector.broadcast %460 : vector<1x1xf32> to vector<1x8xf32>
      %462 = arith.mulf %461, %459 : vector<1x8xf32>
      %463 = arith.addf %453, %462 : vector<1x8xf32>
      %c40_i32_140 = arith.constant 40 : i32
      %464 = arith.addi %3, %c40_i32_140 : i32
      %c2_i32_141 = arith.constant 2 : i32
      %465 = arith.addi %464, %c2_i32_141 : i32
      %466 = arith.index_cast %465 : i32 to index
      %467 = memref.load %arg1[%466] : memref<1024xi32, #tpu.memory_space<smem>>
      %468 = arith.index_cast %467 : i32 to index
      %c0_142 = arith.constant 0 : index
      %469 = vector.load %arg3[%468, %c0_142] : memref<16x8xf32, #tpu.memory_space<vmem>>, vector<1x8xf32>
      %470 = vector.extract_strided_slice %442 {offsets = [0, 2], sizes = [1, 1], strides = [1, 1]} : vector<1x8xf32> to vector<1x1xf32>
      %471 = vector.broadcast %470 : vector<1x1xf32> to vector<1x8xf32>
      %472 = arith.mulf %471, %469 : vector<1x8xf32>
      %473 = arith.addf %463, %472 : vector<1x8xf32>
      %c40_i32_143 = arith.constant 40 : i32
      %474 = arith.addi %3, %c40_i32_143 : i32
      %c3_i32_144 = arith.constant 3 : i32
      %475 = arith.addi %474, %c3_i32_144 : i32
      %476 = arith.index_cast %475 : i32 to index
      %477 = memref.load %arg1[%476] : memref<1024xi32, #tpu.memory_space<smem>>
      %478 = arith.index_cast %477 : i32 to index
      %c0_145 = arith.constant 0 : index
      %479 = vector.load %arg3[%478, %c0_145] : memref<16x8xf32, #tpu.memory_space<vmem>>, vector<1x8xf32>
      %480 = vector.extract_strided_slice %442 {offsets = [0, 3], sizes = [1, 1], strides = [1, 1]} : vector<1x8xf32> to vector<1x1xf32>
      %481 = vector.broadcast %480 : vector<1x1xf32> to vector<1x8xf32>
      %482 = arith.mulf %481, %479 : vector<1x8xf32>
      %483 = arith.addf %473, %482 : vector<1x8xf32>
      %c40_i32_146 = arith.constant 40 : i32
      %484 = arith.addi %3, %c40_i32_146 : i32
      %c4_i32_147 = arith.constant 4 : i32
      %485 = arith.addi %484, %c4_i32_147 : i32
      %486 = arith.index_cast %485 : i32 to index
      %487 = memref.load %arg1[%486] : memref<1024xi32, #tpu.memory_space<smem>>
      %488 = arith.index_cast %487 : i32 to index
      %c0_148 = arith.constant 0 : index
      %489 = vector.load %arg3[%488, %c0_148] : memref<16x8xf32, #tpu.memory_space<vmem>>, vector<1x8xf32>
      %490 = vector.extract_strided_slice %442 {offsets = [0, 4], sizes = [1, 1], strides = [1, 1]} : vector<1x8xf32> to vector<1x1xf32>
      %491 = vector.broadcast %490 : vector<1x1xf32> to vector<1x8xf32>
      %492 = arith.mulf %491, %489 : vector<1x8xf32>
      %493 = arith.addf %483, %492 : vector<1x8xf32>
      %c40_i32_149 = arith.constant 40 : i32
      %494 = arith.addi %3, %c40_i32_149 : i32
      %c5_i32_150 = arith.constant 5 : i32
      %495 = arith.addi %494, %c5_i32_150 : i32
      %496 = arith.index_cast %495 : i32 to index
      %497 = memref.load %arg1[%496] : memref<1024xi32, #tpu.memory_space<smem>>
      %498 = arith.index_cast %497 : i32 to index
      %c0_151 = arith.constant 0 : index
      %499 = vector.load %arg3[%498, %c0_151] : memref<16x8xf32, #tpu.memory_space<vmem>>, vector<1x8xf32>
      %500 = vector.extract_strided_slice %442 {offsets = [0, 5], sizes = [1, 1], strides = [1, 1]} : vector<1x8xf32> to vector<1x1xf32>
      %501 = vector.broadcast %500 : vector<1x1xf32> to vector<1x8xf32>
      %502 = arith.mulf %501, %499 : vector<1x8xf32>
      %503 = arith.addf %493, %502 : vector<1x8xf32>
      %c40_i32_152 = arith.constant 40 : i32
      %504 = arith.addi %3, %c40_i32_152 : i32
      %c6_i32_153 = arith.constant 6 : i32
      %505 = arith.addi %504, %c6_i32_153 : i32
      %506 = arith.index_cast %505 : i32 to index
      %507 = memref.load %arg1[%506] : memref<1024xi32, #tpu.memory_space<smem>>
      %508 = arith.index_cast %507 : i32 to index
      %c0_154 = arith.constant 0 : index
      %509 = vector.load %arg3[%508, %c0_154] : memref<16x8xf32, #tpu.memory_space<vmem>>, vector<1x8xf32>
      %510 = vector.extract_strided_slice %442 {offsets = [0, 6], sizes = [1, 1], strides = [1, 1]} : vector<1x8xf32> to vector<1x1xf32>
      %511 = vector.broadcast %510 : vector<1x1xf32> to vector<1x8xf32>
      %512 = arith.mulf %511, %509 : vector<1x8xf32>
      %513 = arith.addf %503, %512 : vector<1x8xf32>
      %c40_i32_155 = arith.constant 40 : i32
      %514 = arith.addi %3, %c40_i32_155 : i32
      %c7_i32_156 = arith.constant 7 : i32
      %515 = arith.addi %514, %c7_i32_156 : i32
      %516 = arith.index_cast %515 : i32 to index
      %517 = memref.load %arg1[%516] : memref<1024xi32, #tpu.memory_space<smem>>
      %518 = arith.index_cast %517 : i32 to index
      %c0_157 = arith.constant 0 : index
      %519 = vector.load %arg3[%518, %c0_157] : memref<16x8xf32, #tpu.memory_space<vmem>>, vector<1x8xf32>
      %520 = vector.extract_strided_slice %442 {offsets = [0, 7], sizes = [1, 1], strides = [1, 1]} : vector<1x8xf32> to vector<1x1xf32>
      %521 = vector.broadcast %520 : vector<1x1xf32> to vector<1x8xf32>
      %522 = arith.mulf %521, %519 : vector<1x8xf32>
      %523 = arith.addf %513, %522 : vector<1x8xf32>
      %524 = arith.index_cast %arg5 : i32 to index
      %c40 = arith.constant 40 : index
      %525 = vector.load %arg4[%524, %c40] : memref<8x128xf32, #tpu.memory_space<vmem>>, vector<1x8xf32>
      tpu.vector_store %arg4[%524, %c40], %523 {strides = array<i32>} : memref<8x128xf32, #tpu.memory_space<vmem>>, vector<1x8xf32>,
      %c16_i32_158 = arith.constant 16 : i32
      %526 = arith.muli %arg5, %c16_i32_158 : i32
      %c6_i32_159 = arith.constant 6 : i32
      %527 = arith.addi %526, %c6_i32_159 : i32
      %528 = arith.index_cast %527 : i32 to index
      %c0_160 = arith.constant 0 : index
      %529 = vector.load %arg2[%528, %c0_160] : memref<128x8xf32, #tpu.memory_space<vmem>>, vector<1x8xf32>
      %cst_161 = arith.constant 0.000000e+00 : f32
      %530 = vector.broadcast %cst_161 : f32 to vector<1x8xf32>
      %c48_i32 = arith.constant 48 : i32
      %531 = arith.addi %3, %c48_i32 : i32
      %c0_i32_162 = arith.constant 0 : i32
      %532 = arith.addi %531, %c0_i32_162 : i32
      %533 = arith.index_cast %532 : i32 to index
      %534 = memref.load %arg1[%533] : memref<1024xi32, #tpu.memory_space<smem>>
      %535 = arith.index_cast %534 : i32 to index
      %c0_163 = arith.constant 0 : index
      %536 = vector.load %arg3[%535, %c0_163] : memref<16x8xf32, #tpu.memory_space<vmem>>, vector<1x8xf32>
      %537 = vector.extract_strided_slice %529 {offsets = [0, 0], sizes = [1, 1], strides = [1, 1]} : vector<1x8xf32> to vector<1x1xf32>
      %538 = vector.broadcast %537 : vector<1x1xf32> to vector<1x8xf32>
      %539 = arith.mulf %538, %536 : vector<1x8xf32>
      %540 = arith.addf %530, %539 : vector<1x8xf32>
      %c48_i32_164 = arith.constant 48 : i32
      %541 = arith.addi %3, %c48_i32_164 : i32
      %c1_i32_165 = arith.constant 1 : i32
      %542 = arith.addi %541, %c1_i32_165 : i32
      %543 = arith.index_cast %542 : i32 to index
      %544 = memref.load %arg1[%543] : memref<1024xi32, #tpu.memory_space<smem>>
      %545 = arith.index_cast %544 : i32 to index
      %c0_166 = arith.constant 0 : index
      %546 = vector.load %arg3[%545, %c0_166] : memref<16x8xf32, #tpu.memory_space<vmem>>, vector<1x8xf32>
      %547 = vector.extract_strided_slice %529 {offsets = [0, 1], sizes = [1, 1], strides = [1, 1]} : vector<1x8xf32> to vector<1x1xf32>
      %548 = vector.broadcast %547 : vector<1x1xf32> to vector<1x8xf32>
      %549 = arith.mulf %548, %546 : vector<1x8xf32>
      %550 = arith.addf %540, %549 : vector<1x8xf32>
      %c48_i32_167 = arith.constant 48 : i32
      %551 = arith.addi %3, %c48_i32_167 : i32
      %c2_i32_168 = arith.constant 2 : i32
      %552 = arith.addi %551, %c2_i32_168 : i32
      %553 = arith.index_cast %552 : i32 to index
      %554 = memref.load %arg1[%553] : memref<1024xi32, #tpu.memory_space<smem>>
      %555 = arith.index_cast %554 : i32 to index
      %c0_169 = arith.constant 0 : index
      %556 = vector.load %arg3[%555, %c0_169] : memref<16x8xf32, #tpu.memory_space<vmem>>, vector<1x8xf32>
      %557 = vector.extract_strided_slice %529 {offsets = [0, 2], sizes = [1, 1], strides = [1, 1]} : vector<1x8xf32> to vector<1x1xf32>
      %558 = vector.broadcast %557 : vector<1x1xf32> to vector<1x8xf32>
      %559 = arith.mulf %558, %556 : vector<1x8xf32>
      %560 = arith.addf %550, %559 : vector<1x8xf32>
      %c48_i32_170 = arith.constant 48 : i32
      %561 = arith.addi %3, %c48_i32_170 : i32
      %c3_i32_171 = arith.constant 3 : i32
      %562 = arith.addi %561, %c3_i32_171 : i32
      %563 = arith.index_cast %562 : i32 to index
      %564 = memref.load %arg1[%563] : memref<1024xi32, #tpu.memory_space<smem>>
      %565 = arith.index_cast %564 : i32 to index
      %c0_172 = arith.constant 0 : index
      %566 = vector.load %arg3[%565, %c0_172] : memref<16x8xf32, #tpu.memory_space<vmem>>, vector<1x8xf32>
      %567 = vector.extract_strided_slice %529 {offsets = [0, 3], sizes = [1, 1], strides = [1, 1]} : vector<1x8xf32> to vector<1x1xf32>
      %568 = vector.broadcast %567 : vector<1x1xf32> to vector<1x8xf32>
      %569 = arith.mulf %568, %566 : vector<1x8xf32>
      %570 = arith.addf %560, %569 : vector<1x8xf32>
      %c48_i32_173 = arith.constant 48 : i32
      %571 = arith.addi %3, %c48_i32_173 : i32
      %c4_i32_174 = arith.constant 4 : i32
      %572 = arith.addi %571, %c4_i32_174 : i32
      %573 = arith.index_cast %572 : i32 to index
      %574 = memref.load %arg1[%573] : memref<1024xi32, #tpu.memory_space<smem>>
      %575 = arith.index_cast %574 : i32 to index
      %c0_175 = arith.constant 0 : index
      %576 = vector.load %arg3[%575, %c0_175] : memref<16x8xf32, #tpu.memory_space<vmem>>, vector<1x8xf32>
      %577 = vector.extract_strided_slice %529 {offsets = [0, 4], sizes = [1, 1], strides = [1, 1]} : vector<1x8xf32> to vector<1x1xf32>
      %578 = vector.broadcast %577 : vector<1x1xf32> to vector<1x8xf32>
      %579 = arith.mulf %578, %576 : vector<1x8xf32>
      %580 = arith.addf %570, %579 : vector<1x8xf32>
      %c48_i32_176 = arith.constant 48 : i32
      %581 = arith.addi %3, %c48_i32_176 : i32
      %c5_i32_177 = arith.constant 5 : i32
      %582 = arith.addi %581, %c5_i32_177 : i32
      %583 = arith.index_cast %582 : i32 to index
      %584 = memref.load %arg1[%583] : memref<1024xi32, #tpu.memory_space<smem>>
      %585 = arith.index_cast %584 : i32 to index
      %c0_178 = arith.constant 0 : index
      %586 = vector.load %arg3[%585, %c0_178] : memref<16x8xf32, #tpu.memory_space<vmem>>, vector<1x8xf32>
      %587 = vector.extract_strided_slice %529 {offsets = [0, 5], sizes = [1, 1], strides = [1, 1]} : vector<1x8xf32> to vector<1x1xf32>
      %588 = vector.broadcast %587 : vector<1x1xf32> to vector<1x8xf32>
      %589 = arith.mulf %588, %586 : vector<1x8xf32>
      %590 = arith.addf %580, %589 : vector<1x8xf32>
      %c48_i32_179 = arith.constant 48 : i32
      %591 = arith.addi %3, %c48_i32_179 : i32
      %c6_i32_180 = arith.constant 6 : i32
      %592 = arith.addi %591, %c6_i32_180 : i32
      %593 = arith.index_cast %592 : i32 to index
      %594 = memref.load %arg1[%593] : memref<1024xi32, #tpu.memory_space<smem>>
      %595 = arith.index_cast %594 : i32 to index
      %c0_181 = arith.constant 0 : index
      %596 = vector.load %arg3[%595, %c0_181] : memref<16x8xf32, #tpu.memory_space<vmem>>, vector<1x8xf32>
      %597 = vector.extract_strided_slice %529 {offsets = [0, 6], sizes = [1, 1], strides = [1, 1]} : vector<1x8xf32> to vector<1x1xf32>
      %598 = vector.broadcast %597 : vector<1x1xf32> to vector<1x8xf32>
      %599 = arith.mulf %598, %596 : vector<1x8xf32>
      %600 = arith.addf %590, %599 : vector<1x8xf32>
      %c48_i32_182 = arith.constant 48 : i32
      %601 = arith.addi %3, %c48_i32_182 : i32
      %c7_i32_183 = arith.constant 7 : i32
      %602 = arith.addi %601, %c7_i32_183 : i32
      %603 = arith.index_cast %602 : i32 to index
      %604 = memref.load %arg1[%603] : memref<1024xi32, #tpu.memory_space<smem>>
      %605 = arith.index_cast %604 : i32 to index
      %c0_184 = arith.constant 0 : index
      %606 = vector.load %arg3[%605, %c0_184] : memref<16x8xf32, #tpu.memory_space<vmem>>, vector<1x8xf32>
      %607 = vector.extract_strided_slice %529 {offsets = [0, 7], sizes = [1, 1], strides = [1, 1]} : vector<1x8xf32> to vector<1x1xf32>
      %608 = vector.broadcast %607 : vector<1x1xf32> to vector<1x8xf32>
      %609 = arith.mulf %608, %606 : vector<1x8xf32>
      %610 = arith.addf %600, %609 : vector<1x8xf32>
      %611 = arith.index_cast %arg5 : i32 to index
      %c48 = arith.constant 48 : index
      %612 = vector.load %arg4[%611, %c48] : memref<8x128xf32, #tpu.memory_space<vmem>>, vector<1x8xf32>
      tpu.vector_store %arg4[%611, %c48], %610 {strides = array<i32>} : memref<8x128xf32, #tpu.memory_space<vmem>>, vector<1x8xf32>,
      %c16_i32_185 = arith.constant 16 : i32
      %613 = arith.muli %arg5, %c16_i32_185 : i32
      %c7_i32_186 = arith.constant 7 : i32
      %614 = arith.addi %613, %c7_i32_186 : i32
      %615 = arith.index_cast %614 : i32 to index
      %c0_187 = arith.constant 0 : index
      %616 = vector.load %arg2[%615, %c0_187] : memref<128x8xf32, #tpu.memory_space<vmem>>, vector<1x8xf32>
      %cst_188 = arith.constant 0.000000e+00 : f32
      %617 = vector.broadcast %cst_188 : f32 to vector<1x8xf32>
      %c56_i32 = arith.constant 56 : i32
      %618 = arith.addi %3, %c56_i32 : i32
      %c0_i32_189 = arith.constant 0 : i32
      %619 = arith.addi %618, %c0_i32_189 : i32
      %620 = arith.index_cast %619 : i32 to index
      %621 = memref.load %arg1[%620] : memref<1024xi32, #tpu.memory_space<smem>>
      %622 = arith.index_cast %621 : i32 to index
      %c0_190 = arith.constant 0 : index
      %623 = vector.load %arg3[%622, %c0_190] : memref<16x8xf32, #tpu.memory_space<vmem>>, vector<1x8xf32>
      %624 = vector.extract_strided_slice %616 {offsets = [0, 0], sizes = [1, 1], strides = [1, 1]} : vector<1x8xf32> to vector<1x1xf32>
      %625 = vector.broadcast %624 : vector<1x1xf32> to vector<1x8xf32>
      %626 = arith.mulf %625, %623 : vector<1x8xf32>
      %627 = arith.addf %617, %626 : vector<1x8xf32>
      %c56_i32_191 = arith.constant 56 : i32
      %628 = arith.addi %3, %c56_i32_191 : i32
      %c1_i32_192 = arith.constant 1 : i32
      %629 = arith.addi %628, %c1_i32_192 : i32
      %630 = arith.index_cast %629 : i32 to index
      %631 = memref.load %arg1[%630] : memref<1024xi32, #tpu.memory_space<smem>>
      %632 = arith.index_cast %631 : i32 to index
      %c0_193 = arith.constant 0 : index
      %633 = vector.load %arg3[%632, %c0_193] : memref<16x8xf32, #tpu.memory_space<vmem>>, vector<1x8xf32>
      %634 = vector.extract_strided_slice %616 {offsets = [0, 1], sizes = [1, 1], strides = [1, 1]} : vector<1x8xf32> to vector<1x1xf32>
      %635 = vector.broadcast %634 : vector<1x1xf32> to vector<1x8xf32>
      %636 = arith.mulf %635, %633 : vector<1x8xf32>
      %637 = arith.addf %627, %636 : vector<1x8xf32>
      %c56_i32_194 = arith.constant 56 : i32
      %638 = arith.addi %3, %c56_i32_194 : i32
      %c2_i32_195 = arith.constant 2 : i32
      %639 = arith.addi %638, %c2_i32_195 : i32
      %640 = arith.index_cast %639 : i32 to index
      %641 = memref.load %arg1[%640] : memref<1024xi32, #tpu.memory_space<smem>>
      %642 = arith.index_cast %641 : i32 to index
      %c0_196 = arith.constant 0 : index
      %643 = vector.load %arg3[%642, %c0_196] : memref<16x8xf32, #tpu.memory_space<vmem>>, vector<1x8xf32>
      %644 = vector.extract_strided_slice %616 {offsets = [0, 2], sizes = [1, 1], strides = [1, 1]} : vector<1x8xf32> to vector<1x1xf32>
      %645 = vector.broadcast %644 : vector<1x1xf32> to vector<1x8xf32>
      %646 = arith.mulf %645, %643 : vector<1x8xf32>
      %647 = arith.addf %637, %646 : vector<1x8xf32>
      %c56_i32_197 = arith.constant 56 : i32
      %648 = arith.addi %3, %c56_i32_197 : i32
      %c3_i32_198 = arith.constant 3 : i32
      %649 = arith.addi %648, %c3_i32_198 : i32
      %650 = arith.index_cast %649 : i32 to index
      %651 = memref.load %arg1[%650] : memref<1024xi32, #tpu.memory_space<smem>>
      %652 = arith.index_cast %651 : i32 to index
      %c0_199 = arith.constant 0 : index
      %653 = vector.load %arg3[%652, %c0_199] : memref<16x8xf32, #tpu.memory_space<vmem>>, vector<1x8xf32>
      %654 = vector.extract_strided_slice %616 {offsets = [0, 3], sizes = [1, 1], strides = [1, 1]} : vector<1x8xf32> to vector<1x1xf32>
      %655 = vector.broadcast %654 : vector<1x1xf32> to vector<1x8xf32>
      %656 = arith.mulf %655, %653 : vector<1x8xf32>
      %657 = arith.addf %647, %656 : vector<1x8xf32>
      %c56_i32_200 = arith.constant 56 : i32
      %658 = arith.addi %3, %c56_i32_200 : i32
      %c4_i32_201 = arith.constant 4 : i32
      %659 = arith.addi %658, %c4_i32_201 : i32
      %660 = arith.index_cast %659 : i32 to index
      %661 = memref.load %arg1[%660] : memref<1024xi32, #tpu.memory_space<smem>>
      %662 = arith.index_cast %661 : i32 to index
      %c0_202 = arith.constant 0 : index
      %663 = vector.load %arg3[%662, %c0_202] : memref<16x8xf32, #tpu.memory_space<vmem>>, vector<1x8xf32>
      %664 = vector.extract_strided_slice %616 {offsets = [0, 4], sizes = [1, 1], strides = [1, 1]} : vector<1x8xf32> to vector<1x1xf32>
      %665 = vector.broadcast %664 : vector<1x1xf32> to vector<1x8xf32>
      %666 = arith.mulf %665, %663 : vector<1x8xf32>
      %667 = arith.addf %657, %666 : vector<1x8xf32>
      %c56_i32_203 = arith.constant 56 : i32
      %668 = arith.addi %3, %c56_i32_203 : i32
      %c5_i32_204 = arith.constant 5 : i32
      %669 = arith.addi %668, %c5_i32_204 : i32
      %670 = arith.index_cast %669 : i32 to index
      %671 = memref.load %arg1[%670] : memref<1024xi32, #tpu.memory_space<smem>>
      %672 = arith.index_cast %671 : i32 to index
      %c0_205 = arith.constant 0 : index
      %673 = vector.load %arg3[%672, %c0_205] : memref<16x8xf32, #tpu.memory_space<vmem>>, vector<1x8xf32>
      %674 = vector.extract_strided_slice %616 {offsets = [0, 5], sizes = [1, 1], strides = [1, 1]} : vector<1x8xf32> to vector<1x1xf32>
      %675 = vector.broadcast %674 : vector<1x1xf32> to vector<1x8xf32>
      %676 = arith.mulf %675, %673 : vector<1x8xf32>
      %677 = arith.addf %667, %676 : vector<1x8xf32>
      %c56_i32_206 = arith.constant 56 : i32
      %678 = arith.addi %3, %c56_i32_206 : i32
      %c6_i32_207 = arith.constant 6 : i32
      %679 = arith.addi %678, %c6_i32_207 : i32
      %680 = arith.index_cast %679 : i32 to index
      %681 = memref.load %arg1[%680] : memref<1024xi32, #tpu.memory_space<smem>>
      %682 = arith.index_cast %681 : i32 to index
      %c0_208 = arith.constant 0 : index
      %683 = vector.load %arg3[%682, %c0_208] : memref<16x8xf32, #tpu.memory_space<vmem>>, vector<1x8xf32>
      %684 = vector.extract_strided_slice %616 {offsets = [0, 6], sizes = [1, 1], strides = [1, 1]} : vector<1x8xf32> to vector<1x1xf32>
      %685 = vector.broadcast %684 : vector<1x1xf32> to vector<1x8xf32>
      %686 = arith.mulf %685, %683 : vector<1x8xf32>
      %687 = arith.addf %677, %686 : vector<1x8xf32>
      %c56_i32_209 = arith.constant 56 : i32
      %688 = arith.addi %3, %c56_i32_209 : i32
      %c7_i32_210 = arith.constant 7 : i32
      %689 = arith.addi %688, %c7_i32_210 : i32
      %690 = arith.index_cast %689 : i32 to index
      %691 = memref.load %arg1[%690] : memref<1024xi32, #tpu.memory_space<smem>>
      %692 = arith.index_cast %691 : i32 to index
      %c0_211 = arith.constant 0 : index
      %693 = vector.load %arg3[%692, %c0_211] : memref<16x8xf32, #tpu.memory_space<vmem>>, vector<1x8xf32>
      %694 = vector.extract_strided_slice %616 {offsets = [0, 7], sizes = [1, 1], strides = [1, 1]} : vector<1x8xf32> to vector<1x1xf32>
      %695 = vector.broadcast %694 : vector<1x1xf32> to vector<1x8xf32>
      %696 = arith.mulf %695, %693 : vector<1x8xf32>
      %697 = arith.addf %687, %696 : vector<1x8xf32>
      %698 = arith.index_cast %arg5 : i32 to index
      %c56 = arith.constant 56 : index
      %699 = vector.load %arg4[%698, %c56] : memref<8x128xf32, #tpu.memory_space<vmem>>, vector<1x8xf32>
      tpu.vector_store %arg4[%698, %c56], %697 {strides = array<i32>} : memref<8x128xf32, #tpu.memory_space<vmem>>, vector<1x8xf32>,
      %c16_i32_212 = arith.constant 16 : i32
      %700 = arith.muli %arg5, %c16_i32_212 : i32
      %c8_i32_213 = arith.constant 8 : i32
      %701 = arith.addi %700, %c8_i32_213 : i32
      %702 = arith.index_cast %701 : i32 to index
      %c0_214 = arith.constant 0 : index
      %703 = vector.load %arg2[%702, %c0_214] : memref<128x8xf32, #tpu.memory_space<vmem>>, vector<1x8xf32>
      %cst_215 = arith.constant 0.000000e+00 : f32
      %704 = vector.broadcast %cst_215 : f32 to vector<1x8xf32>
      %c64_i32 = arith.constant 64 : i32
      %705 = arith.addi %3, %c64_i32 : i32
      %c0_i32_216 = arith.constant 0 : i32
      %706 = arith.addi %705, %c0_i32_216 : i32
      %707 = arith.index_cast %706 : i32 to index
      %708 = memref.load %arg1[%707] : memref<1024xi32, #tpu.memory_space<smem>>
      %709 = arith.index_cast %708 : i32 to index
      %c0_217 = arith.constant 0 : index
      %710 = vector.load %arg3[%709, %c0_217] : memref<16x8xf32, #tpu.memory_space<vmem>>, vector<1x8xf32>
      %711 = vector.extract_strided_slice %703 {offsets = [0, 0], sizes = [1, 1], strides = [1, 1]} : vector<1x8xf32> to vector<1x1xf32>
      %712 = vector.broadcast %711 : vector<1x1xf32> to vector<1x8xf32>
      %713 = arith.mulf %712, %710 : vector<1x8xf32>
      %714 = arith.addf %704, %713 : vector<1x8xf32>
      %c64_i32_218 = arith.constant 64 : i32
      %715 = arith.addi %3, %c64_i32_218 : i32
      %c1_i32_219 = arith.constant 1 : i32
      %716 = arith.addi %715, %c1_i32_219 : i32
      %717 = arith.index_cast %716 : i32 to index
      %718 = memref.load %arg1[%717] : memref<1024xi32, #tpu.memory_space<smem>>
      %719 = arith.index_cast %718 : i32 to index
      %c0_220 = arith.constant 0 : index
      %720 = vector.load %arg3[%719, %c0_220] : memref<16x8xf32, #tpu.memory_space<vmem>>, vector<1x8xf32>
      %721 = vector.extract_strided_slice %703 {offsets = [0, 1], sizes = [1, 1], strides = [1, 1]} : vector<1x8xf32> to vector<1x1xf32>
      %722 = vector.broadcast %721 : vector<1x1xf32> to vector<1x8xf32>
      %723 = arith.mulf %722, %720 : vector<1x8xf32>
      %724 = arith.addf %714, %723 : vector<1x8xf32>
      %c64_i32_221 = arith.constant 64 : i32
      %725 = arith.addi %3, %c64_i32_221 : i32
      %c2_i32_222 = arith.constant 2 : i32
      %726 = arith.addi %725, %c2_i32_222 : i32
      %727 = arith.index_cast %726 : i32 to index
      %728 = memref.load %arg1[%727] : memref<1024xi32, #tpu.memory_space<smem>>
      %729 = arith.index_cast %728 : i32 to index
      %c0_223 = arith.constant 0 : index
      %730 = vector.load %arg3[%729, %c0_223] : memref<16x8xf32, #tpu.memory_space<vmem>>, vector<1x8xf32>
      %731 = vector.extract_strided_slice %703 {offsets = [0, 2], sizes = [1, 1], strides = [1, 1]} : vector<1x8xf32> to vector<1x1xf32>
      %732 = vector.broadcast %731 : vector<1x1xf32> to vector<1x8xf32>
      %733 = arith.mulf %732, %730 : vector<1x8xf32>
      %734 = arith.addf %724, %733 : vector<1x8xf32>
      %c64_i32_224 = arith.constant 64 : i32
      %735 = arith.addi %3, %c64_i32_224 : i32
      %c3_i32_225 = arith.constant 3 : i32
      %736 = arith.addi %735, %c3_i32_225 : i32
      %737 = arith.index_cast %736 : i32 to index
      %738 = memref.load %arg1[%737] : memref<1024xi32, #tpu.memory_space<smem>>
      %739 = arith.index_cast %738 : i32 to index
      %c0_226 = arith.constant 0 : index
      %740 = vector.load %arg3[%739, %c0_226] : memref<16x8xf32, #tpu.memory_space<vmem>>, vector<1x8xf32>
      %741 = vector.extract_strided_slice %703 {offsets = [0, 3], sizes = [1, 1], strides = [1, 1]} : vector<1x8xf32> to vector<1x1xf32>
      %742 = vector.broadcast %741 : vector<1x1xf32> to vector<1x8xf32>
      %743 = arith.mulf %742, %740 : vector<1x8xf32>
      %744 = arith.addf %734, %743 : vector<1x8xf32>
      %c64_i32_227 = arith.constant 64 : i32
      %745 = arith.addi %3, %c64_i32_227 : i32
      %c4_i32_228 = arith.constant 4 : i32
      %746 = arith.addi %745, %c4_i32_228 : i32
      %747 = arith.index_cast %746 : i32 to index
      %748 = memref.load %arg1[%747] : memref<1024xi32, #tpu.memory_space<smem>>
      %749 = arith.index_cast %748 : i32 to index
      %c0_229 = arith.constant 0 : index
      %750 = vector.load %arg3[%749, %c0_229] : memref<16x8xf32, #tpu.memory_space<vmem>>, vector<1x8xf32>
      %751 = vector.extract_strided_slice %703 {offsets = [0, 4], sizes = [1, 1], strides = [1, 1]} : vector<1x8xf32> to vector<1x1xf32>
      %752 = vector.broadcast %751 : vector<1x1xf32> to vector<1x8xf32>
      %753 = arith.mulf %752, %750 : vector<1x8xf32>
      %754 = arith.addf %744, %753 : vector<1x8xf32>
      %c64_i32_230 = arith.constant 64 : i32
      %755 = arith.addi %3, %c64_i32_230 : i32
      %c5_i32_231 = arith.constant 5 : i32
      %756 = arith.addi %755, %c5_i32_231 : i32
      %757 = arith.index_cast %756 : i32 to index
      %758 = memref.load %arg1[%757] : memref<1024xi32, #tpu.memory_space<smem>>
      %759 = arith.index_cast %758 : i32 to index
      %c0_232 = arith.constant 0 : index
      %760 = vector.load %arg3[%759, %c0_232] : memref<16x8xf32, #tpu.memory_space<vmem>>, vector<1x8xf32>
      %761 = vector.extract_strided_slice %703 {offsets = [0, 5], sizes = [1, 1], strides = [1, 1]} : vector<1x8xf32> to vector<1x1xf32>
      %762 = vector.broadcast %761 : vector<1x1xf32> to vector<1x8xf32>
      %763 = arith.mulf %762, %760 : vector<1x8xf32>
      %764 = arith.addf %754, %763 : vector<1x8xf32>
      %c64_i32_233 = arith.constant 64 : i32
      %765 = arith.addi %3, %c64_i32_233 : i32
      %c6_i32_234 = arith.constant 6 : i32
      %766 = arith.addi %765, %c6_i32_234 : i32
      %767 = arith.index_cast %766 : i32 to index
      %768 = memref.load %arg1[%767] : memref<1024xi32, #tpu.memory_space<smem>>
      %769 = arith.index_cast %768 : i32 to index
      %c0_235 = arith.constant 0 : index
      %770 = vector.load %arg3[%769, %c0_235] : memref<16x8xf32, #tpu.memory_space<vmem>>, vector<1x8xf32>
      %771 = vector.extract_strided_slice %703 {offsets = [0, 6], sizes = [1, 1], strides = [1, 1]} : vector<1x8xf32> to vector<1x1xf32>
      %772 = vector.broadcast %771 : vector<1x1xf32> to vector<1x8xf32>
      %773 = arith.mulf %772, %770 : vector<1x8xf32>
      %774 = arith.addf %764, %773 : vector<1x8xf32>
      %c64_i32_236 = arith.constant 64 : i32
      %775 = arith.addi %3, %c64_i32_236 : i32
      %c7_i32_237 = arith.constant 7 : i32
      %776 = arith.addi %775, %c7_i32_237 : i32
      %777 = arith.index_cast %776 : i32 to index
      %778 = memref.load %arg1[%777] : memref<1024xi32, #tpu.memory_space<smem>>
      %779 = arith.index_cast %778 : i32 to index
      %c0_238 = arith.constant 0 : index
      %780 = vector.load %arg3[%779, %c0_238] : memref<16x8xf32, #tpu.memory_space<vmem>>, vector<1x8xf32>
      %781 = vector.extract_strided_slice %703 {offsets = [0, 7], sizes = [1, 1], strides = [1, 1]} : vector<1x8xf32> to vector<1x1xf32>
      %782 = vector.broadcast %781 : vector<1x1xf32> to vector<1x8xf32>
      %783 = arith.mulf %782, %780 : vector<1x8xf32>
      %784 = arith.addf %774, %783 : vector<1x8xf32>
      %785 = arith.index_cast %arg5 : i32 to index
      %c64 = arith.constant 64 : index
      %786 = vector.load %arg4[%785, %c64] : memref<8x128xf32, #tpu.memory_space<vmem>>, vector<1x8xf32>
      tpu.vector_store %arg4[%785, %c64], %784 {strides = array<i32>} : memref<8x128xf32, #tpu.memory_space<vmem>>, vector<1x8xf32>,
      %c16_i32_239 = arith.constant 16 : i32
      %787 = arith.muli %arg5, %c16_i32_239 : i32
      %c9_i32 = arith.constant 9 : i32
      %788 = arith.addi %787, %c9_i32 : i32
      %789 = arith.index_cast %788 : i32 to index
      %c0_240 = arith.constant 0 : index
      %790 = vector.load %arg2[%789, %c0_240] : memref<128x8xf32, #tpu.memory_space<vmem>>, vector<1x8xf32>
      %cst_241 = arith.constant 0.000000e+00 : f32
      %791 = vector.broadcast %cst_241 : f32 to vector<1x8xf32>
      %c72_i32 = arith.constant 72 : i32
      %792 = arith.addi %3, %c72_i32 : i32
      %c0_i32_242 = arith.constant 0 : i32
      %793 = arith.addi %792, %c0_i32_242 : i32
      %794 = arith.index_cast %793 : i32 to index
      %795 = memref.load %arg1[%794] : memref<1024xi32, #tpu.memory_space<smem>>
      %796 = arith.index_cast %795 : i32 to index
      %c0_243 = arith.constant 0 : index
      %797 = vector.load %arg3[%796, %c0_243] : memref<16x8xf32, #tpu.memory_space<vmem>>, vector<1x8xf32>
      %798 = vector.extract_strided_slice %790 {offsets = [0, 0], sizes = [1, 1], strides = [1, 1]} : vector<1x8xf32> to vector<1x1xf32>
      %799 = vector.broadcast %798 : vector<1x1xf32> to vector<1x8xf32>
      %800 = arith.mulf %799, %797 : vector<1x8xf32>
      %801 = arith.addf %791, %800 : vector<1x8xf32>
      %c72_i32_244 = arith.constant 72 : i32
      %802 = arith.addi %3, %c72_i32_244 : i32
      %c1_i32_245 = arith.constant 1 : i32
      %803 = arith.addi %802, %c1_i32_245 : i32
      %804 = arith.index_cast %803 : i32 to index
      %805 = memref.load %arg1[%804] : memref<1024xi32, #tpu.memory_space<smem>>
      %806 = arith.index_cast %805 : i32 to index
      %c0_246 = arith.constant 0 : index
      %807 = vector.load %arg3[%806, %c0_246] : memref<16x8xf32, #tpu.memory_space<vmem>>, vector<1x8xf32>
      %808 = vector.extract_strided_slice %790 {offsets = [0, 1], sizes = [1, 1], strides = [1, 1]} : vector<1x8xf32> to vector<1x1xf32>
      %809 = vector.broadcast %808 : vector<1x1xf32> to vector<1x8xf32>
      %810 = arith.mulf %809, %807 : vector<1x8xf32>
      %811 = arith.addf %801, %810 : vector<1x8xf32>
      %c72_i32_247 = arith.constant 72 : i32
      %812 = arith.addi %3, %c72_i32_247 : i32
      %c2_i32_248 = arith.constant 2 : i32
      %813 = arith.addi %812, %c2_i32_248 : i32
      %814 = arith.index_cast %813 : i32 to index
      %815 = memref.load %arg1[%814] : memref<1024xi32, #tpu.memory_space<smem>>
      %816 = arith.index_cast %815 : i32 to index
      %c0_249 = arith.constant 0 : index
      %817 = vector.load %arg3[%816, %c0_249] : memref<16x8xf32, #tpu.memory_space<vmem>>, vector<1x8xf32>
      %818 = vector.extract_strided_slice %790 {offsets = [0, 2], sizes = [1, 1], strides = [1, 1]} : vector<1x8xf32> to vector<1x1xf32>
      %819 = vector.broadcast %818 : vector<1x1xf32> to vector<1x8xf32>
      %820 = arith.mulf %819, %817 : vector<1x8xf32>
      %821 = arith.addf %811, %820 : vector<1x8xf32>
      %c72_i32_250 = arith.constant 72 : i32
      %822 = arith.addi %3, %c72_i32_250 : i32
      %c3_i32_251 = arith.constant 3 : i32
      %823 = arith.addi %822, %c3_i32_251 : i32
      %824 = arith.index_cast %823 : i32 to index
      %825 = memref.load %arg1[%824] : memref<1024xi32, #tpu.memory_space<smem>>
      %826 = arith.index_cast %825 : i32 to index
      %c0_252 = arith.constant 0 : index
      %827 = vector.load %arg3[%826, %c0_252] : memref<16x8xf32, #tpu.memory_space<vmem>>, vector<1x8xf32>
      %828 = vector.extract_strided_slice %790 {offsets = [0, 3], sizes = [1, 1], strides = [1, 1]} : vector<1x8xf32> to vector<1x1xf32>
      %829 = vector.broadcast %828 : vector<1x1xf32> to vector<1x8xf32>
      %830 = arith.mulf %829, %827 : vector<1x8xf32>
      %831 = arith.addf %821, %830 : vector<1x8xf32>
      %c72_i32_253 = arith.constant 72 : i32
      %832 = arith.addi %3, %c72_i32_253 : i32
      %c4_i32_254 = arith.constant 4 : i32
      %833 = arith.addi %832, %c4_i32_254 : i32
      %834 = arith.index_cast %833 : i32 to index
      %835 = memref.load %arg1[%834] : memref<1024xi32, #tpu.memory_space<smem>>
      %836 = arith.index_cast %835 : i32 to index
      %c0_255 = arith.constant 0 : index
      %837 = vector.load %arg3[%836, %c0_255] : memref<16x8xf32, #tpu.memory_space<vmem>>, vector<1x8xf32>
      %838 = vector.extract_strided_slice %790 {offsets = [0, 4], sizes = [1, 1], strides = [1, 1]} : vector<1x8xf32> to vector<1x1xf32>
      %839 = vector.broadcast %838 : vector<1x1xf32> to vector<1x8xf32>
      %840 = arith.mulf %839, %837 : vector<1x8xf32>
      %841 = arith.addf %831, %840 : vector<1x8xf32>
      %c72_i32_256 = arith.constant 72 : i32
      %842 = arith.addi %3, %c72_i32_256 : i32
      %c5_i32_257 = arith.constant 5 : i32
      %843 = arith.addi %842, %c5_i32_257 : i32
      %844 = arith.index_cast %843 : i32 to index
      %845 = memref.load %arg1[%844] : memref<1024xi32, #tpu.memory_space<smem>>
      %846 = arith.index_cast %845 : i32 to index
      %c0_258 = arith.constant 0 : index
      %847 = vector.load %arg3[%846, %c0_258] : memref<16x8xf32, #tpu.memory_space<vmem>>, vector<1x8xf32>
      %848 = vector.extract_strided_slice %790 {offsets = [0, 5], sizes = [1, 1], strides = [1, 1]} : vector<1x8xf32> to vector<1x1xf32>
      %849 = vector.broadcast %848 : vector<1x1xf32> to vector<1x8xf32>
      %850 = arith.mulf %849, %847 : vector<1x8xf32>
      %851 = arith.addf %841, %850 : vector<1x8xf32>
      %c72_i32_259 = arith.constant 72 : i32
      %852 = arith.addi %3, %c72_i32_259 : i32
      %c6_i32_260 = arith.constant 6 : i32
      %853 = arith.addi %852, %c6_i32_260 : i32
      %854 = arith.index_cast %853 : i32 to index
      %855 = memref.load %arg1[%854] : memref<1024xi32, #tpu.memory_space<smem>>
      %856 = arith.index_cast %855 : i32 to index
      %c0_261 = arith.constant 0 : index
      %857 = vector.load %arg3[%856, %c0_261] : memref<16x8xf32, #tpu.memory_space<vmem>>, vector<1x8xf32>
      %858 = vector.extract_strided_slice %790 {offsets = [0, 6], sizes = [1, 1], strides = [1, 1]} : vector<1x8xf32> to vector<1x1xf32>
      %859 = vector.broadcast %858 : vector<1x1xf32> to vector<1x8xf32>
      %860 = arith.mulf %859, %857 : vector<1x8xf32>
      %861 = arith.addf %851, %860 : vector<1x8xf32>
      %c72_i32_262 = arith.constant 72 : i32
      %862 = arith.addi %3, %c72_i32_262 : i32
      %c7_i32_263 = arith.constant 7 : i32
      %863 = arith.addi %862, %c7_i32_263 : i32
      %864 = arith.index_cast %863 : i32 to index
      %865 = memref.load %arg1[%864] : memref<1024xi32, #tpu.memory_space<smem>>
      %866 = arith.index_cast %865 : i32 to index
      %c0_264 = arith.constant 0 : index
      %867 = vector.load %arg3[%866, %c0_264] : memref<16x8xf32, #tpu.memory_space<vmem>>, vector<1x8xf32>
      %868 = vector.extract_strided_slice %790 {offsets = [0, 7], sizes = [1, 1], strides = [1, 1]} : vector<1x8xf32> to vector<1x1xf32>
      %869 = vector.broadcast %868 : vector<1x1xf32> to vector<1x8xf32>
      %870 = arith.mulf %869, %867 : vector<1x8xf32>
      %871 = arith.addf %861, %870 : vector<1x8xf32>
      %872 = arith.index_cast %arg5 : i32 to index
      %c72 = arith.constant 72 : index
      %873 = vector.load %arg4[%872, %c72] : memref<8x128xf32, #tpu.memory_space<vmem>>, vector<1x8xf32>
      tpu.vector_store %arg4[%872, %c72], %871 {strides = array<i32>} : memref<8x128xf32, #tpu.memory_space<vmem>>, vector<1x8xf32>,
      %c16_i32_265 = arith.constant 16 : i32
      %874 = arith.muli %arg5, %c16_i32_265 : i32
      %c10_i32 = arith.constant 10 : i32
      %875 = arith.addi %874, %c10_i32 : i32
      %876 = arith.index_cast %875 : i32 to index
      %c0_266 = arith.constant 0 : index
      %877 = vector.load %arg2[%876, %c0_266] : memref<128x8xf32, #tpu.memory_space<vmem>>, vector<1x8xf32>
      %cst_267 = arith.constant 0.000000e+00 : f32
      %878 = vector.broadcast %cst_267 : f32 to vector<1x8xf32>
      %c80_i32 = arith.constant 80 : i32
      %879 = arith.addi %3, %c80_i32 : i32
      %c0_i32_268 = arith.constant 0 : i32
      %880 = arith.addi %879, %c0_i32_268 : i32
      %881 = arith.index_cast %880 : i32 to index
      %882 = memref.load %arg1[%881] : memref<1024xi32, #tpu.memory_space<smem>>
      %883 = arith.index_cast %882 : i32 to index
      %c0_269 = arith.constant 0 : index
      %884 = vector.load %arg3[%883, %c0_269] : memref<16x8xf32, #tpu.memory_space<vmem>>, vector<1x8xf32>
      %885 = vector.extract_strided_slice %877 {offsets = [0, 0], sizes = [1, 1], strides = [1, 1]} : vector<1x8xf32> to vector<1x1xf32>
      %886 = vector.broadcast %885 : vector<1x1xf32> to vector<1x8xf32>
      %887 = arith.mulf %886, %884 : vector<1x8xf32>
      %888 = arith.addf %878, %887 : vector<1x8xf32>
      %c80_i32_270 = arith.constant 80 : i32
      %889 = arith.addi %3, %c80_i32_270 : i32
      %c1_i32_271 = arith.constant 1 : i32
      %890 = arith.addi %889, %c1_i32_271 : i32
      %891 = arith.index_cast %890 : i32 to index
      %892 = memref.load %arg1[%891] : memref<1024xi32, #tpu.memory_space<smem>>
      %893 = arith.index_cast %892 : i32 to index
      %c0_272 = arith.constant 0 : index
      %894 = vector.load %arg3[%893, %c0_272] : memref<16x8xf32, #tpu.memory_space<vmem>>, vector<1x8xf32>
      %895 = vector.extract_strided_slice %877 {offsets = [0, 1], sizes = [1, 1], strides = [1, 1]} : vector<1x8xf32> to vector<1x1xf32>
      %896 = vector.broadcast %895 : vector<1x1xf32> to vector<1x8xf32>
      %897 = arith.mulf %896, %894 : vector<1x8xf32>
      %898 = arith.addf %888, %897 : vector<1x8xf32>
      %c80_i32_273 = arith.constant 80 : i32
      %899 = arith.addi %3, %c80_i32_273 : i32
      %c2_i32_274 = arith.constant 2 : i32
      %900 = arith.addi %899, %c2_i32_274 : i32
      %901 = arith.index_cast %900 : i32 to index
      %902 = memref.load %arg1[%901] : memref<1024xi32, #tpu.memory_space<smem>>
      %903 = arith.index_cast %902 : i32 to index
      %c0_275 = arith.constant 0 : index
      %904 = vector.load %arg3[%903, %c0_275] : memref<16x8xf32, #tpu.memory_space<vmem>>, vector<1x8xf32>
      %905 = vector.extract_strided_slice %877 {offsets = [0, 2], sizes = [1, 1], strides = [1, 1]} : vector<1x8xf32> to vector<1x1xf32>
      %906 = vector.broadcast %905 : vector<1x1xf32> to vector<1x8xf32>
      %907 = arith.mulf %906, %904 : vector<1x8xf32>
      %908 = arith.addf %898, %907 : vector<1x8xf32>
      %c80_i32_276 = arith.constant 80 : i32
      %909 = arith.addi %3, %c80_i32_276 : i32
      %c3_i32_277 = arith.constant 3 : i32
      %910 = arith.addi %909, %c3_i32_277 : i32
      %911 = arith.index_cast %910 : i32 to index
      %912 = memref.load %arg1[%911] : memref<1024xi32, #tpu.memory_space<smem>>
      %913 = arith.index_cast %912 : i32 to index
      %c0_278 = arith.constant 0 : index
      %914 = vector.load %arg3[%913, %c0_278] : memref<16x8xf32, #tpu.memory_space<vmem>>, vector<1x8xf32>
      %915 = vector.extract_strided_slice %877 {offsets = [0, 3], sizes = [1, 1], strides = [1, 1]} : vector<1x8xf32> to vector<1x1xf32>
      %916 = vector.broadcast %915 : vector<1x1xf32> to vector<1x8xf32>
      %917 = arith.mulf %916, %914 : vector<1x8xf32>
      %918 = arith.addf %908, %917 : vector<1x8xf32>
      %c80_i32_279 = arith.constant 80 : i32
      %919 = arith.addi %3, %c80_i32_279 : i32
      %c4_i32_280 = arith.constant 4 : i32
      %920 = arith.addi %919, %c4_i32_280 : i32
      %921 = arith.index_cast %920 : i32 to index
      %922 = memref.load %arg1[%921] : memref<1024xi32, #tpu.memory_space<smem>>
      %923 = arith.index_cast %922 : i32 to index
      %c0_281 = arith.constant 0 : index
      %924 = vector.load %arg3[%923, %c0_281] : memref<16x8xf32, #tpu.memory_space<vmem>>, vector<1x8xf32>
      %925 = vector.extract_strided_slice %877 {offsets = [0, 4], sizes = [1, 1], strides = [1, 1]} : vector<1x8xf32> to vector<1x1xf32>
      %926 = vector.broadcast %925 : vector<1x1xf32> to vector<1x8xf32>
      %927 = arith.mulf %926, %924 : vector<1x8xf32>
      %928 = arith.addf %918, %927 : vector<1x8xf32>
      %c80_i32_282 = arith.constant 80 : i32
      %929 = arith.addi %3, %c80_i32_282 : i32
      %c5_i32_283 = arith.constant 5 : i32
      %930 = arith.addi %929, %c5_i32_283 : i32
      %931 = arith.index_cast %930 : i32 to index
      %932 = memref.load %arg1[%931] : memref<1024xi32, #tpu.memory_space<smem>>
      %933 = arith.index_cast %932 : i32 to index
      %c0_284 = arith.constant 0 : index
      %934 = vector.load %arg3[%933, %c0_284] : memref<16x8xf32, #tpu.memory_space<vmem>>, vector<1x8xf32>
      %935 = vector.extract_strided_slice %877 {offsets = [0, 5], sizes = [1, 1], strides = [1, 1]} : vector<1x8xf32> to vector<1x1xf32>
      %936 = vector.broadcast %935 : vector<1x1xf32> to vector<1x8xf32>
      %937 = arith.mulf %936, %934 : vector<1x8xf32>
      %938 = arith.addf %928, %937 : vector<1x8xf32>
      %c80_i32_285 = arith.constant 80 : i32
      %939 = arith.addi %3, %c80_i32_285 : i32
      %c6_i32_286 = arith.constant 6 : i32
      %940 = arith.addi %939, %c6_i32_286 : i32
      %941 = arith.index_cast %940 : i32 to index
      %942 = memref.load %arg1[%941] : memref<1024xi32, #tpu.memory_space<smem>>
      %943 = arith.index_cast %942 : i32 to index
      %c0_287 = arith.constant 0 : index
      %944 = vector.load %arg3[%943, %c0_287] : memref<16x8xf32, #tpu.memory_space<vmem>>, vector<1x8xf32>
      %945 = vector.extract_strided_slice %877 {offsets = [0, 6], sizes = [1, 1], strides = [1, 1]} : vector<1x8xf32> to vector<1x1xf32>
      %946 = vector.broadcast %945 : vector<1x1xf32> to vector<1x8xf32>
      %947 = arith.mulf %946, %944 : vector<1x8xf32>
      %948 = arith.addf %938, %947 : vector<1x8xf32>
      %c80_i32_288 = arith.constant 80 : i32
      %949 = arith.addi %3, %c80_i32_288 : i32
      %c7_i32_289 = arith.constant 7 : i32
      %950 = arith.addi %949, %c7_i32_289 : i32
      %951 = arith.index_cast %950 : i32 to index
      %952 = memref.load %arg1[%951] : memref<1024xi32, #tpu.memory_space<smem>>
      %953 = arith.index_cast %952 : i32 to index
      %c0_290 = arith.constant 0 : index
      %954 = vector.load %arg3[%953, %c0_290] : memref<16x8xf32, #tpu.memory_space<vmem>>, vector<1x8xf32>
      %955 = vector.extract_strided_slice %877 {offsets = [0, 7], sizes = [1, 1], strides = [1, 1]} : vector<1x8xf32> to vector<1x1xf32>
      %956 = vector.broadcast %955 : vector<1x1xf32> to vector<1x8xf32>
      %957 = arith.mulf %956, %954 : vector<1x8xf32>
      %958 = arith.addf %948, %957 : vector<1x8xf32>
      %959 = arith.index_cast %arg5 : i32 to index
      %c80 = arith.constant 80 : index
      %960 = vector.load %arg4[%959, %c80] : memref<8x128xf32, #tpu.memory_space<vmem>>, vector<1x8xf32>
      tpu.vector_store %arg4[%959, %c80], %958 {strides = array<i32>} : memref<8x128xf32, #tpu.memory_space<vmem>>, vector<1x8xf32>,
      %c16_i32_291 = arith.constant 16 : i32
      %961 = arith.muli %arg5, %c16_i32_291 : i32
      %c11_i32 = arith.constant 11 : i32
      %962 = arith.addi %961, %c11_i32 : i32
      %963 = arith.index_cast %962 : i32 to index
      %c0_292 = arith.constant 0 : index
      %964 = vector.load %arg2[%963, %c0_292] : memref<128x8xf32, #tpu.memory_space<vmem>>, vector<1x8xf32>
      %cst_293 = arith.constant 0.000000e+00 : f32
      %965 = vector.broadcast %cst_293 : f32 to vector<1x8xf32>
      %c88_i32 = arith.constant 88 : i32
      %966 = arith.addi %3, %c88_i32 : i32
      %c0_i32_294 = arith.constant 0 : i32
      %967 = arith.addi %966, %c0_i32_294 : i32
      %968 = arith.index_cast %967 : i32 to index
      %969 = memref.load %arg1[%968] : memref<1024xi32, #tpu.memory_space<smem>>
      %970 = arith.index_cast %969 : i32 to index
      %c0_295 = arith.constant 0 : index
      %971 = vector.load %arg3[%970, %c0_295] : memref<16x8xf32, #tpu.memory_space<vmem>>, vector<1x8xf32>
      %972 = vector.extract_strided_slice %964 {offsets = [0, 0], sizes = [1, 1], strides = [1, 1]} : vector<1x8xf32> to vector<1x1xf32>
      %973 = vector.broadcast %972 : vector<1x1xf32> to vector<1x8xf32>
      %974 = arith.mulf %973, %971 : vector<1x8xf32>
      %975 = arith.addf %965, %974 : vector<1x8xf32>
      %c88_i32_296 = arith.constant 88 : i32
      %976 = arith.addi %3, %c88_i32_296 : i32
      %c1_i32_297 = arith.constant 1 : i32
      %977 = arith.addi %976, %c1_i32_297 : i32
      %978 = arith.index_cast %977 : i32 to index
      %979 = memref.load %arg1[%978] : memref<1024xi32, #tpu.memory_space<smem>>
      %980 = arith.index_cast %979 : i32 to index
      %c0_298 = arith.constant 0 : index
      %981 = vector.load %arg3[%980, %c0_298] : memref<16x8xf32, #tpu.memory_space<vmem>>, vector<1x8xf32>
      %982 = vector.extract_strided_slice %964 {offsets = [0, 1], sizes = [1, 1], strides = [1, 1]} : vector<1x8xf32> to vector<1x1xf32>
      %983 = vector.broadcast %982 : vector<1x1xf32> to vector<1x8xf32>
      %984 = arith.mulf %983, %981 : vector<1x8xf32>
      %985 = arith.addf %975, %984 : vector<1x8xf32>
      %c88_i32_299 = arith.constant 88 : i32
      %986 = arith.addi %3, %c88_i32_299 : i32
      %c2_i32_300 = arith.constant 2 : i32
      %987 = arith.addi %986, %c2_i32_300 : i32
      %988 = arith.index_cast %987 : i32 to index
      %989 = memref.load %arg1[%988] : memref<1024xi32, #tpu.memory_space<smem>>
      %990 = arith.index_cast %989 : i32 to index
      %c0_301 = arith.constant 0 : index
      %991 = vector.load %arg3[%990, %c0_301] : memref<16x8xf32, #tpu.memory_space<vmem>>, vector<1x8xf32>
      %992 = vector.extract_strided_slice %964 {offsets = [0, 2], sizes = [1, 1], strides = [1, 1]} : vector<1x8xf32> to vector<1x1xf32>
      %993 = vector.broadcast %992 : vector<1x1xf32> to vector<1x8xf32>
      %994 = arith.mulf %993, %991 : vector<1x8xf32>
      %995 = arith.addf %985, %994 : vector<1x8xf32>
      %c88_i32_302 = arith.constant 88 : i32
      %996 = arith.addi %3, %c88_i32_302 : i32
      %c3_i32_303 = arith.constant 3 : i32
      %997 = arith.addi %996, %c3_i32_303 : i32
      %998 = arith.index_cast %997 : i32 to index
      %999 = memref.load %arg1[%998] : memref<1024xi32, #tpu.memory_space<smem>>
      %1000 = arith.index_cast %999 : i32 to index
      %c0_304 = arith.constant 0 : index
      %1001 = vector.load %arg3[%1000, %c0_304] : memref<16x8xf32, #tpu.memory_space<vmem>>, vector<1x8xf32>
      %1002 = vector.extract_strided_slice %964 {offsets = [0, 3], sizes = [1, 1], strides = [1, 1]} : vector<1x8xf32> to vector<1x1xf32>
      %1003 = vector.broadcast %1002 : vector<1x1xf32> to vector<1x8xf32>
      %1004 = arith.mulf %1003, %1001 : vector<1x8xf32>
      %1005 = arith.addf %995, %1004 : vector<1x8xf32>
      %c88_i32_305 = arith.constant 88 : i32
      %1006 = arith.addi %3, %c88_i32_305 : i32
      %c4_i32_306 = arith.constant 4 : i32
      %1007 = arith.addi %1006, %c4_i32_306 : i32
      %1008 = arith.index_cast %1007 : i32 to index
      %1009 = memref.load %arg1[%1008] : memref<1024xi32, #tpu.memory_space<smem>>
      %1010 = arith.index_cast %1009 : i32 to index
      %c0_307 = arith.constant 0 : index
      %1011 = vector.load %arg3[%1010, %c0_307] : memref<16x8xf32, #tpu.memory_space<vmem>>, vector<1x8xf32>
      %1012 = vector.extract_strided_slice %964 {offsets = [0, 4], sizes = [1, 1], strides = [1, 1]} : vector<1x8xf32> to vector<1x1xf32>
      %1013 = vector.broadcast %1012 : vector<1x1xf32> to vector<1x8xf32>
      %1014 = arith.mulf %1013, %1011 : vector<1x8xf32>
      %1015 = arith.addf %1005, %1014 : vector<1x8xf32>
      %c88_i32_308 = arith.constant 88 : i32
      %1016 = arith.addi %3, %c88_i32_308 : i32
      %c5_i32_309 = arith.constant 5 : i32
      %1017 = arith.addi %1016, %c5_i32_309 : i32
      %1018 = arith.index_cast %1017 : i32 to index
      %1019 = memref.load %arg1[%1018] : memref<1024xi32, #tpu.memory_space<smem>>
      %1020 = arith.index_cast %1019 : i32 to index
      %c0_310 = arith.constant 0 : index
      %1021 = vector.load %arg3[%1020, %c0_310] : memref<16x8xf32, #tpu.memory_space<vmem>>, vector<1x8xf32>
      %1022 = vector.extract_strided_slice %964 {offsets = [0, 5], sizes = [1, 1], strides = [1, 1]} : vector<1x8xf32> to vector<1x1xf32>
      %1023 = vector.broadcast %1022 : vector<1x1xf32> to vector<1x8xf32>
      %1024 = arith.mulf %1023, %1021 : vector<1x8xf32>
      %1025 = arith.addf %1015, %1024 : vector<1x8xf32>
      %c88_i32_311 = arith.constant 88 : i32
      %1026 = arith.addi %3, %c88_i32_311 : i32
      %c6_i32_312 = arith.constant 6 : i32
      %1027 = arith.addi %1026, %c6_i32_312 : i32
      %1028 = arith.index_cast %1027 : i32 to index
      %1029 = memref.load %arg1[%1028] : memref<1024xi32, #tpu.memory_space<smem>>
      %1030 = arith.index_cast %1029 : i32 to index
      %c0_313 = arith.constant 0 : index
      %1031 = vector.load %arg3[%1030, %c0_313] : memref<16x8xf32, #tpu.memory_space<vmem>>, vector<1x8xf32>
      %1032 = vector.extract_strided_slice %964 {offsets = [0, 6], sizes = [1, 1], strides = [1, 1]} : vector<1x8xf32> to vector<1x1xf32>
      %1033 = vector.broadcast %1032 : vector<1x1xf32> to vector<1x8xf32>
      %1034 = arith.mulf %1033, %1031 : vector<1x8xf32>
      %1035 = arith.addf %1025, %1034 : vector<1x8xf32>
      %c88_i32_314 = arith.constant 88 : i32
      %1036 = arith.addi %3, %c88_i32_314 : i32
      %c7_i32_315 = arith.constant 7 : i32
      %1037 = arith.addi %1036, %c7_i32_315 : i32
      %1038 = arith.index_cast %1037 : i32 to index
      %1039 = memref.load %arg1[%1038] : memref<1024xi32, #tpu.memory_space<smem>>
      %1040 = arith.index_cast %1039 : i32 to index
      %c0_316 = arith.constant 0 : index
      %1041 = vector.load %arg3[%1040, %c0_316] : memref<16x8xf32, #tpu.memory_space<vmem>>, vector<1x8xf32>
      %1042 = vector.extract_strided_slice %964 {offsets = [0, 7], sizes = [1, 1], strides = [1, 1]} : vector<1x8xf32> to vector<1x1xf32>
      %1043 = vector.broadcast %1042 : vector<1x1xf32> to vector<1x8xf32>
      %1044 = arith.mulf %1043, %1041 : vector<1x8xf32>
      %1045 = arith.addf %1035, %1044 : vector<1x8xf32>
      %1046 = arith.index_cast %arg5 : i32 to index
      %c88 = arith.constant 88 : index
      %1047 = vector.load %arg4[%1046, %c88] : memref<8x128xf32, #tpu.memory_space<vmem>>, vector<1x8xf32>
      tpu.vector_store %arg4[%1046, %c88], %1045 {strides = array<i32>} : memref<8x128xf32, #tpu.memory_space<vmem>>, vector<1x8xf32>,
      %c16_i32_317 = arith.constant 16 : i32
      %1048 = arith.muli %arg5, %c16_i32_317 : i32
      %c12_i32 = arith.constant 12 : i32
      %1049 = arith.addi %1048, %c12_i32 : i32
      %1050 = arith.index_cast %1049 : i32 to index
      %c0_318 = arith.constant 0 : index
      %1051 = vector.load %arg2[%1050, %c0_318] : memref<128x8xf32, #tpu.memory_space<vmem>>, vector<1x8xf32>
      %cst_319 = arith.constant 0.000000e+00 : f32
      %1052 = vector.broadcast %cst_319 : f32 to vector<1x8xf32>
      %c96_i32 = arith.constant 96 : i32
      %1053 = arith.addi %3, %c96_i32 : i32
      %c0_i32_320 = arith.constant 0 : i32
      %1054 = arith.addi %1053, %c0_i32_320 : i32
      %1055 = arith.index_cast %1054 : i32 to index
      %1056 = memref.load %arg1[%1055] : memref<1024xi32, #tpu.memory_space<smem>>
      %1057 = arith.index_cast %1056 : i32 to index
      %c0_321 = arith.constant 0 : index
      %1058 = vector.load %arg3[%1057, %c0_321] : memref<16x8xf32, #tpu.memory_space<vmem>>, vector<1x8xf32>
      %1059 = vector.extract_strided_slice %1051 {offsets = [0, 0], sizes = [1, 1], strides = [1, 1]} : vector<1x8xf32> to vector<1x1xf32>
      %1060 = vector.broadcast %1059 : vector<1x1xf32> to vector<1x8xf32>
      %1061 = arith.mulf %1060, %1058 : vector<1x8xf32>
      %1062 = arith.addf %1052, %1061 : vector<1x8xf32>
      %c96_i32_322 = arith.constant 96 : i32
      %1063 = arith.addi %3, %c96_i32_322 : i32
      %c1_i32_323 = arith.constant 1 : i32
      %1064 = arith.addi %1063, %c1_i32_323 : i32
      %1065 = arith.index_cast %1064 : i32 to index
      %1066 = memref.load %arg1[%1065] : memref<1024xi32, #tpu.memory_space<smem>>
      %1067 = arith.index_cast %1066 : i32 to index
      %c0_324 = arith.constant 0 : index
      %1068 = vector.load %arg3[%1067, %c0_324] : memref<16x8xf32, #tpu.memory_space<vmem>>, vector<1x8xf32>
      %1069 = vector.extract_strided_slice %1051 {offsets = [0, 1], sizes = [1, 1], strides = [1, 1]} : vector<1x8xf32> to vector<1x1xf32>
      %1070 = vector.broadcast %1069 : vector<1x1xf32> to vector<1x8xf32>
      %1071 = arith.mulf %1070, %1068 : vector<1x8xf32>
      %1072 = arith.addf %1062, %1071 : vector<1x8xf32>
      %c96_i32_325 = arith.constant 96 : i32
      %1073 = arith.addi %3, %c96_i32_325 : i32
      %c2_i32_326 = arith.constant 2 : i32
      %1074 = arith.addi %1073, %c2_i32_326 : i32
      %1075 = arith.index_cast %1074 : i32 to index
      %1076 = memref.load %arg1[%1075] : memref<1024xi32, #tpu.memory_space<smem>>
      %1077 = arith.index_cast %1076 : i32 to index
      %c0_327 = arith.constant 0 : index
      %1078 = vector.load %arg3[%1077, %c0_327] : memref<16x8xf32, #tpu.memory_space<vmem>>, vector<1x8xf32>
      %1079 = vector.extract_strided_slice %1051 {offsets = [0, 2], sizes = [1, 1], strides = [1, 1]} : vector<1x8xf32> to vector<1x1xf32>
      %1080 = vector.broadcast %1079 : vector<1x1xf32> to vector<1x8xf32>
      %1081 = arith.mulf %1080, %1078 : vector<1x8xf32>
      %1082 = arith.addf %1072, %1081 : vector<1x8xf32>
      %c96_i32_328 = arith.constant 96 : i32
      %1083 = arith.addi %3, %c96_i32_328 : i32
      %c3_i32_329 = arith.constant 3 : i32
      %1084 = arith.addi %1083, %c3_i32_329 : i32
      %1085 = arith.index_cast %1084 : i32 to index
      %1086 = memref.load %arg1[%1085] : memref<1024xi32, #tpu.memory_space<smem>>
      %1087 = arith.index_cast %1086 : i32 to index
      %c0_330 = arith.constant 0 : index
      %1088 = vector.load %arg3[%1087, %c0_330] : memref<16x8xf32, #tpu.memory_space<vmem>>, vector<1x8xf32>
      %1089 = vector.extract_strided_slice %1051 {offsets = [0, 3], sizes = [1, 1], strides = [1, 1]} : vector<1x8xf32> to vector<1x1xf32>
      %1090 = vector.broadcast %1089 : vector<1x1xf32> to vector<1x8xf32>
      %1091 = arith.mulf %1090, %1088 : vector<1x8xf32>
      %1092 = arith.addf %1082, %1091 : vector<1x8xf32>
      %c96_i32_331 = arith.constant 96 : i32
      %1093 = arith.addi %3, %c96_i32_331 : i32
      %c4_i32_332 = arith.constant 4 : i32
      %1094 = arith.addi %1093, %c4_i32_332 : i32
      %1095 = arith.index_cast %1094 : i32 to index
      %1096 = memref.load %arg1[%1095] : memref<1024xi32, #tpu.memory_space<smem>>
      %1097 = arith.index_cast %1096 : i32 to index
      %c0_333 = arith.constant 0 : index
      %1098 = vector.load %arg3[%1097, %c0_333] : memref<16x8xf32, #tpu.memory_space<vmem>>, vector<1x8xf32>
      %1099 = vector.extract_strided_slice %1051 {offsets = [0, 4], sizes = [1, 1], strides = [1, 1]} : vector<1x8xf32> to vector<1x1xf32>
      %1100 = vector.broadcast %1099 : vector<1x1xf32> to vector<1x8xf32>
      %1101 = arith.mulf %1100, %1098 : vector<1x8xf32>
      %1102 = arith.addf %1092, %1101 : vector<1x8xf32>
      %c96_i32_334 = arith.constant 96 : i32
      %1103 = arith.addi %3, %c96_i32_334 : i32
      %c5_i32_335 = arith.constant 5 : i32
      %1104 = arith.addi %1103, %c5_i32_335 : i32
      %1105 = arith.index_cast %1104 : i32 to index
      %1106 = memref.load %arg1[%1105] : memref<1024xi32, #tpu.memory_space<smem>>
      %1107 = arith.index_cast %1106 : i32 to index
      %c0_336 = arith.constant 0 : index
      %1108 = vector.load %arg3[%1107, %c0_336] : memref<16x8xf32, #tpu.memory_space<vmem>>, vector<1x8xf32>
      %1109 = vector.extract_strided_slice %1051 {offsets = [0, 5], sizes = [1, 1], strides = [1, 1]} : vector<1x8xf32> to vector<1x1xf32>
      %1110 = vector.broadcast %1109 : vector<1x1xf32> to vector<1x8xf32>
      %1111 = arith.mulf %1110, %1108 : vector<1x8xf32>
      %1112 = arith.addf %1102, %1111 : vector<1x8xf32>
      %c96_i32_337 = arith.constant 96 : i32
      %1113 = arith.addi %3, %c96_i32_337 : i32
      %c6_i32_338 = arith.constant 6 : i32
      %1114 = arith.addi %1113, %c6_i32_338 : i32
      %1115 = arith.index_cast %1114 : i32 to index
      %1116 = memref.load %arg1[%1115] : memref<1024xi32, #tpu.memory_space<smem>>
      %1117 = arith.index_cast %1116 : i32 to index
      %c0_339 = arith.constant 0 : index
      %1118 = vector.load %arg3[%1117, %c0_339] : memref<16x8xf32, #tpu.memory_space<vmem>>, vector<1x8xf32>
      %1119 = vector.extract_strided_slice %1051 {offsets = [0, 6], sizes = [1, 1], strides = [1, 1]} : vector<1x8xf32> to vector<1x1xf32>
      %1120 = vector.broadcast %1119 : vector<1x1xf32> to vector<1x8xf32>
      %1121 = arith.mulf %1120, %1118 : vector<1x8xf32>
      %1122 = arith.addf %1112, %1121 : vector<1x8xf32>
      %c96_i32_340 = arith.constant 96 : i32
      %1123 = arith.addi %3, %c96_i32_340 : i32
      %c7_i32_341 = arith.constant 7 : i32
      %1124 = arith.addi %1123, %c7_i32_341 : i32
      %1125 = arith.index_cast %1124 : i32 to index
      %1126 = memref.load %arg1[%1125] : memref<1024xi32, #tpu.memory_space<smem>>
      %1127 = arith.index_cast %1126 : i32 to index
      %c0_342 = arith.constant 0 : index
      %1128 = vector.load %arg3[%1127, %c0_342] : memref<16x8xf32, #tpu.memory_space<vmem>>, vector<1x8xf32>
      %1129 = vector.extract_strided_slice %1051 {offsets = [0, 7], sizes = [1, 1], strides = [1, 1]} : vector<1x8xf32> to vector<1x1xf32>
      %1130 = vector.broadcast %1129 : vector<1x1xf32> to vector<1x8xf32>
      %1131 = arith.mulf %1130, %1128 : vector<1x8xf32>
      %1132 = arith.addf %1122, %1131 : vector<1x8xf32>
      %1133 = arith.index_cast %arg5 : i32 to index
      %c96 = arith.constant 96 : index
      %1134 = vector.load %arg4[%1133, %c96] : memref<8x128xf32, #tpu.memory_space<vmem>>, vector<1x8xf32>
      tpu.vector_store %arg4[%1133, %c96], %1132 {strides = array<i32>} : memref<8x128xf32, #tpu.memory_space<vmem>>, vector<1x8xf32>,
      %c16_i32_343 = arith.constant 16 : i32
      %1135 = arith.muli %arg5, %c16_i32_343 : i32
      %c13_i32 = arith.constant 13 : i32
      %1136 = arith.addi %1135, %c13_i32 : i32
      %1137 = arith.index_cast %1136 : i32 to index
      %c0_344 = arith.constant 0 : index
      %1138 = vector.load %arg2[%1137, %c0_344] : memref<128x8xf32, #tpu.memory_space<vmem>>, vector<1x8xf32>
      %cst_345 = arith.constant 0.000000e+00 : f32
      %1139 = vector.broadcast %cst_345 : f32 to vector<1x8xf32>
      %c104_i32 = arith.constant 104 : i32
      %1140 = arith.addi %3, %c104_i32 : i32
      %c0_i32_346 = arith.constant 0 : i32
      %1141 = arith.addi %1140, %c0_i32_346 : i32
      %1142 = arith.index_cast %1141 : i32 to index
      %1143 = memref.load %arg1[%1142] : memref<1024xi32, #tpu.memory_space<smem>>
      %1144 = arith.index_cast %1143 : i32 to index
      %c0_347 = arith.constant 0 : index
      %1145 = vector.load %arg3[%1144, %c0_347] : memref<16x8xf32, #tpu.memory_space<vmem>>, vector<1x8xf32>
      %1146 = vector.extract_strided_slice %1138 {offsets = [0, 0], sizes = [1, 1], strides = [1, 1]} : vector<1x8xf32> to vector<1x1xf32>
      %1147 = vector.broadcast %1146 : vector<1x1xf32> to vector<1x8xf32>
      %1148 = arith.mulf %1147, %1145 : vector<1x8xf32>
      %1149 = arith.addf %1139, %1148 : vector<1x8xf32>
      %c104_i32_348 = arith.constant 104 : i32
      %1150 = arith.addi %3, %c104_i32_348 : i32
      %c1_i32_349 = arith.constant 1 : i32
      %1151 = arith.addi %1150, %c1_i32_349 : i32
      %1152 = arith.index_cast %1151 : i32 to index
      %1153 = memref.load %arg1[%1152] : memref<1024xi32, #tpu.memory_space<smem>>
      %1154 = arith.index_cast %1153 : i32 to index
      %c0_350 = arith.constant 0 : index
      %1155 = vector.load %arg3[%1154, %c0_350] : memref<16x8xf32, #tpu.memory_space<vmem>>, vector<1x8xf32>
      %1156 = vector.extract_strided_slice %1138 {offsets = [0, 1], sizes = [1, 1], strides = [1, 1]} : vector<1x8xf32> to vector<1x1xf32>
      %1157 = vector.broadcast %1156 : vector<1x1xf32> to vector<1x8xf32>
      %1158 = arith.mulf %1157, %1155 : vector<1x8xf32>
      %1159 = arith.addf %1149, %1158 : vector<1x8xf32>
      %c104_i32_351 = arith.constant 104 : i32
      %1160 = arith.addi %3, %c104_i32_351 : i32
      %c2_i32_352 = arith.constant 2 : i32
      %1161 = arith.addi %1160, %c2_i32_352 : i32
      %1162 = arith.index_cast %1161 : i32 to index
      %1163 = memref.load %arg1[%1162] : memref<1024xi32, #tpu.memory_space<smem>>
      %1164 = arith.index_cast %1163 : i32 to index
      %c0_353 = arith.constant 0 : index
      %1165 = vector.load %arg3[%1164, %c0_353] : memref<16x8xf32, #tpu.memory_space<vmem>>, vector<1x8xf32>
      %1166 = vector.extract_strided_slice %1138 {offsets = [0, 2], sizes = [1, 1], strides = [1, 1]} : vector<1x8xf32> to vector<1x1xf32>
      %1167 = vector.broadcast %1166 : vector<1x1xf32> to vector<1x8xf32>
      %1168 = arith.mulf %1167, %1165 : vector<1x8xf32>
      %1169 = arith.addf %1159, %1168 : vector<1x8xf32>
      %c104_i32_354 = arith.constant 104 : i32
      %1170 = arith.addi %3, %c104_i32_354 : i32
      %c3_i32_355 = arith.constant 3 : i32
      %1171 = arith.addi %1170, %c3_i32_355 : i32
      %1172 = arith.index_cast %1171 : i32 to index
      %1173 = memref.load %arg1[%1172] : memref<1024xi32, #tpu.memory_space<smem>>
      %1174 = arith.index_cast %1173 : i32 to index
      %c0_356 = arith.constant 0 : index
      %1175 = vector.load %arg3[%1174, %c0_356] : memref<16x8xf32, #tpu.memory_space<vmem>>, vector<1x8xf32>
      %1176 = vector.extract_strided_slice %1138 {offsets = [0, 3], sizes = [1, 1], strides = [1, 1]} : vector<1x8xf32> to vector<1x1xf32>
      %1177 = vector.broadcast %1176 : vector<1x1xf32> to vector<1x8xf32>
      %1178 = arith.mulf %1177, %1175 : vector<1x8xf32>
      %1179 = arith.addf %1169, %1178 : vector<1x8xf32>
      %c104_i32_357 = arith.constant 104 : i32
      %1180 = arith.addi %3, %c104_i32_357 : i32
      %c4_i32_358 = arith.constant 4 : i32
      %1181 = arith.addi %1180, %c4_i32_358 : i32
      %1182 = arith.index_cast %1181 : i32 to index
      %1183 = memref.load %arg1[%1182] : memref<1024xi32, #tpu.memory_space<smem>>
      %1184 = arith.index_cast %1183 : i32 to index
      %c0_359 = arith.constant 0 : index
      %1185 = vector.load %arg3[%1184, %c0_359] : memref<16x8xf32, #tpu.memory_space<vmem>>, vector<1x8xf32>
      %1186 = vector.extract_strided_slice %1138 {offsets = [0, 4], sizes = [1, 1], strides = [1, 1]} : vector<1x8xf32> to vector<1x1xf32>
      %1187 = vector.broadcast %1186 : vector<1x1xf32> to vector<1x8xf32>
      %1188 = arith.mulf %1187, %1185 : vector<1x8xf32>
      %1189 = arith.addf %1179, %1188 : vector<1x8xf32>
      %c104_i32_360 = arith.constant 104 : i32
      %1190 = arith.addi %3, %c104_i32_360 : i32
      %c5_i32_361 = arith.constant 5 : i32
      %1191 = arith.addi %1190, %c5_i32_361 : i32
      %1192 = arith.index_cast %1191 : i32 to index
      %1193 = memref.load %arg1[%1192] : memref<1024xi32, #tpu.memory_space<smem>>
      %1194 = arith.index_cast %1193 : i32 to index
      %c0_362 = arith.constant 0 : index
      %1195 = vector.load %arg3[%1194, %c0_362] : memref<16x8xf32, #tpu.memory_space<vmem>>, vector<1x8xf32>
      %1196 = vector.extract_strided_slice %1138 {offsets = [0, 5], sizes = [1, 1], strides = [1, 1]} : vector<1x8xf32> to vector<1x1xf32>
      %1197 = vector.broadcast %1196 : vector<1x1xf32> to vector<1x8xf32>
      %1198 = arith.mulf %1197, %1195 : vector<1x8xf32>
      %1199 = arith.addf %1189, %1198 : vector<1x8xf32>
      %c104_i32_363 = arith.constant 104 : i32
      %1200 = arith.addi %3, %c104_i32_363 : i32
      %c6_i32_364 = arith.constant 6 : i32
      %1201 = arith.addi %1200, %c6_i32_364 : i32
      %1202 = arith.index_cast %1201 : i32 to index
      %1203 = memref.load %arg1[%1202] : memref<1024xi32, #tpu.memory_space<smem>>
      %1204 = arith.index_cast %1203 : i32 to index
      %c0_365 = arith.constant 0 : index
      %1205 = vector.load %arg3[%1204, %c0_365] : memref<16x8xf32, #tpu.memory_space<vmem>>, vector<1x8xf32>
      %1206 = vector.extract_strided_slice %1138 {offsets = [0, 6], sizes = [1, 1], strides = [1, 1]} : vector<1x8xf32> to vector<1x1xf32>
      %1207 = vector.broadcast %1206 : vector<1x1xf32> to vector<1x8xf32>
      %1208 = arith.mulf %1207, %1205 : vector<1x8xf32>
      %1209 = arith.addf %1199, %1208 : vector<1x8xf32>
      %c104_i32_366 = arith.constant 104 : i32
      %1210 = arith.addi %3, %c104_i32_366 : i32
      %c7_i32_367 = arith.constant 7 : i32
      %1211 = arith.addi %1210, %c7_i32_367 : i32
      %1212 = arith.index_cast %1211 : i32 to index
      %1213 = memref.load %arg1[%1212] : memref<1024xi32, #tpu.memory_space<smem>>
      %1214 = arith.index_cast %1213 : i32 to index
      %c0_368 = arith.constant 0 : index
      %1215 = vector.load %arg3[%1214, %c0_368] : memref<16x8xf32, #tpu.memory_space<vmem>>, vector<1x8xf32>
      %1216 = vector.extract_strided_slice %1138 {offsets = [0, 7], sizes = [1, 1], strides = [1, 1]} : vector<1x8xf32> to vector<1x1xf32>
      %1217 = vector.broadcast %1216 : vector<1x1xf32> to vector<1x8xf32>
      %1218 = arith.mulf %1217, %1215 : vector<1x8xf32>
      %1219 = arith.addf %1209, %1218 : vector<1x8xf32>
      %1220 = arith.index_cast %arg5 : i32 to index
      %c104 = arith.constant 104 : index
      %1221 = vector.load %arg4[%1220, %c104] : memref<8x128xf32, #tpu.memory_space<vmem>>, vector<1x8xf32>
      tpu.vector_store %arg4[%1220, %c104], %1219 {strides = array<i32>} : memref<8x128xf32, #tpu.memory_space<vmem>>, vector<1x8xf32>,
      %c16_i32_369 = arith.constant 16 : i32
      %1222 = arith.muli %arg5, %c16_i32_369 : i32
      %c14_i32 = arith.constant 14 : i32
      %1223 = arith.addi %1222, %c14_i32 : i32
      %1224 = arith.index_cast %1223 : i32 to index
      %c0_370 = arith.constant 0 : index
      %1225 = vector.load %arg2[%1224, %c0_370] : memref<128x8xf32, #tpu.memory_space<vmem>>, vector<1x8xf32>
      %cst_371 = arith.constant 0.000000e+00 : f32
      %1226 = vector.broadcast %cst_371 : f32 to vector<1x8xf32>
      %c112_i32 = arith.constant 112 : i32
      %1227 = arith.addi %3, %c112_i32 : i32
      %c0_i32_372 = arith.constant 0 : i32
      %1228 = arith.addi %1227, %c0_i32_372 : i32
      %1229 = arith.index_cast %1228 : i32 to index
      %1230 = memref.load %arg1[%1229] : memref<1024xi32, #tpu.memory_space<smem>>
      %1231 = arith.index_cast %1230 : i32 to index
      %c0_373 = arith.constant 0 : index
      %1232 = vector.load %arg3[%1231, %c0_373] : memref<16x8xf32, #tpu.memory_space<vmem>>, vector<1x8xf32>
      %1233 = vector.extract_strided_slice %1225 {offsets = [0, 0], sizes = [1, 1], strides = [1, 1]} : vector<1x8xf32> to vector<1x1xf32>
      %1234 = vector.broadcast %1233 : vector<1x1xf32> to vector<1x8xf32>
      %1235 = arith.mulf %1234, %1232 : vector<1x8xf32>
      %1236 = arith.addf %1226, %1235 : vector<1x8xf32>
      %c112_i32_374 = arith.constant 112 : i32
      %1237 = arith.addi %3, %c112_i32_374 : i32
      %c1_i32_375 = arith.constant 1 : i32
      %1238 = arith.addi %1237, %c1_i32_375 : i32
      %1239 = arith.index_cast %1238 : i32 to index
      %1240 = memref.load %arg1[%1239] : memref<1024xi32, #tpu.memory_space<smem>>
      %1241 = arith.index_cast %1240 : i32 to index
      %c0_376 = arith.constant 0 : index
      %1242 = vector.load %arg3[%1241, %c0_376] : memref<16x8xf32, #tpu.memory_space<vmem>>, vector<1x8xf32>
      %1243 = vector.extract_strided_slice %1225 {offsets = [0, 1], sizes = [1, 1], strides = [1, 1]} : vector<1x8xf32> to vector<1x1xf32>
      %1244 = vector.broadcast %1243 : vector<1x1xf32> to vector<1x8xf32>
      %1245 = arith.mulf %1244, %1242 : vector<1x8xf32>
      %1246 = arith.addf %1236, %1245 : vector<1x8xf32>
      %c112_i32_377 = arith.constant 112 : i32
      %1247 = arith.addi %3, %c112_i32_377 : i32
      %c2_i32_378 = arith.constant 2 : i32
      %1248 = arith.addi %1247, %c2_i32_378 : i32
      %1249 = arith.index_cast %1248 : i32 to index
      %1250 = memref.load %arg1[%1249] : memref<1024xi32, #tpu.memory_space<smem>>
      %1251 = arith.index_cast %1250 : i32 to index
      %c0_379 = arith.constant 0 : index
      %1252 = vector.load %arg3[%1251, %c0_379] : memref<16x8xf32, #tpu.memory_space<vmem>>, vector<1x8xf32>
      %1253 = vector.extract_strided_slice %1225 {offsets = [0, 2], sizes = [1, 1], strides = [1, 1]} : vector<1x8xf32> to vector<1x1xf32>
      %1254 = vector.broadcast %1253 : vector<1x1xf32> to vector<1x8xf32>
      %1255 = arith.mulf %1254, %1252 : vector<1x8xf32>
      %1256 = arith.addf %1246, %1255 : vector<1x8xf32>
      %c112_i32_380 = arith.constant 112 : i32
      %1257 = arith.addi %3, %c112_i32_380 : i32
      %c3_i32_381 = arith.constant 3 : i32
      %1258 = arith.addi %1257, %c3_i32_381 : i32
      %1259 = arith.index_cast %1258 : i32 to index
      %1260 = memref.load %arg1[%1259] : memref<1024xi32, #tpu.memory_space<smem>>
      %1261 = arith.index_cast %1260 : i32 to index
      %c0_382 = arith.constant 0 : index
      %1262 = vector.load %arg3[%1261, %c0_382] : memref<16x8xf32, #tpu.memory_space<vmem>>, vector<1x8xf32>
      %1263 = vector.extract_strided_slice %1225 {offsets = [0, 3], sizes = [1, 1], strides = [1, 1]} : vector<1x8xf32> to vector<1x1xf32>
      %1264 = vector.broadcast %1263 : vector<1x1xf32> to vector<1x8xf32>
      %1265 = arith.mulf %1264, %1262 : vector<1x8xf32>
      %1266 = arith.addf %1256, %1265 : vector<1x8xf32>
      %c112_i32_383 = arith.constant 112 : i32
      %1267 = arith.addi %3, %c112_i32_383 : i32
      %c4_i32_384 = arith.constant 4 : i32
      %1268 = arith.addi %1267, %c4_i32_384 : i32
      %1269 = arith.index_cast %1268 : i32 to index
      %1270 = memref.load %arg1[%1269] : memref<1024xi32, #tpu.memory_space<smem>>
      %1271 = arith.index_cast %1270 : i32 to index
      %c0_385 = arith.constant 0 : index
      %1272 = vector.load %arg3[%1271, %c0_385] : memref<16x8xf32, #tpu.memory_space<vmem>>, vector<1x8xf32>
      %1273 = vector.extract_strided_slice %1225 {offsets = [0, 4], sizes = [1, 1], strides = [1, 1]} : vector<1x8xf32> to vector<1x1xf32>
      %1274 = vector.broadcast %1273 : vector<1x1xf32> to vector<1x8xf32>
      %1275 = arith.mulf %1274, %1272 : vector<1x8xf32>
      %1276 = arith.addf %1266, %1275 : vector<1x8xf32>
      %c112_i32_386 = arith.constant 112 : i32
      %1277 = arith.addi %3, %c112_i32_386 : i32
      %c5_i32_387 = arith.constant 5 : i32
      %1278 = arith.addi %1277, %c5_i32_387 : i32
      %1279 = arith.index_cast %1278 : i32 to index
      %1280 = memref.load %arg1[%1279] : memref<1024xi32, #tpu.memory_space<smem>>
      %1281 = arith.index_cast %1280 : i32 to index
      %c0_388 = arith.constant 0 : index
      %1282 = vector.load %arg3[%1281, %c0_388] : memref<16x8xf32, #tpu.memory_space<vmem>>, vector<1x8xf32>
      %1283 = vector.extract_strided_slice %1225 {offsets = [0, 5], sizes = [1, 1], strides = [1, 1]} : vector<1x8xf32> to vector<1x1xf32>
      %1284 = vector.broadcast %1283 : vector<1x1xf32> to vector<1x8xf32>
      %1285 = arith.mulf %1284, %1282 : vector<1x8xf32>
      %1286 = arith.addf %1276, %1285 : vector<1x8xf32>
      %c112_i32_389 = arith.constant 112 : i32
      %1287 = arith.addi %3, %c112_i32_389 : i32
      %c6_i32_390 = arith.constant 6 : i32
      %1288 = arith.addi %1287, %c6_i32_390 : i32
      %1289 = arith.index_cast %1288 : i32 to index
      %1290 = memref.load %arg1[%1289] : memref<1024xi32, #tpu.memory_space<smem>>
      %1291 = arith.index_cast %1290 : i32 to index
      %c0_391 = arith.constant 0 : index
      %1292 = vector.load %arg3[%1291, %c0_391] : memref<16x8xf32, #tpu.memory_space<vmem>>, vector<1x8xf32>
      %1293 = vector.extract_strided_slice %1225 {offsets = [0, 6], sizes = [1, 1], strides = [1, 1]} : vector<1x8xf32> to vector<1x1xf32>
      %1294 = vector.broadcast %1293 : vector<1x1xf32> to vector<1x8xf32>
      %1295 = arith.mulf %1294, %1292 : vector<1x8xf32>
      %1296 = arith.addf %1286, %1295 : vector<1x8xf32>
      %c112_i32_392 = arith.constant 112 : i32
      %1297 = arith.addi %3, %c112_i32_392 : i32
      %c7_i32_393 = arith.constant 7 : i32
      %1298 = arith.addi %1297, %c7_i32_393 : i32
      %1299 = arith.index_cast %1298 : i32 to index
      %1300 = memref.load %arg1[%1299] : memref<1024xi32, #tpu.memory_space<smem>>
      %1301 = arith.index_cast %1300 : i32 to index
      %c0_394 = arith.constant 0 : index
      %1302 = vector.load %arg3[%1301, %c0_394] : memref<16x8xf32, #tpu.memory_space<vmem>>, vector<1x8xf32>
      %1303 = vector.extract_strided_slice %1225 {offsets = [0, 7], sizes = [1, 1], strides = [1, 1]} : vector<1x8xf32> to vector<1x1xf32>
      %1304 = vector.broadcast %1303 : vector<1x1xf32> to vector<1x8xf32>
      %1305 = arith.mulf %1304, %1302 : vector<1x8xf32>
      %1306 = arith.addf %1296, %1305 : vector<1x8xf32>
      %1307 = arith.index_cast %arg5 : i32 to index
      %c112 = arith.constant 112 : index
      %1308 = vector.load %arg4[%1307, %c112] : memref<8x128xf32, #tpu.memory_space<vmem>>, vector<1x8xf32>
      tpu.vector_store %arg4[%1307, %c112], %1306 {strides = array<i32>} : memref<8x128xf32, #tpu.memory_space<vmem>>, vector<1x8xf32>,
      %c16_i32_395 = arith.constant 16 : i32
      %1309 = arith.muli %arg5, %c16_i32_395 : i32
      %c15_i32 = arith.constant 15 : i32
      %1310 = arith.addi %1309, %c15_i32 : i32
      %1311 = arith.index_cast %1310 : i32 to index
      %c0_396 = arith.constant 0 : index
      %1312 = vector.load %arg2[%1311, %c0_396] : memref<128x8xf32, #tpu.memory_space<vmem>>, vector<1x8xf32>
      %cst_397 = arith.constant 0.000000e+00 : f32
      %1313 = vector.broadcast %cst_397 : f32 to vector<1x8xf32>
      %c120_i32 = arith.constant 120 : i32
      %1314 = arith.addi %3, %c120_i32 : i32
      %c0_i32_398 = arith.constant 0 : i32
      %1315 = arith.addi %1314, %c0_i32_398 : i32
      %1316 = arith.index_cast %1315 : i32 to index
      %1317 = memref.load %arg1[%1316] : memref<1024xi32, #tpu.memory_space<smem>>
      %1318 = arith.index_cast %1317 : i32 to index
      %c0_399 = arith.constant 0 : index
      %1319 = vector.load %arg3[%1318, %c0_399] : memref<16x8xf32, #tpu.memory_space<vmem>>, vector<1x8xf32>
      %1320 = vector.extract_strided_slice %1312 {offsets = [0, 0], sizes = [1, 1], strides = [1, 1]} : vector<1x8xf32> to vector<1x1xf32>
      %1321 = vector.broadcast %1320 : vector<1x1xf32> to vector<1x8xf32>
      %1322 = arith.mulf %1321, %1319 : vector<1x8xf32>
      %1323 = arith.addf %1313, %1322 : vector<1x8xf32>
      %c120_i32_400 = arith.constant 120 : i32
      %1324 = arith.addi %3, %c120_i32_400 : i32
      %c1_i32_401 = arith.constant 1 : i32
      %1325 = arith.addi %1324, %c1_i32_401 : i32
      %1326 = arith.index_cast %1325 : i32 to index
      %1327 = memref.load %arg1[%1326] : memref<1024xi32, #tpu.memory_space<smem>>
      %1328 = arith.index_cast %1327 : i32 to index
      %c0_402 = arith.constant 0 : index
      %1329 = vector.load %arg3[%1328, %c0_402] : memref<16x8xf32, #tpu.memory_space<vmem>>, vector<1x8xf32>
      %1330 = vector.extract_strided_slice %1312 {offsets = [0, 1], sizes = [1, 1], strides = [1, 1]} : vector<1x8xf32> to vector<1x1xf32>
      %1331 = vector.broadcast %1330 : vector<1x1xf32> to vector<1x8xf32>
      %1332 = arith.mulf %1331, %1329 : vector<1x8xf32>
      %1333 = arith.addf %1323, %1332 : vector<1x8xf32>
      %c120_i32_403 = arith.constant 120 : i32
      %1334 = arith.addi %3, %c120_i32_403 : i32
      %c2_i32_404 = arith.constant 2 : i32
      %1335 = arith.addi %1334, %c2_i32_404 : i32
      %1336 = arith.index_cast %1335 : i32 to index
      %1337 = memref.load %arg1[%1336] : memref<1024xi32, #tpu.memory_space<smem>>
      %1338 = arith.index_cast %1337 : i32 to index
      %c0_405 = arith.constant 0 : index
      %1339 = vector.load %arg3[%1338, %c0_405] : memref<16x8xf32, #tpu.memory_space<vmem>>, vector<1x8xf32>
      %1340 = vector.extract_strided_slice %1312 {offsets = [0, 2], sizes = [1, 1], strides = [1, 1]} : vector<1x8xf32> to vector<1x1xf32>
      %1341 = vector.broadcast %1340 : vector<1x1xf32> to vector<1x8xf32>
      %1342 = arith.mulf %1341, %1339 : vector<1x8xf32>
      %1343 = arith.addf %1333, %1342 : vector<1x8xf32>
      %c120_i32_406 = arith.constant 120 : i32
      %1344 = arith.addi %3, %c120_i32_406 : i32
      %c3_i32_407 = arith.constant 3 : i32
      %1345 = arith.addi %1344, %c3_i32_407 : i32
      %1346 = arith.index_cast %1345 : i32 to index
      %1347 = memref.load %arg1[%1346] : memref<1024xi32, #tpu.memory_space<smem>>
      %1348 = arith.index_cast %1347 : i32 to index
      %c0_408 = arith.constant 0 : index
      %1349 = vector.load %arg3[%1348, %c0_408] : memref<16x8xf32, #tpu.memory_space<vmem>>, vector<1x8xf32>
      %1350 = vector.extract_strided_slice %1312 {offsets = [0, 3], sizes = [1, 1], strides = [1, 1]} : vector<1x8xf32> to vector<1x1xf32>
      %1351 = vector.broadcast %1350 : vector<1x1xf32> to vector<1x8xf32>
      %1352 = arith.mulf %1351, %1349 : vector<1x8xf32>
      %1353 = arith.addf %1343, %1352 : vector<1x8xf32>
      %c120_i32_409 = arith.constant 120 : i32
      %1354 = arith.addi %3, %c120_i32_409 : i32
      %c4_i32_410 = arith.constant 4 : i32
      %1355 = arith.addi %1354, %c4_i32_410 : i32
      %1356 = arith.index_cast %1355 : i32 to index
      %1357 = memref.load %arg1[%1356] : memref<1024xi32, #tpu.memory_space<smem>>
      %1358 = arith.index_cast %1357 : i32 to index
      %c0_411 = arith.constant 0 : index
      %1359 = vector.load %arg3[%1358, %c0_411] : memref<16x8xf32, #tpu.memory_space<vmem>>, vector<1x8xf32>
      %1360 = vector.extract_strided_slice %1312 {offsets = [0, 4], sizes = [1, 1], strides = [1, 1]} : vector<1x8xf32> to vector<1x1xf32>
      %1361 = vector.broadcast %1360 : vector<1x1xf32> to vector<1x8xf32>
      %1362 = arith.mulf %1361, %1359 : vector<1x8xf32>
      %1363 = arith.addf %1353, %1362 : vector<1x8xf32>
      %c120_i32_412 = arith.constant 120 : i32
      %1364 = arith.addi %3, %c120_i32_412 : i32
      %c5_i32_413 = arith.constant 5 : i32
      %1365 = arith.addi %1364, %c5_i32_413 : i32
      %1366 = arith.index_cast %1365 : i32 to index
      %1367 = memref.load %arg1[%1366] : memref<1024xi32, #tpu.memory_space<smem>>
      %1368 = arith.index_cast %1367 : i32 to index
      %c0_414 = arith.constant 0 : index
      %1369 = vector.load %arg3[%1368, %c0_414] : memref<16x8xf32, #tpu.memory_space<vmem>>, vector<1x8xf32>
      %1370 = vector.extract_strided_slice %1312 {offsets = [0, 5], sizes = [1, 1], strides = [1, 1]} : vector<1x8xf32> to vector<1x1xf32>
      %1371 = vector.broadcast %1370 : vector<1x1xf32> to vector<1x8xf32>
      %1372 = arith.mulf %1371, %1369 : vector<1x8xf32>
      %1373 = arith.addf %1363, %1372 : vector<1x8xf32>
      %c120_i32_415 = arith.constant 120 : i32
      %1374 = arith.addi %3, %c120_i32_415 : i32
      %c6_i32_416 = arith.constant 6 : i32
      %1375 = arith.addi %1374, %c6_i32_416 : i32
      %1376 = arith.index_cast %1375 : i32 to index
      %1377 = memref.load %arg1[%1376] : memref<1024xi32, #tpu.memory_space<smem>>
      %1378 = arith.index_cast %1377 : i32 to index
      %c0_417 = arith.constant 0 : index
      %1379 = vector.load %arg3[%1378, %c0_417] : memref<16x8xf32, #tpu.memory_space<vmem>>, vector<1x8xf32>
      %1380 = vector.extract_strided_slice %1312 {offsets = [0, 6], sizes = [1, 1], strides = [1, 1]} : vector<1x8xf32> to vector<1x1xf32>
      %1381 = vector.broadcast %1380 : vector<1x1xf32> to vector<1x8xf32>
      %1382 = arith.mulf %1381, %1379 : vector<1x8xf32>
      %1383 = arith.addf %1373, %1382 : vector<1x8xf32>
      %c120_i32_418 = arith.constant 120 : i32
      %1384 = arith.addi %3, %c120_i32_418 : i32
      %c7_i32_419 = arith.constant 7 : i32
      %1385 = arith.addi %1384, %c7_i32_419 : i32
      %1386 = arith.index_cast %1385 : i32 to index
      %1387 = memref.load %arg1[%1386] : memref<1024xi32, #tpu.memory_space<smem>>
      %1388 = arith.index_cast %1387 : i32 to index
      %c0_420 = arith.constant 0 : index
      %1389 = vector.load %arg3[%1388, %c0_420] : memref<16x8xf32, #tpu.memory_space<vmem>>, vector<1x8xf32>
      %1390 = vector.extract_strided_slice %1312 {offsets = [0, 7], sizes = [1, 1], strides = [1, 1]} : vector<1x8xf32> to vector<1x1xf32>
      %1391 = vector.broadcast %1390 : vector<1x1xf32> to vector<1x8xf32>
      %1392 = arith.mulf %1391, %1389 : vector<1x8xf32>
      %1393 = arith.addf %1383, %1392 : vector<1x8xf32>
      %1394 = arith.index_cast %arg5 : i32 to index
      %c120 = arith.constant 120 : index
      %1395 = vector.load %arg4[%1394, %c120] : memref<8x128xf32, #tpu.memory_space<vmem>>, vector<1x8xf32>
      tpu.vector_store %arg4[%1394, %c120], %1393 {strides = array<i32>} : memref<8x128xf32, #tpu.memory_space<vmem>>, vector<1x8xf32>,
    }
    %c8_i32_0 = arith.constant 8 : i32
    return
  }
  func.func @transform_0(%arg0: i32, %arg1: memref<1024xi32, #tpu.memory_space<smem>>) -> (i32, i32) {
    %c0_i32 = arith.constant 0 : i32
    %c0_i32_0 = arith.constant 0 : i32
    return %arg0, %c0_i32 : i32, i32
  }
  func.func @transform_1(%arg0: i32, %arg1: memref<1024xi32, #tpu.memory_space<smem>>) -> (i32, i32) {
    %c0_i32 = arith.constant 0 : i32
    %c0_i32_0 = arith.constant 0 : i32
    %c0_i32_1 = arith.constant 0 : i32
    return %c0_i32, %c0_i32_0 : i32, i32
  }
  func.func @transform_2(%arg0: i32, %arg1: memref<1024xi32, #tpu.memory_space<smem>>) -> (i32, i32) {
    %c0_i32 = arith.constant 0 : i32
    %c0_i32_0 = arith.constant 0 : i32
    return %arg0, %c0_i32 : i32, i32
  }
}

</mosaic_0001>

<llo_original>
// kernel: tpu_custom_call.1
$region0: #{tpu_custom_call.1}
  #allocation0 [shape = 'u32[]', space=smem, size = 0x4, offset = 0x4, fixed_abs, tag = 'smem constant byte address 0x4 - core index']
  #allocation1 [shape = 'u32[144,128]{1,0:T(1,128)}', space=vmem, size = 0x12000, scoped, tag = 'internal scratch']
  #allocation2 [shape = 's32[1]{0}', space=sflag, size = 0x4, scoped, tag = 'scoped memory for tpu_custom_call.1']
  #allocation3 [shape = 'u8[4096]{0}', space=smem, size = 0x1000, scoped, tag = 'prefetched SMEM operand 0']
  %s0 = inlined_call_operand.vmem [shape: s32[1024], index: 0, kind: input, shape index: {}]
  %s1 = inlined_call_operand.vmem [shape: f32[128,8], index: 1, kind: input, shape index: {}]
  %s2 = inlined_call_operand.vmem [shape: f32[16,8], index: 2, kind: input, shape index: {}]
  %s3 = inlined_call_operand.hbm [shape: f32[8,128], index: 3, kind: output, shape index: {}]
  %s4 = sld [smem:[#allocation0]]
  $region25: #{tpu_custom_call.1} parent=0
    _
  %s6 = ssub.s32 1, %s4
  %s7 = scalar_select 0, %s6, %s4
  %s8 = sshll.u32 %s0, 4
  %s9 = int_to_ptr.vmem [resolvable:$true] %s8
  %11 = dma.vmem_to_smem %s9, 128, [#allocation3], [#allocation2]
  %12 = dma.done [#allocation2], 128
  %13 = sfence
  $region1: #{tpu_custom_call.1} parent=0
    #allocation4 [shape = 'u8[4096]{0}', space=vmem, size = 0x1000, scoped, tag = 'output window, operand 0, single buffered']
    #allocation5 [shape = 's32[1]{0}', space=sflag, size = 0x4, scoped, tag = 'scoped memory for tpu_custom_call.1']
    %14 = vsyncpa [#allocation5], 0
    // Predicated region
    $region2: #{tpu_custom_call.1} parent=1 // pred_check
      _
    $region3: #{tpu_custom_call.1} parent=1 // pred_check_branch
      %16 = sbr.rel (0) target = $region5
    $region4: #{tpu_custom_call.1} parent=1 // pred_region
      _
    $region5: #{tpu_custom_call.1} parent=1 // pred_fallthru
      _
    // Predicated region
    $region6: #{tpu_custom_call.1} parent=1 // pred_check
      _
    $region7: #{tpu_custom_call.1} parent=1 // pred_check_branch
      %18 = sbr.rel (0) target = $region9
    $region8: #{tpu_custom_call.1} parent=1 // pred_region
      _
    $region9: #{tpu_custom_call.1} parent=1 // pred_fallthru
      _
    %s19 = smul.u32 0, 1024
    loop: start=0, step=1, limit=8
    $region10: #{tpu_custom_call.1} parent=1 // loop_pre_header
      _
    $region11: #{tpu_custom_call.1} parent=1 // loop_header
      %s21 = sphi 0, %s25
      %p22 = scmp.ge.s32.totalorder %s21, 8
    $region12: #{tpu_custom_call.1} parent=1 // loop_header_branch
      %24 = sbr.rel (%p22) target = $region16
    $region13: #{tpu_custom_call.1} parent=1 // loop_body
      %s26 = smul.u32 %s21, 128
      %s27 = sadd.s32 %s19, %s26
      %s28 = smul.u32 %s21, 16
      %s29 = scalar_lea.vmem %s1, %s28
      %v30 = vld [vmem:[%s29] sm:$0x1]
      %s31 = sld [smem:[#allocation3 + %s27]]
      %s32 = scalar_lea.vmem %s2, %s31
      %v33 = vld [vmem:[%s32] sm:$0x1]
      %35 = vset.pattern.permute.xlu0 0
      %36 = vperm.xlu0 %35, %v30
      %v37 = vpop.permute.xlu0 %36
      %v39 = vmul.f32 %v37, %v33
      %v40 = vadd.f32 %v39, 0.0
      %s41 = sadd.s32 %s27, 1
      %s42 = sld [smem:[#allocation3 + %s41]]
      %s43 = scalar_lea.vmem %s2, %s42
      %v44 = vld [vmem:[%s43] sm:$0x1]
      %45 = vset.pattern.permute.xlu0 1
      %46 = vperm.xlu0 %45, %v30
      %v47 = vpop.permute.xlu0 %46
      %v49 = vmul.f32 %v47, %v44
      %v50 = vadd.f32 %v40, %v49
      %s51 = sadd.s32 %s27, 2
      %s52 = sld [smem:[#allocation3 + %s51]]
      %s53 = scalar_lea.vmem %s2, %s52
      %v54 = vld [vmem:[%s53] sm:$0x1]
      %55 = vset.pattern.permute.xlu0 2
      %56 = vperm.xlu0 %55, %v30
      %v57 = vpop.permute.xlu0 %56
      %v59 = vmul.f32 %v57, %v54
      %v60 = vadd.f32 %v50, %v59
      %s61 = sadd.s32 %s27, 3
      %s62 = sld [smem:[#allocation3 + %s61]]
      %s63 = scalar_lea.vmem %s2, %s62
      %v64 = vld [vmem:[%s63] sm:$0x1]
      %65 = vset.pattern.permute.xlu0 3
      %66 = vperm.xlu0 %65, %v30
      %v67 = vpop.permute.xlu0 %66
      %v69 = vmul.f32 %v67, %v64
      %v70 = vadd.f32 %v60, %v69
      %s71 = sadd.s32 %s27, 4
      %s72 = sld [smem:[#allocation3 + %s71]]
      %s73 = scalar_lea.vmem %s2, %s72
      %v74 = vld [vmem:[%s73] sm:$0x1]
      %75 = vset.pattern.permute.xlu0 4
      %76 = vperm.xlu0 %75, %v30
      %v77 = vpop.permute.xlu0 %76
      %v79 = vmul.f32 %v77, %v74
      %v80 = vadd.f32 %v70, %v79
      %s81 = sadd.s32 %s27, 5
      %s82 = sld [smem:[#allocation3 + %s81]]
      %s83 = scalar_lea.vmem %s2, %s82
      %v84 = vld [vmem:[%s83] sm:$0x1]
      %85 = vset.pattern.permute.xlu0 5
      %86 = vperm.xlu0 %85, %v30
      %v87 = vpop.permute.xlu0 %86
      %v89 = vmul.f32 %v87, %v84
      %v90 = vadd.f32 %v80, %v89
      %s91 = sadd.s32 %s27, 6
      %s92 = sld [smem:[#allocation3 + %s91]]
      %s93 = scalar_lea.vmem %s2, %s92
      %v94 = vld [vmem:[%s93] sm:$0x1]
      %95 = vset.pattern.permute.xlu0 6
      %96 = vperm.xlu0 %95, %v30
      %v97 = vpop.permute.xlu0 %96
      %v99 = vmul.f32 %v97, %v94
      %v100 = vadd.f32 %v90, %v99
      %s101 = sadd.s32 %s27, 7
      %s102 = sld [smem:[#allocation3 + %s101]]
      %s103 = scalar_lea.vmem %s2, %s102
      %v104 = vld [vmem:[%s103] sm:$0x1]
      %105 = vset.pattern.permute.xlu0 7
      %106 = vperm.xlu0 %105, %v30
      %v107 = vpop.permute.xlu0 %106
      %v109 = vmul.f32 %v107, %v104
      %v110 = vadd.f32 %v100, %v109
      %s111 = scalar_lea.vmem [#allocation4], %s21
      %vm112 = vcmask 57344
      %113 = vst.msk [vmem:[%s111] sm:$0x1] %vm112, %v110
      %s114 = sadd.s32 %s28, 1
      %s115 = scalar_lea.vmem %s1, %s114
      %v116 = vld [vmem:[%s115] sm:$0x1]
      %s117 = sadd.s32 %s27, 8
      %s118 = sld [smem:[#allocation3 + %s117]]
      %s119 = scalar_lea.vmem %s2, %s118
      %v120 = vld [vmem:[%s119] sm:$0x1]
      %122 = vset.pattern.permute.xlu0 0
      %123 = vperm.xlu0 %122, %v116
      %v124 = vpop.permute.xlu0 %123
      %v126 = vmul.f32 %v124, %v120
      %v127 = vadd.f32 %v126, 0.0
      %s128 = sadd.s32 %s27, 9
      %s129 = sld [smem:[#allocation3 + %s128]]
      %s130 = scalar_lea.vmem %s2, %s129
      %v131 = vld [vmem:[%s130] sm:$0x1]
      %132 = vset.pattern.permute.xlu0 1
      %133 = vperm.xlu0 %132, %v116
      %v134 = vpop.permute.xlu0 %133
      %v136 = vmul.f32 %v134, %v131
      %v137 = vadd.f32 %v127, %v136
      %s138 = sadd.s32 %s27, 10
      %s139 = sld [smem:[#allocation3 + %s138]]
      %s140 = scalar_lea.vmem %s2, %s139
      %v141 = vld [vmem:[%s140] sm:$0x1]
      %142 = vset.pattern.permute.xlu0 2
      %143 = vperm.xlu0 %142, %v116
      %v144 = vpop.permute.xlu0 %143
      %v146 = vmul.f32 %v144, %v141
      %v147 = vadd.f32 %v137, %v146
      %s148 = sadd.s32 %s27, 11
      %s149 = sld [smem:[#allocation3 + %s148]]
      %s150 = scalar_lea.vmem %s2, %s149
      %v151 = vld [vmem:[%s150] sm:$0x1]
      %152 = vset.pattern.permute.xlu0 3
      %153 = vperm.xlu0 %152, %v116
      %v154 = vpop.permute.xlu0 %153
      %v156 = vmul.f32 %v154, %v151
      %v157 = vadd.f32 %v147, %v156
      %s158 = sadd.s32 %s27, 12
      %s159 = sld [smem:[#allocation3 + %s158]]
      %s160 = scalar_lea.vmem %s2, %s159
      %v161 = vld [vmem:[%s160] sm:$0x1]
      %162 = vset.pattern.permute.xlu0 4
      %163 = vperm.xlu0 %162, %v116
      %v164 = vpop.permute.xlu0 %163
      %v166 = vmul.f32 %v164, %v161
      %v167 = vadd.f32 %v157, %v166
      %s168 = sadd.s32 %s27, 13
      %s169 = sld [smem:[#allocation3 + %s168]]
      %s170 = scalar_lea.vmem %s2, %s169
      %v171 = vld [vmem:[%s170] sm:$0x1]
      %172 = vset.pattern.permute.xlu0 5
      %173 = vperm.xlu0 %172, %v116
      %v174 = vpop.permute.xlu0 %173
      %v176 = vmul.f32 %v174, %v171
      %v177 = vadd.f32 %v167, %v176
      %s178 = sadd.s32 %s27, 14
      %s179 = sld [smem:[#allocation3 + %s178]]
      %s180 = scalar_lea.vmem %s2, %s179
      %v181 = vld [vmem:[%s180] sm:$0x1]
      %182 = vset.pattern.permute.xlu0 6
      %183 = vperm.xlu0 %182, %v116
      %v184 = vpop.permute.xlu0 %183
      %v186 = vmul.f32 %v184, %v181
      %v187 = vadd.f32 %v177, %v186
      %s188 = sadd.s32 %s27, 15
      %s189 = sld [smem:[#allocation3 + %s188]]
      %s190 = scalar_lea.vmem %s2, %s189
      %v191 = vld [vmem:[%s190] sm:$0x1]
      %192 = vset.pattern.permute.xlu0 7
      %193 = vperm.xlu0 %192, %v116
      %v194 = vpop.permute.xlu0 %193
      %v196 = vmul.f32 %v194, %v191
      %v197 = vadd.f32 %v187, %v196
      %199 = vrot.lane.b32.xlu0 %v197, 8
      %v200 = vpop.permute.xlu0 %199
      %vm202 = vcmask 122944
      %203 = vst.msk [vmem:[%s111] sm:$0x1] %vm202, %v200
      %s204 = sadd.s32 %s28, 2
      %s205 = scalar_lea.vmem %s1, %s204
      %v206 = vld [vmem:[%s205] sm:$0x1]
      %s207 = sadd.s32 %s27, 16
      %s208 = sld [smem:[#allocation3 + %s207]]
      %s209 = scalar_lea.vmem %s2, %s208
      %v210 = vld [vmem:[%s209] sm:$0x1]
      %212 = vset.pattern.permute.xlu0 0
      %213 = vperm.xlu0 %212, %v206
      %v214 = vpop.permute.xlu0 %213
      %v216 = vmul.f32 %v214, %v210
      %v217 = vadd.f32 %v216, 0.0
      %s218 = sadd.s32 %s27, 17
      %s219 = sld [smem:[#allocation3 + %s218]]
      %s220 = scalar_lea.vmem %s2, %s219
      %v221 = vld [vmem:[%s220] sm:$0x1]
      %222 = vset.pattern.permute.xlu0 1
      %223 = vperm.xlu0 %222, %v206
      %v224 = vpop.permute.xlu0 %223
      %v226 = vmul.f32 %v224, %v221
      %v227 = vadd.f32 %v217, %v226
      %s228 = sadd.s32 %s27, 18
      %s229 = sld [smem:[#allocation3 + %s228]]
      %s230 = scalar_lea.vmem %s2, %s229
      %v231 = vld [vmem:[%s230] sm:$0x1]
      %232 = vset.pattern.permute.xlu0 2
      %233 = vperm.xlu0 %232, %v206
      %v234 = vpop.permute.xlu0 %233
      %v236 = vmul.f32 %v234, %v231
      %v237 = vadd.f32 %v227, %v236
      %s238 = sadd.s32 %s27, 19
      %s239 = sld [smem:[#allocation3 + %s238]]
      %s240 = scalar_lea.vmem %s2, %s239
      %v241 = vld [vmem:[%s240] sm:$0x1]
      %242 = vset.pattern.permute.xlu0 3
      %243 = vperm.xlu0 %242, %v206
      %v244 = vpop.permute.xlu0 %243
      %v246 = vmul.f32 %v244, %v241
      %v247 = vadd.f32 %v237, %v246
      %s248 = sadd.s32 %s27, 20
      %s249 = sld [smem:[#allocation3 + %s248]]
      %s250 = scalar_lea.vmem %s2, %s249
      %v251 = vld [vmem:[%s250] sm:$0x1]
      %252 = vset.pattern.permute.xlu0 4
      %253 = vperm.xlu0 %252, %v206
      %v254 = vpop.permute.xlu0 %253
      %v256 = vmul.f32 %v254, %v251
      %v257 = vadd.f32 %v247, %v256
      %s258 = sadd.s32 %s27, 21
      %s259 = sld [smem:[#allocation3 + %s258]]
      %s260 = scalar_lea.vmem %s2, %s259
      %v261 = vld [vmem:[%s260] sm:$0x1]
      %262 = vset.pattern.permute.xlu0 5
      %263 = vperm.xlu0 %262, %v206
      %v264 = vpop.permute.xlu0 %263
      %v266 = vmul.f32 %v264, %v261
      %v267 = vadd.f32 %v257, %v266
      %s268 = sadd.s32 %s27, 22
      %s269 = sld [smem:[#allocation3 + %s268]]
      %s270 = scalar_lea.vmem %s2, %s269
      %v271 = vld [vmem:[%s270] sm:$0x1]
      %272 = vset.pattern.permute.xlu0 6
      %273 = vperm.xlu0 %272, %v206
      %v274 = vpop.permute.xlu0 %273
      %v276 = vmul.f32 %v274, %v271
      %v277 = vadd.f32 %v267, %v276
      %s278 = sadd.s32 %s27, 23
      %s279 = sld [smem:[#allocation3 + %s278]]
      %s280 = scalar_lea.vmem %s2, %s279
      %v281 = vld [vmem:[%s280] sm:$0x1]
      %282 = vset.pattern.permute.xlu0 7
      %283 = vperm.xlu0 %282, %v206
      %v284 = vpop.permute.xlu0 %283
      %v286 = vmul.f32 %v284, %v281
      %v287 = vadd.f32 %v277, %v286
      %289 = vrot.lane.b32.xlu0 %v287, 16
      %v290 = vpop.permute.xlu0 %289
      %vm292 = vcmask 188544
      %293 = vst.msk [vmem:[%s111] sm:$0x1] %vm292, %v290
      %s294 = sadd.s32 %s28, 3
      %s295 = scalar_lea.vmem %s1, %s294
      %v296 = vld [vmem:[%s295] sm:$0x1]
      %s297 = sadd.s32 %s27, 24
      %s298 = sld [smem:[#allocation3 + %s297]]
      %s299 = scalar_lea.vmem %s2, %s298
      %v300 = vld [vmem:[%s299] sm:$0x1]
      %302 = vset.pattern.permute.xlu0 0
      %303 = vperm.xlu0 %302, %v296
      %v304 = vpop.permute.xlu0 %303
      %v306 = vmul.f32 %v304, %v300
      %v307 = vadd.f32 %v306, 0.0
      %s308 = sadd.s32 %s27, 25
      %s309 = sld [smem:[#allocation3 + %s308]]
      %s310 = scalar_lea.vmem %s2, %s309
      %v311 = vld [vmem:[%s310] sm:$0x1]
      %312 = vset.pattern.permute.xlu0 1
      %313 = vperm.xlu0 %312, %v296
      %v314 = vpop.permute.xlu0 %313
      %v316 = vmul.f32 %v314, %v311
      %v317 = vadd.f32 %v307, %v316
      %s318 = sadd.s32 %s27, 26
      %s319 = sld [smem:[#allocation3 + %s318]]
      %s320 = scalar_lea.vmem %s2, %s319
      %v321 = vld [vmem:[%s320] sm:$0x1]
      %322 = vset.pattern.permute.xlu0 2
      %323 = vperm.xlu0 %322, %v296
      %v324 = vpop.permute.xlu0 %323
      %v326 = vmul.f32 %v324, %v321
      %v327 = vadd.f32 %v317, %v326
      %s328 = sadd.s32 %s27, 27
      %s329 = sld [smem:[#allocation3 + %s328]]
      %s330 = scalar_lea.vmem %s2, %s329
      %v331 = vld [vmem:[%s330] sm:$0x1]
      %332 = vset.pattern.permute.xlu0 3
      %333 = vperm.xlu0 %332, %v296
      %v334 = vpop.permute.xlu0 %333
      %v336 = vmul.f32 %v334, %v331
      %v337 = vadd.f32 %v327, %v336
      %s338 = sadd.s32 %s27, 28
      %s339 = sld [smem:[#allocation3 + %s338]]
      %s340 = scalar_lea.vmem %s2, %s339
      %v341 = vld [vmem:[%s340] sm:$0x1]
      %342 = vset.pattern.permute.xlu0 4
      %343 = vperm.xlu0 %342, %v296
      %v344 = vpop.permute.xlu0 %343
      %v346 = vmul.f32 %v344, %v341
      %v347 = vadd.f32 %v337, %v346
      %s348 = sadd.s32 %s27, 29
      %s349 = sld [smem:[#allocation3 + %s348]]
      %s350 = scalar_lea.vmem %s2, %s349
      %v351 = vld [vmem:[%s350] sm:$0x1]
      %352 = vset.pattern.permute.xlu0 5
      %353 = vperm.xlu0 %352, %v296
      %v354 = vpop.permute.xlu0 %353
      %v356 = vmul.f32 %v354, %v351
      %v357 = vadd.f32 %v347, %v356
      %s358 = sadd.s32 %s27, 30
      %s359 = sld [smem:[#allocation3 + %s358]]
      %s360 = scalar_lea.vmem %s2, %s359
      %v361 = vld [vmem:[%s360] sm:$0x1]
      %362 = vset.pattern.permute.xlu0 6
      %363 = vperm.xlu0 %362, %v296
      %v364 = vpop.permute.xlu0 %363
      %v366 = vmul.f32 %v364, %v361
      %v367 = vadd.f32 %v357, %v366
      %s368 = sadd.s32 %s27, 31
      %s369 = sld [smem:[#allocation3 + %s368]]
      %s370 = scalar_lea.vmem %s2, %s369
      %v371 = vld [vmem:[%s370] sm:$0x1]
      %372 = vset.pattern.permute.xlu0 7
      %373 = vperm.xlu0 %372, %v296
      %v374 = vpop.permute.xlu0 %373
      %v376 = vmul.f32 %v374, %v371
      %v377 = vadd.f32 %v367, %v376
      %379 = vrot.lane.b32.xlu0 %v377, 24
      %v380 = vpop.permute.xlu0 %379
      %vm382 = vcmask 254144
      %383 = vst.msk [vmem:[%s111] sm:$0x1] %vm382, %v380
      %s384 = sadd.s32 %s28, 4
      %s385 = scalar_lea.vmem %s1, %s384
      %v386 = vld [vmem:[%s385] sm:$0x1]
      %s387 = sadd.s32 %s27, 32
      %s388 = sld [smem:[#allocation3 + %s387]]
      %s389 = scalar_lea.vmem %s2, %s388
      %v390 = vld [vmem:[%s389] sm:$0x1]
      %392 = vset.pattern.permute.xlu0 0
      %393 = vperm.xlu0 %392, %v386
      %v394 = vpop.permute.xlu0 %393
      %v396 = vmul.f32 %v394, %v390
      %v397 = vadd.f32 %v396, 0.0
      %s398 = sadd.s32 %s27, 33
      %s399 = sld [smem:[#allocation3 + %s398]]
      %s400 = scalar_lea.vmem %s2, %s399
      %v401 = vld [vmem:[%s400] sm:$0x1]
      %402 = vset.pattern.permute.xlu0 1
      %403 = vperm.xlu0 %402, %v386
      %v404 = vpop.permute.xlu0 %403
      %v406 = vmul.f32 %v404, %v401
      %v407 = vadd.f32 %v397, %v406
      %s408 = sadd.s32 %s27, 34
      %s409 = sld [smem:[#allocation3 + %s408]]
      %s410 = scalar_lea.vmem %s2, %s409
      %v411 = vld [vmem:[%s410] sm:$0x1]
      %412 = vset.pattern.permute.xlu0 2
      %413 = vperm.xlu0 %412, %v386
      %v414 = vpop.permute.xlu0 %413
      %v416 = vmul.f32 %v414, %v411
      %v417 = vadd.f32 %v407, %v416
      %s418 = sadd.s32 %s27, 35
      %s419 = sld [smem:[#allocation3 + %s418]]
      %s420 = scalar_lea.vmem %s2, %s419
      %v421 = vld [vmem:[%s420] sm:$0x1]
      %422 = vset.pattern.permute.xlu0 3
      %423 = vperm.xlu0 %422, %v386
      %v424 = vpop.permute.xlu0 %423
      %v426 = vmul.f32 %v424, %v421
      %v427 = vadd.f32 %v417, %v426
      %s428 = sadd.s32 %s27, 36
      %s429 = sld [smem:[#allocation3 + %s428]]
      %s430 = scalar_lea.vmem %s2, %s429
      %v431 = vld [vmem:[%s430] sm:$0x1]
      %432 = vset.pattern.permute.xlu0 4
      %433 = vperm.xlu0 %432, %v386
      %v434 = vpop.permute.xlu0 %433
      %v436 = vmul.f32 %v434, %v431
      %v437 = vadd.f32 %v427, %v436
      %s438 = sadd.s32 %s27, 37
      %s439 = sld [smem:[#allocation3 + %s438]]
      %s440 = scalar_lea.vmem %s2, %s439
      %v441 = vld [vmem:[%s440] sm:$0x1]
      %442 = vset.pattern.permute.xlu0 5
      %443 = vperm.xlu0 %442, %v386
      %v444 = vpop.permute.xlu0 %443
      %v446 = vmul.f32 %v444, %v441
      %v447 = vadd.f32 %v437, %v446
      %s448 = sadd.s32 %s27, 38
      %s449 = sld [smem:[#allocation3 + %s448]]
      %s450 = scalar_lea.vmem %s2, %s449
      %v451 = vld [vmem:[%s450] sm:$0x1]
      %452 = vset.pattern.permute.xlu0 6
      %453 = vperm.xlu0 %452, %v386
      %v454 = vpop.permute.xlu0 %453
      %v456 = vmul.f32 %v454, %v451
      %v457 = vadd.f32 %v447, %v456
      %s458 = sadd.s32 %s27, 39
      %s459 = sld [smem:[#allocation3 + %s458]]
      %s460 = scalar_lea.vmem %s2, %s459
      %v461 = vld [vmem:[%s460] sm:$0x1]
      %462 = vset.pattern.permute.xlu0 7
      %463 = vperm.xlu0 %462, %v386
      %v464 = vpop.permute.xlu0 %463
      %v466 = vmul.f32 %v464, %v461
      %v467 = vadd.f32 %v457, %v466
      %469 = vrot.lane.b32.xlu0 %v467, 32
      %v470 = vpop.permute.xlu0 %469
      %vm472 = vcmask 319744
      %473 = vst.msk [vmem:[%s111] sm:$0x1] %vm472, %v470
      %s474 = sadd.s32 %s28, 5
      %s475 = scalar_lea.vmem %s1, %s474
      %v476 = vld [vmem:[%s475] sm:$0x1]
      %s477 = sadd.s32 %s27, 40
      %s478 = sld [smem:[#allocation3 + %s477]]
      %s479 = scalar_lea.vmem %s2, %s478
      %v480 = vld [vmem:[%s479] sm:$0x1]
      %482 = vset.pattern.permute.xlu0 0
      %483 = vperm.xlu0 %482, %v476
      %v484 = vpop.permute.xlu0 %483
      %v486 = vmul.f32 %v484, %v480
      %v487 = vadd.f32 %v486, 0.0
      %s488 = sadd.s32 %s27, 41
      %s489 = sld [smem:[#allocation3 + %s488]]
      %s490 = scalar_lea.vmem %s2, %s489
      %v491 = vld [vmem:[%s490] sm:$0x1]
      %492 = vset.pattern.permute.xlu0 1
      %493 = vperm.xlu0 %492, %v476
      %v494 = vpop.permute.xlu0 %493
      %v496 = vmul.f32 %v494, %v491
      %v497 = vadd.f32 %v487, %v496
      %s498 = sadd.s32 %s27, 42
      %s499 = sld [smem:[#allocation3 + %s498]]
      %s500 = scalar_lea.vmem %s2, %s499
      %v501 = vld [vmem:[%s500] sm:$0x1]
      %502 = vset.pattern.permute.xlu0 2
      %503 = vperm.xlu0 %502, %v476
      %v504 = vpop.permute.xlu0 %503
      %v506 = vmul.f32 %v504, %v501
      %v507 = vadd.f32 %v497, %v506
      %s508 = sadd.s32 %s27, 43
      %s509 = sld [smem:[#allocation3 + %s508]]
      %s510 = scalar_lea.vmem %s2, %s509
      %v511 = vld [vmem:[%s510] sm:$0x1]
      %512 = vset.pattern.permute.xlu0 3
      %513 = vperm.xlu0 %512, %v476
      %v514 = vpop.permute.xlu0 %513
      %v516 = vmul.f32 %v514, %v511
      %v517 = vadd.f32 %v507, %v516
      %s518 = sadd.s32 %s27, 44
      %s519 = sld [smem:[#allocation3 + %s518]]
      %s520 = scalar_lea.vmem %s2, %s519
      %v521 = vld [vmem:[%s520] sm:$0x1]
      %522 = vset.pattern.permute.xlu0 4
      %523 = vperm.xlu0 %522, %v476
      %v524 = vpop.permute.xlu0 %523
      %v526 = vmul.f32 %v524, %v521
      %v527 = vadd.f32 %v517, %v526
      %s528 = sadd.s32 %s27, 45
      %s529 = sld [smem:[#allocation3 + %s528]]
      %s530 = scalar_lea.vmem %s2, %s529
      %v531 = vld [vmem:[%s530] sm:$0x1]
      %532 = vset.pattern.permute.xlu0 5
      %533 = vperm.xlu0 %532, %v476
      %v534 = vpop.permute.xlu0 %533
      %v536 = vmul.f32 %v534, %v531
      %v537 = vadd.f32 %v527, %v536
      %s538 = sadd.s32 %s27, 46
      %s539 = sld [smem:[#allocation3 + %s538]]
      %s540 = scalar_lea.vmem %s2, %s539
      %v541 = vld [vmem:[%s540] sm:$0x1]
      %542 = vset.pattern.permute.xlu0 6
      %543 = vperm.xlu0 %542, %v476
      %v544 = vpop.permute.xlu0 %543
      %v546 = vmul.f32 %v544, %v541
      %v547 = vadd.f32 %v537, %v546
      %s548 = sadd.s32 %s27, 47
      %s549 = sld [smem:[#allocation3 + %s548]]
      %s550 = scalar_lea.vmem %s2, %s549
      %v551 = vld [vmem:[%s550] sm:$0x1]
      %552 = vset.pattern.permute.xlu0 7
      %553 = vperm.xlu0 %552, %v476
      %v554 = vpop.permute.xlu0 %553
      %v556 = vmul.f32 %v554, %v551
      %v557 = vadd.f32 %v547, %v556
      %559 = vrot.lane.b32.xlu0 %v557, 40
      %v560 = vpop.permute.xlu0 %559
      %vm562 = vcmask 385344
      %563 = vst.msk [vmem:[%s111] sm:$0x1] %vm562, %v560
      %s564 = sadd.s32 %s28, 6
      %s565 = scalar_lea.vmem %s1, %s564
      %v566 = vld [vmem:[%s565] sm:$0x1]
      %s567 = sadd.s32 %s27, 48
      %s568 = sld [smem:[#allocation3 + %s567]]
      %s569 = scalar_lea.vmem %s2, %s568
      %v570 = vld [vmem:[%s569] sm:$0x1]
      %572 = vset.pattern.permute.xlu0 0
      %573 = vperm.xlu0 %572, %v566
      %v574 = vpop.permute.xlu0 %573
      %v576 = vmul.f32 %v574, %v570
      %v577 = vadd.f32 %v576, 0.0
      %s578 = sadd.s32 %s27, 49
      %s579 = sld [smem:[#allocation3 + %s578]]
      %s580 = scalar_lea.vmem %s2, %s579
      %v581 = vld [vmem:[%s580] sm:$0x1]
      %582 = vset.pattern.permute.xlu0 1
      %583 = vperm.xlu0 %582, %v566
      %v584 = vpop.permute.xlu0 %583
      %v586 = vmul.f32 %v584, %v581
      %v587 = vadd.f32 %v577, %v586
      %s588 = sadd.s32 %s27, 50
      %s589 = sld [smem:[#allocation3 + %s588]]
      %s590 = scalar_lea.vmem %s2, %s589
      %v591 = vld [vmem:[%s590] sm:$0x1]
      %592 = vset.pattern.permute.xlu0 2
      %593 = vperm.xlu0 %592, %v566
      %v594 = vpop.permute.xlu0 %593
      %v596 = vmul.f32 %v594, %v591
      %v597 = vadd.f32 %v587, %v596
      %s598 = sadd.s32 %s27, 51
      %s599 = sld [smem:[#allocation3 + %s598]]
      %s600 = scalar_lea.vmem %s2, %s599
      %v601 = vld [vmem:[%s600] sm:$0x1]
      %602 = vset.pattern.permute.xlu0 3
      %603 = vperm.xlu0 %602, %v566
      %v604 = vpop.permute.xlu0 %603
      %v606 = vmul.f32 %v604, %v601
      %v607 = vadd.f32 %v597, %v606
      %s608 = sadd.s32 %s27, 52
      %s609 = sld [smem:[#allocation3 + %s608]]
      %s610 = scalar_lea.vmem %s2, %s609
      %v611 = vld [vmem:[%s610] sm:$0x1]
      %612 = vset.pattern.permute.xlu0 4
      %613 = vperm.xlu0 %612, %v566
      %v614 = vpop.permute.xlu0 %613
      %v616 = vmul.f32 %v614, %v611
      %v617 = vadd.f32 %v607, %v616
      %s618 = sadd.s32 %s27, 53
      %s619 = sld [smem:[#allocation3 + %s618]]
      %s620 = scalar_lea.vmem %s2, %s619
      %v621 = vld [vmem:[%s620] sm:$0x1]
      %622 = vset.pattern.permute.xlu0 5
      %623 = vperm.xlu0 %622, %v566
      %v624 = vpop.permute.xlu0 %623
      %v626 = vmul.f32 %v624, %v621
      %v627 = vadd.f32 %v617, %v626
      %s628 = sadd.s32 %s27, 54
      %s629 = sld [smem:[#allocation3 + %s628]]
      %s630 = scalar_lea.vmem %s2, %s629
      %v631 = vld [vmem:[%s630] sm:$0x1]
      %632 = vset.pattern.permute.xlu0 6
      %633 = vperm.xlu0 %632, %v566
      %v634 = vpop.permute.xlu0 %633
      %v636 = vmul.f32 %v634, %v631
      %v637 = vadd.f32 %v627, %v636
      %s638 = sadd.s32 %s27, 55
      %s639 = sld [smem:[#allocation3 + %s638]]
      %s640 = scalar_lea.vmem %s2, %s639
      %v641 = vld [vmem:[%s640] sm:$0x1]
      %642 = vset.pattern.permute.xlu0 7
      %643 = vperm.xlu0 %642, %v566
      %v644 = vpop.permute.xlu0 %643
      %v646 = vmul.f32 %v644, %v641
      %v647 = vadd.f32 %v637, %v646
      %649 = vrot.lane.b32.xlu0 %v647, 48
      %v650 = vpop.permute.xlu0 %649
      %vm652 = vcmask 450944
      %653 = vst.msk [vmem:[%s111] sm:$0x1] %vm652, %v650
      %s654 = sadd.s32 %s28, 7
      %s655 = scalar_lea.vmem %s1, %s654
      %v656 = vld [vmem:[%s655] sm:$0x1]
      %s657 = sadd.s32 %s27, 56
      %s658 = sld [smem:[#allocation3 + %s657]]
      %s659 = scalar_lea.vmem %s2, %s658
      %v660 = vld [vmem:[%s659] sm:$0x1]
      %662 = vset.pattern.permute.xlu0 0
      %663 = vperm.xlu0 %662, %v656
      %v664 = vpop.permute.xlu0 %663
      %v666 = vmul.f32 %v664, %v660
      %v667 = vadd.f32 %v666, 0.0
      %s668 = sadd.s32 %s27, 57
      %s669 = sld [smem:[#allocation3 + %s668]]
      %s670 = scalar_lea.vmem %s2, %s669
      %v671 = vld [vmem:[%s670] sm:$0x1]
      %672 = vset.pattern.permute.xlu0 1
      %673 = vperm.xlu0 %672, %v656
      %v674 = vpop.permute.xlu0 %673
      %v676 = vmul.f32 %v674, %v671
      %v677 = vadd.f32 %v667, %v676
      %s678 = sadd.s32 %s27, 58
      %s679 = sld [smem:[#allocation3 + %s678]]
      %s680 = scalar_lea.vmem %s2, %s679
      %v681 = vld [vmem:[%s680] sm:$0x1]
      %682 = vset.pattern.permute.xlu0 2
      %683 = vperm.xlu0 %682, %v656
      %v684 = vpop.permute.xlu0 %683
      %v686 = vmul.f32 %v684, %v681
      %v687 = vadd.f32 %v677, %v686
      %s688 = sadd.s32 %s27, 59
      %s689 = sld [smem:[#allocation3 + %s688]]
      %s690 = scalar_lea.vmem %s2, %s689
      %v691 = vld [vmem:[%s690] sm:$0x1]
      %692 = vset.pattern.permute.xlu0 3
      %693 = vperm.xlu0 %692, %v656
      %v694 = vpop.permute.xlu0 %693
      %v696 = vmul.f32 %v694, %v691
      %v697 = vadd.f32 %v687, %v696
      %s698 = sadd.s32 %s27, 60
      %s699 = sld [smem:[#allocation3 + %s698]]
      %s700 = scalar_lea.vmem %s2, %s699
      %v701 = vld [vmem:[%s700] sm:$0x1]
      %702 = vset.pattern.permute.xlu0 4
      %703 = vperm.xlu0 %702, %v656
      %v704 = vpop.permute.xlu0 %703
      %v706 = vmul.f32 %v704, %v701
      %v707 = vadd.f32 %v697, %v706
      %s708 = sadd.s32 %s27, 61
      %s709 = sld [smem:[#allocation3 + %s708]]
      %s710 = scalar_lea.vmem %s2, %s709
      %v711 = vld [vmem:[%s710] sm:$0x1]
      %712 = vset.pattern.permute.xlu0 5
      %713 = vperm.xlu0 %712, %v656
      %v714 = vpop.permute.xlu0 %713
      %v716 = vmul.f32 %v714, %v711
      %v717 = vadd.f32 %v707, %v716
      %s718 = sadd.s32 %s27, 62
      %s719 = sld [smem:[#allocation3 + %s718]]
      %s720 = scalar_lea.vmem %s2, %s719
      %v721 = vld [vmem:[%s720] sm:$0x1]
      %722 = vset.pattern.permute.xlu0 6
      %723 = vperm.xlu0 %722, %v656
      %v724 = vpop.permute.xlu0 %723
      %v726 = vmul.f32 %v724, %v721
      %v727 = vadd.f32 %v717, %v726
      %s728 = sadd.s32 %s27, 63
      %s729 = sld [smem:[#allocation3 + %s728]]
      %s730 = scalar_lea.vmem %s2, %s729
      %v731 = vld [vmem:[%s730] sm:$0x1]
      %732 = vset.pattern.permute.xlu0 7
      %733 = vperm.xlu0 %732, %v656
      %v734 = vpop.permute.xlu0 %733
      %v736 = vmul.f32 %v734, %v731
      %v737 = vadd.f32 %v727, %v736
      %739 = vrot.lane.b32.xlu0 %v737, 56
      %v740 = vpop.permute.xlu0 %739
      %vm742 = vcmask 516544
      %743 = vst.msk [vmem:[%s111] sm:$0x1] %vm742, %v740
      %s744 = sadd.s32 %s28, 8
      %s745 = scalar_lea.vmem %s1, %s744
      %v746 = vld [vmem:[%s745] sm:$0x1]
      %s747 = sadd.s32 %s27, 64
      %s748 = sld [smem:[#allocation3 + %s747]]
      %s749 = scalar_lea.vmem %s2, %s748
      %v750 = vld [vmem:[%s749] sm:$0x1]
      %752 = vset.pattern.permute.xlu0 0
      %753 = vperm.xlu0 %752, %v746
      %v754 = vpop.permute.xlu0 %753
      %v756 = vmul.f32 %v754, %v750
      %v757 = vadd.f32 %v756, 0.0
      %s758 = sadd.s32 %s27, 65
      %s759 = sld [smem:[#allocation3 + %s758]]
      %s760 = scalar_lea.vmem %s2, %s759
      %v761 = vld [vmem:[%s760] sm:$0x1]
      %762 = vset.pattern.permute.xlu0 1
      %763 = vperm.xlu0 %762, %v746
      %v764 = vpop.permute.xlu0 %763
      %v766 = vmul.f32 %v764, %v761
      %v767 = vadd.f32 %v757, %v766
      %s768 = sadd.s32 %s27, 66
      %s769 = sld [smem:[#allocation3 + %s768]]
      %s770 = scalar_lea.vmem %s2, %s769
      %v771 = vld [vmem:[%s770] sm:$0x1]
      %772 = vset.pattern.permute.xlu0 2
      %773 = vperm.xlu0 %772, %v746
      %v774 = vpop.permute.xlu0 %773
      %v776 = vmul.f32 %v774, %v771
      %v777 = vadd.f32 %v767, %v776
      %s778 = sadd.s32 %s27, 67
      %s779 = sld [smem:[#allocation3 + %s778]]
      %s780 = scalar_lea.vmem %s2, %s779
      %v781 = vld [vmem:[%s780] sm:$0x1]
      %782 = vset.pattern.permute.xlu0 3
      %783 = vperm.xlu0 %782, %v746
      %v784 = vpop.permute.xlu0 %783
      %v786 = vmul.f32 %v784, %v781
      %v787 = vadd.f32 %v777, %v786
      %s788 = sadd.s32 %s27, 68
      %s789 = sld [smem:[#allocation3 + %s788]]
      %s790 = scalar_lea.vmem %s2, %s789
      %v791 = vld [vmem:[%s790] sm:$0x1]
      %792 = vset.pattern.permute.xlu0 4
      %793 = vperm.xlu0 %792, %v746
      %v794 = vpop.permute.xlu0 %793
      %v796 = vmul.f32 %v794, %v791
      %v797 = vadd.f32 %v787, %v796
      %s798 = sadd.s32 %s27, 69
      %s799 = sld [smem:[#allocation3 + %s798]]
      %s800 = scalar_lea.vmem %s2, %s799
      %v801 = vld [vmem:[%s800] sm:$0x1]
      %802 = vset.pattern.permute.xlu0 5
      %803 = vperm.xlu0 %802, %v746
      %v804 = vpop.permute.xlu0 %803
      %v806 = vmul.f32 %v804, %v801
      %v807 = vadd.f32 %v797, %v806
      %s808 = sadd.s32 %s27, 70
      %s809 = sld [smem:[#allocation3 + %s808]]
      %s810 = scalar_lea.vmem %s2, %s809
      %v811 = vld [vmem:[%s810] sm:$0x1]
      %812 = vset.pattern.permute.xlu0 6
      %813 = vperm.xlu0 %812, %v746
      %v814 = vpop.permute.xlu0 %813
      %v816 = vmul.f32 %v814, %v811
      %v817 = vadd.f32 %v807, %v816
      %s818 = sadd.s32 %s27, 71
      %s819 = sld [smem:[#allocation3 + %s818]]
      %s820 = scalar_lea.vmem %s2, %s819
      %v821 = vld [vmem:[%s820] sm:$0x1]
      %822 = vset.pattern.permute.xlu0 7
      %823 = vperm.xlu0 %822, %v746
      %v824 = vpop.permute.xlu0 %823
      %v826 = vmul.f32 %v824, %v821
      %v827 = vadd.f32 %v817, %v826
      %829 = vrot.lane.b32.xlu0 %v827, 64
      %v830 = vpop.permute.xlu0 %829
      %vm832 = vcmask 582144
      %833 = vst.msk [vmem:[%s111] sm:$0x1] %vm832, %v830
      %s834 = sadd.s32 %s28, 9
      %s835 = scalar_lea.vmem %s1, %s834
      %v836 = vld [vmem:[%s835] sm:$0x1]
      %s837 = sadd.s32 %s27, 72
      %s838 = sld [smem:[#allocation3 + %s837]]
      %s839 = scalar_lea.vmem %s2, %s838
      %v840 = vld [vmem:[%s839] sm:$0x1]
      %842 = vset.pattern.permute.xlu0 0
      %843 = vperm.xlu0 %842, %v836
      %v844 = vpop.permute.xlu0 %843
      %v846 = vmul.f32 %v844, %v840
      %v847 = vadd.f32 %v846, 0.0
      %s848 = sadd.s32 %s27, 73
      %s849 = sld [smem:[#allocation3 + %s848]]
      %s850 = scalar_lea.vmem %s2, %s849
      %v851 = vld [vmem:[%s850] sm:$0x1]
      %852 = vset.pattern.permute.xlu0 1
      %853 = vperm.xlu0 %852, %v836
      %v854 = vpop.permute.xlu0 %853
      %v856 = vmul.f32 %v854, %v851
      %v857 = vadd.f32 %v847, %v856
      %s858 = sadd.s32 %s27, 74
      %s859 = sld [smem:[#allocation3 + %s858]]
      %s860 = scalar_lea.vmem %s2, %s859
      %v861 = vld [vmem:[%s860] sm:$0x1]
      %862 = vset.pattern.permute.xlu0 2
      %863 = vperm.xlu0 %862, %v836
      %v864 = vpop.permute.xlu0 %863
      %v866 = vmul.f32 %v864, %v861
      %v867 = vadd.f32 %v857, %v866
      %s868 = sadd.s32 %s27, 75
      %s869 = sld [smem:[#allocation3 + %s868]]
      %s870 = scalar_lea.vmem %s2, %s869
      %v871 = vld [vmem:[%s870] sm:$0x1]
      %872 = vset.pattern.permute.xlu0 3
      %873 = vperm.xlu0 %872, %v836
      %v874 = vpop.permute.xlu0 %873
      %v876 = vmul.f32 %v874, %v871
      %v877 = vadd.f32 %v867, %v876
      %s878 = sadd.s32 %s27, 76
      %s879 = sld [smem:[#allocation3 + %s878]]
      %s880 = scalar_lea.vmem %s2, %s879
      %v881 = vld [vmem:[%s880] sm:$0x1]
      %882 = vset.pattern.permute.xlu0 4
      %883 = vperm.xlu0 %882, %v836
      %v884 = vpop.permute.xlu0 %883
      %v886 = vmul.f32 %v884, %v881
      %v887 = vadd.f32 %v877, %v886
      %s888 = sadd.s32 %s27, 77
      %s889 = sld [smem:[#allocation3 + %s888]]
      %s890 = scalar_lea.vmem %s2, %s889
      %v891 = vld [vmem:[%s890] sm:$0x1]
      %892 = vset.pattern.permute.xlu0 5
      %893 = vperm.xlu0 %892, %v836
      %v894 = vpop.permute.xlu0 %893
      %v896 = vmul.f32 %v894, %v891
      %v897 = vadd.f32 %v887, %v896
      %s898 = sadd.s32 %s27, 78
      %s899 = sld [smem:[#allocation3 + %s898]]
      %s900 = scalar_lea.vmem %s2, %s899
      %v901 = vld [vmem:[%s900] sm:$0x1]
      %902 = vset.pattern.permute.xlu0 6
      %903 = vperm.xlu0 %902, %v836
      %v904 = vpop.permute.xlu0 %903
      %v906 = vmul.f32 %v904, %v901
      %v907 = vadd.f32 %v897, %v906
      %s908 = sadd.s32 %s27, 79
      %s909 = sld [smem:[#allocation3 + %s908]]
      %s910 = scalar_lea.vmem %s2, %s909
      %v911 = vld [vmem:[%s910] sm:$0x1]
      %912 = vset.pattern.permute.xlu0 7
      %913 = vperm.xlu0 %912, %v836
      %v914 = vpop.permute.xlu0 %913
      %v916 = vmul.f32 %v914, %v911
      %v917 = vadd.f32 %v907, %v916
      %919 = vrot.lane.b32.xlu0 %v917, 72
      %v920 = vpop.permute.xlu0 %919
      %vm922 = vcmask 647744
      %923 = vst.msk [vmem:[%s111] sm:$0x1] %vm922, %v920
      %s924 = sadd.s32 %s28, 10
      %s925 = scalar_lea.vmem %s1, %s924
      %v926 = vld [vmem:[%s925] sm:$0x1]
      %s927 = sadd.s32 %s27, 80
      %s928 = sld [smem:[#allocation3 + %s927]]
      %s929 = scalar_lea.vmem %s2, %s928
      %v930 = vld [vmem:[%s929] sm:$0x1]
      %932 = vset.pattern.permute.xlu0 0
      %933 = vperm.xlu0 %932, %v926
      %v934 = vpop.permute.xlu0 %933
      %v936 = vmul.f32 %v934, %v930
      %v937 = vadd.f32 %v936, 0.0
      %s938 = sadd.s32 %s27, 81
      %s939 = sld [smem:[#allocation3 + %s938]]
      %s940 = scalar_lea.vmem %s2, %s939
      %v941 = vld [vmem:[%s940] sm:$0x1]
      %942 = vset.pattern.permute.xlu0 1
      %943 = vperm.xlu0 %942, %v926
      %v944 = vpop.permute.xlu0 %943
      %v946 = vmul.f32 %v944, %v941
      %v947 = vadd.f32 %v937, %v946
      %s948 = sadd.s32 %s27, 82
      %s949 = sld [smem:[#allocation3 + %s948]]
      %s950 = scalar_lea.vmem %s2, %s949
      %v951 = vld [vmem:[%s950] sm:$0x1]
      %952 = vset.pattern.permute.xlu0 2
      %953 = vperm.xlu0 %952, %v926
      %v954 = vpop.permute.xlu0 %953
      %v956 = vmul.f32 %v954, %v951
      %v957 = vadd.f32 %v947, %v956
      %s958 = sadd.s32 %s27, 83
      %s959 = sld [smem:[#allocation3 + %s958]]
      %s960 = scalar_lea.vmem %s2, %s959
      %v961 = vld [vmem:[%s960] sm:$0x1]
      %962 = vset.pattern.permute.xlu0 3
      %963 = vperm.xlu0 %962, %v926
      %v964 = vpop.permute.xlu0 %963
      %v966 = vmul.f32 %v964, %v961
      %v967 = vadd.f32 %v957, %v966
      %s968 = sadd.s32 %s27, 84
      %s969 = sld [smem:[#allocation3 + %s968]]
      %s970 = scalar_lea.vmem %s2, %s969
      %v971 = vld [vmem:[%s970] sm:$0x1]
      %972 = vset.pattern.permute.xlu0 4
      %973 = vperm.xlu0 %972, %v926
      %v974 = vpop.permute.xlu0 %973
      %v976 = vmul.f32 %v974, %v971
      %v977 = vadd.f32 %v967, %v976
      %s978 = sadd.s32 %s27, 85
      %s979 = sld [smem:[#allocation3 + %s978]]
      %s980 = scalar_lea.vmem %s2, %s979
      %v981 = vld [vmem:[%s980] sm:$0x1]
      %982 = vset.pattern.permute.xlu0 5
      %983 = vperm.xlu0 %982, %v926
      %v984 = vpop.permute.xlu0 %983
      %v986 = vmul.f32 %v984, %v981
      %v987 = vadd.f32 %v977, %v986
      %s988 = sadd.s32 %s27, 86
      %s989 = sld [smem:[#allocation3 + %s988]]
      %s990 = scalar_lea.vmem %s2, %s989
      %v991 = vld [vmem:[%s990] sm:$0x1]
      %992 = vset.pattern.permute.xlu0 6
      %993 = vperm.xlu0 %992, %v926
      %v994 = vpop.permute.xlu0 %993
      %v996 = vmul.f32 %v994, %v991
      %v997 = vadd.f32 %v987, %v996
      %s998 = sadd.s32 %s27, 87
      %s999 = sld [smem:[#allocation3 + %s998]]
      %s1000 = scalar_lea.vmem %s2, %s999
      %v1001 = vld [vmem:[%s1000] sm:$0x1]
      %1002 = vset.pattern.permute.xlu0 7
      %1003 = vperm.xlu0 %1002, %v926
      %v1004 = vpop.permute.xlu0 %1003
      %v1006 = vmul.f32 %v1004, %v1001
      %v1007 = vadd.f32 %v997, %v1006
      %1009 = vrot.lane.b32.xlu0 %v1007, 80
      %v1010 = vpop.permute.xlu0 %1009
      %vm1012 = vcmask 713344
      %1013 = vst.msk [vmem:[%s111] sm:$0x1] %vm1012, %v1010
      %s1014 = sadd.s32 %s28, 11
      %s1015 = scalar_lea.vmem %s1, %s1014
      %v1016 = vld [vmem:[%s1015] sm:$0x1]
      %s1017 = sadd.s32 %s27, 88
      %s1018 = sld [smem:[#allocation3 + %s1017]]
      %s1019 = scalar_lea.vmem %s2, %s1018
      %v1020 = vld [vmem:[%s1019] sm:$0x1]
      %1022 = vset.pattern.permute.xlu0 0
      %1023 = vperm.xlu0 %1022, %v1016
      %v1024 = vpop.permute.xlu0 %1023
      %v1026 = vmul.f32 %v1024, %v1020
      %v1027 = vadd.f32 %v1026, 0.0
      %s1028 = sadd.s32 %s27, 89
      %s1029 = sld [smem:[#allocation3 + %s1028]]
      %s1030 = scalar_lea.vmem %s2, %s1029
      %v1031 = vld [vmem:[%s1030] sm:$0x1]
      %1032 = vset.pattern.permute.xlu0 1
      %1033 = vperm.xlu0 %1032, %v1016
      %v1034 = vpop.permute.xlu0 %1033
      %v1036 = vmul.f32 %v1034, %v1031
      %v1037 = vadd.f32 %v1027, %v1036
      %s1038 = sadd.s32 %s27, 90
      %s1039 = sld [smem:[#allocation3 + %s1038]]
      %s1040 = scalar_lea.vmem %s2, %s1039
      %v1041 = vld [vmem:[%s1040] sm:$0x1]
      %1042 = vset.pattern.permute.xlu0 2
      %1043 = vperm.xlu0 %1042, %v1016
      %v1044 = vpop.permute.xlu0 %1043
      %v1046 = vmul.f32 %v1044, %v1041
      %v1047 = vadd.f32 %v1037, %v1046
      %s1048 = sadd.s32 %s27, 91
      %s1049 = sld [smem:[#allocation3 + %s1048]]
      %s1050 = scalar_lea.vmem %s2, %s1049
      %v1051 = vld [vmem:[%s1050] sm:$0x1]
      %1052 = vset.pattern.permute.xlu0 3
      %1053 = vperm.xlu0 %1052, %v1016
      %v1054 = vpop.permute.xlu0 %1053
      %v1056 = vmul.f32 %v1054, %v1051
      %v1057 = vadd.f32 %v1047, %v1056
      %s1058 = sadd.s32 %s27, 92
      %s1059 = sld [smem:[#allocation3 + %s1058]]
      %s1060 = scalar_lea.vmem %s2, %s1059
      %v1061 = vld [vmem:[%s1060] sm:$0x1]
      %1062 = vset.pattern.permute.xlu0 4
      %1063 = vperm.xlu0 %1062, %v1016
      %v1064 = vpop.permute.xlu0 %1063
      %v1066 = vmul.f32 %v1064, %v1061
      %v1067 = vadd.f32 %v1057, %v1066
      %s1068 = sadd.s32 %s27, 93
      %s1069 = sld [smem:[#allocation3 + %s1068]]
      %s1070 = scalar_lea.vmem %s2, %s1069
      %v1071 = vld [vmem:[%s1070] sm:$0x1]
      %1072 = vset.pattern.permute.xlu0 5
      %1073 = vperm.xlu0 %1072, %v1016
      %v1074 = vpop.permute.xlu0 %1073
      %v1076 = vmul.f32 %v1074, %v1071
      %v1077 = vadd.f32 %v1067, %v1076
      %s1078 = sadd.s32 %s27, 94
      %s1079 = sld [smem:[#allocation3 + %s1078]]
      %s1080 = scalar_lea.vmem %s2, %s1079
      %v1081 = vld [vmem:[%s1080] sm:$0x1]
      %1082 = vset.pattern.permute.xlu0 6
      %1083 = vperm.xlu0 %1082, %v1016
      %v1084 = vpop.permute.xlu0 %1083
      %v1086 = vmul.f32 %v1084, %v1081
      %v1087 = vadd.f32 %v1077, %v1086
      %s1088 = sadd.s32 %s27, 95
      %s1089 = sld [smem:[#allocation3 + %s1088]]
      %s1090 = scalar_lea.vmem %s2, %s1089
      %v1091 = vld [vmem:[%s1090] sm:$0x1]
      %1092 = vset.pattern.permute.xlu0 7
      %1093 = vperm.xlu0 %1092, %v1016
      %v1094 = vpop.permute.xlu0 %1093
      %v1096 = vmul.f32 %v1094, %v1091
      %v1097 = vadd.f32 %v1087, %v1096
      %1099 = vrot.lane.b32.xlu0 %v1097, 88
      %v1100 = vpop.permute.xlu0 %1099
      %vm1102 = vcmask 778944
      %1103 = vst.msk [vmem:[%s111] sm:$0x1] %vm1102, %v1100
      %s1104 = sadd.s32 %s28, 12
      %s1105 = scalar_lea.vmem %s1, %s1104
      %v1106 = vld [vmem:[%s1105] sm:$0x1]
      %s1107 = sadd.s32 %s27, 96
      %s1108 = sld [smem:[#allocation3 + %s1107]]
      %s1109 = scalar_lea.vmem %s2, %s1108
      %v1110 = vld [vmem:[%s1109] sm:$0x1]
      %1112 = vset.pattern.permute.xlu0 0
      %1113 = vperm.xlu0 %1112, %v1106
      %v1114 = vpop.permute.xlu0 %1113
      %v1116 = vmul.f32 %v1114, %v1110
      %v1117 = vadd.f32 %v1116, 0.0
      %s1118 = sadd.s32 %s27, 97
      %s1119 = sld [smem:[#allocation3 + %s1118]]
      %s1120 = scalar_lea.vmem %s2, %s1119
      %v1121 = vld [vmem:[%s1120] sm:$0x1]
      %1122 = vset.pattern.permute.xlu0 1
      %1123 = vperm.xlu0 %1122, %v1106
      %v1124 = vpop.permute.xlu0 %1123
      %v1126 = vmul.f32 %v1124, %v1121
      %v1127 = vadd.f32 %v1117, %v1126
      %s1128 = sadd.s32 %s27, 98
      %s1129 = sld [smem:[#allocation3 + %s1128]]
      %s1130 = scalar_lea.vmem %s2, %s1129
      %v1131 = vld [vmem:[%s1130] sm:$0x1]
      %1132 = vset.pattern.permute.xlu0 2
      %1133 = vperm.xlu0 %1132, %v1106
      %v1134 = vpop.permute.xlu0 %1133
      %v1136 = vmul.f32 %v1134, %v1131
      %v1137 = vadd.f32 %v1127, %v1136
      %s1138 = sadd.s32 %s27, 99
      %s1139 = sld [smem:[#allocation3 + %s1138]]
      %s1140 = scalar_lea.vmem %s2, %s1139
      %v1141 = vld [vmem:[%s1140] sm:$0x1]
      %1142 = vset.pattern.permute.xlu0 3
      %1143 = vperm.xlu0 %1142, %v1106
      %v1144 = vpop.permute.xlu0 %1143
      %v1146 = vmul.f32 %v1144, %v1141
      %v1147 = vadd.f32 %v1137, %v1146
      %s1148 = sadd.s32 %s27, 100
      %s1149 = sld [smem:[#allocation3 + %s1148]]
      %s1150 = scalar_lea.vmem %s2, %s1149
      %v1151 = vld [vmem:[%s1150] sm:$0x1]
      %1152 = vset.pattern.permute.xlu0 4
      %1153 = vperm.xlu0 %1152, %v1106
      %v1154 = vpop.permute.xlu0 %1153
      %v1156 = vmul.f32 %v1154, %v1151
      %v1157 = vadd.f32 %v1147, %v1156
      %s1158 = sadd.s32 %s27, 101
      %s1159 = sld [smem:[#allocation3 + %s1158]]
      %s1160 = scalar_lea.vmem %s2, %s1159
      %v1161 = vld [vmem:[%s1160] sm:$0x1]
      %1162 = vset.pattern.permute.xlu0 5
      %1163 = vperm.xlu0 %1162, %v1106
      %v1164 = vpop.permute.xlu0 %1163
      %v1166 = vmul.f32 %v1164, %v1161
      %v1167 = vadd.f32 %v1157, %v1166
      %s1168 = sadd.s32 %s27, 102
      %s1169 = sld [smem:[#allocation3 + %s1168]]
      %s1170 = scalar_lea.vmem %s2, %s1169
      %v1171 = vld [vmem:[%s1170] sm:$0x1]
      %1172 = vset.pattern.permute.xlu0 6
      %1173 = vperm.xlu0 %1172, %v1106
      %v1174 = vpop.permute.xlu0 %1173
      %v1176 = vmul.f32 %v1174, %v1171
      %v1177 = vadd.f32 %v1167, %v1176
      %s1178 = sadd.s32 %s27, 103
      %s1179 = sld [smem:[#allocation3 + %s1178]]
      %s1180 = scalar_lea.vmem %s2, %s1179
      %v1181 = vld [vmem:[%s1180] sm:$0x1]
      %1182 = vset.pattern.permute.xlu0 7
      %1183 = vperm.xlu0 %1182, %v1106
      %v1184 = vpop.permute.xlu0 %1183
      %v1186 = vmul.f32 %v1184, %v1181
      %v1187 = vadd.f32 %v1177, %v1186
      %1189 = vrot.lane.b32.xlu0 %v1187, 96
      %v1190 = vpop.permute.xlu0 %1189
      %vm1192 = vcmask 844544
      %1193 = vst.msk [vmem:[%s111] sm:$0x1] %vm1192, %v1190
      %s1194 = sadd.s32 %s28, 13
      %s1195 = scalar_lea.vmem %s1, %s1194
      %v1196 = vld [vmem:[%s1195] sm:$0x1]
      %s1197 = sadd.s32 %s27, 104
      %s1198 = sld [smem:[#allocation3 + %s1197]]
      %s1199 = scalar_lea.vmem %s2, %s1198
      %v1200 = vld [vmem:[%s1199] sm:$0x1]
      %1202 = vset.pattern.permute.xlu0 0
      %1203 = vperm.xlu0 %1202, %v1196
      %v1204 = vpop.permute.xlu0 %1203
      %v1206 = vmul.f32 %v1204, %v1200
      %v1207 = vadd.f32 %v1206, 0.0
      %s1208 = sadd.s32 %s27, 105
      %s1209 = sld [smem:[#allocation3 + %s1208]]
      %s1210 = scalar_lea.vmem %s2, %s1209
      %v1211 = vld [vmem:[%s1210] sm:$0x1]
      %1212 = vset.pattern.permute.xlu0 1
      %1213 = vperm.xlu0 %1212, %v1196
      %v1214 = vpop.permute.xlu0 %1213
      %v1216 = vmul.f32 %v1214, %v1211
      %v1217 = vadd.f32 %v1207, %v1216
      %s1218 = sadd.s32 %s27, 106
      %s1219 = sld [smem:[#allocation3 + %s1218]]
      %s1220 = scalar_lea.vmem %s2, %s1219
      %v1221 = vld [vmem:[%s1220] sm:$0x1]
      %1222 = vset.pattern.permute.xlu0 2
      %1223 = vperm.xlu0 %1222, %v1196
      %v1224 = vpop.permute.xlu0 %1223
      %v1226 = vmul.f32 %v1224, %v1221
      %v1227 = vadd.f32 %v1217, %v1226
      %s1228 = sadd.s32 %s27, 107
      %s1229 = sld [smem:[#allocation3 + %s1228]]
      %s1230 = scalar_lea.vmem %s2, %s1229
      %v1231 = vld [vmem:[%s1230] sm:$0x1]
      %1232 = vset.pattern.permute.xlu0 3
      %1233 = vperm.xlu0 %1232, %v1196
      %v1234 = vpop.permute.xlu0 %1233
      %v1236 = vmul.f32 %v1234, %v1231
      %v1237 = vadd.f32 %v1227, %v1236
      %s1238 = sadd.s32 %s27, 108
      %s1239 = sld [smem:[#allocation3 + %s1238]]
      %s1240 = scalar_lea.vmem %s2, %s1239
      %v1241 = vld [vmem:[%s1240] sm:$0x1]
      %1242 = vset.pattern.permute.xlu0 4
      %1243 = vperm.xlu0 %1242, %v1196
      %v1244 = vpop.permute.xlu0 %1243
      %v1246 = vmul.f32 %v1244, %v1241
      %v1247 = vadd.f32 %v1237, %v1246
      %s1248 = sadd.s32 %s27, 109
      %s1249 = sld [smem:[#allocation3 + %s1248]]
      %s1250 = scalar_lea.vmem %s2, %s1249
      %v1251 = vld [vmem:[%s1250] sm:$0x1]
      %1252 = vset.pattern.permute.xlu0 5
      %1253 = vperm.xlu0 %1252, %v1196
      %v1254 = vpop.permute.xlu0 %1253
      %v1256 = vmul.f32 %v1254, %v1251
      %v1257 = vadd.f32 %v1247, %v1256
      %s1258 = sadd.s32 %s27, 110
      %s1259 = sld [smem:[#allocation3 + %s1258]]
      %s1260 = scalar_lea.vmem %s2, %s1259
      %v1261 = vld [vmem:[%s1260] sm:$0x1]
      %1262 = vset.pattern.permute.xlu0 6
      %1263 = vperm.xlu0 %1262, %v1196
      %v1264 = vpop.permute.xlu0 %1263
      %v1266 = vmul.f32 %v1264, %v1261
      %v1267 = vadd.f32 %v1257, %v1266
      %s1268 = sadd.s32 %s27, 111
      %s1269 = sld [smem:[#allocation3 + %s1268]]
      %s1270 = scalar_lea.vmem %s2, %s1269
      %v1271 = vld [vmem:[%s1270] sm:$0x1]
      %1272 = vset.pattern.permute.xlu0 7
      %1273 = vperm.xlu0 %1272, %v1196
      %v1274 = vpop.permute.xlu0 %1273
      %v1276 = vmul.f32 %v1274, %v1271
      %v1277 = vadd.f32 %v1267, %v1276
      %1279 = vrot.lane.b32.xlu0 %v1277, 104
      %v1280 = vpop.permute.xlu0 %1279
      %vm1282 = vcmask 910144
      %1283 = vst.msk [vmem:[%s111] sm:$0x1] %vm1282, %v1280
      %s1284 = sadd.s32 %s28, 14
      %s1285 = scalar_lea.vmem %s1, %s1284
      %v1286 = vld [vmem:[%s1285] sm:$0x1]
      %s1287 = sadd.s32 %s27, 112
      %s1288 = sld [smem:[#allocation3 + %s1287]]
      %s1289 = scalar_lea.vmem %s2, %s1288
      %v1290 = vld [vmem:[%s1289] sm:$0x1]
      %1292 = vset.pattern.permute.xlu0 0
      %1293 = vperm.xlu0 %1292, %v1286
      %v1294 = vpop.permute.xlu0 %1293
      %v1296 = vmul.f32 %v1294, %v1290
      %v1297 = vadd.f32 %v1296, 0.0
      %s1298 = sadd.s32 %s27, 113
      %s1299 = sld [smem:[#allocation3 + %s1298]]
      %s1300 = scalar_lea.vmem %s2, %s1299
      %v1301 = vld [vmem:[%s1300] sm:$0x1]
      %1302 = vset.pattern.permute.xlu0 1
      %1303 = vperm.xlu0 %1302, %v1286
      %v1304 = vpop.permute.xlu0 %1303
      %v1306 = vmul.f32 %v1304, %v1301
      %v1307 = vadd.f32 %v1297, %v1306
      %s1308 = sadd.s32 %s27, 114
      %s1309 = sld [smem:[#allocation3 + %s1308]]
      %s1310 = scalar_lea.vmem %s2, %s1309
      %v1311 = vld [vmem:[%s1310] sm:$0x1]
      %1312 = vset.pattern.permute.xlu0 2
      %1313 = vperm.xlu0 %1312, %v1286
      %v1314 = vpop.permute.xlu0 %1313
      %v1316 = vmul.f32 %v1314, %v1311
      %v1317 = vadd.f32 %v1307, %v1316
      %s1318 = sadd.s32 %s27, 115
      %s1319 = sld [smem:[#allocation3 + %s1318]]
      %s1320 = scalar_lea.vmem %s2, %s1319
      %v1321 = vld [vmem:[%s1320] sm:$0x1]
      %1322 = vset.pattern.permute.xlu0 3
      %1323 = vperm.xlu0 %1322, %v1286
      %v1324 = vpop.permute.xlu0 %1323
      %v1326 = vmul.f32 %v1324, %v1321
      %v1327 = vadd.f32 %v1317, %v1326
      %s1328 = sadd.s32 %s27, 116
      %s1329 = sld [smem:[#allocation3 + %s1328]]
      %s1330 = scalar_lea.vmem %s2, %s1329
      %v1331 = vld [vmem:[%s1330] sm:$0x1]
      %1332 = vset.pattern.permute.xlu0 4
      %1333 = vperm.xlu0 %1332, %v1286
      %v1334 = vpop.permute.xlu0 %1333
      %v1336 = vmul.f32 %v1334, %v1331
      %v1337 = vadd.f32 %v1327, %v1336
      %s1338 = sadd.s32 %s27, 117
      %s1339 = sld [smem:[#allocation3 + %s1338]]
      %s1340 = scalar_lea.vmem %s2, %s1339
      %v1341 = vld [vmem:[%s1340] sm:$0x1]
      %1342 = vset.pattern.permute.xlu0 5
      %1343 = vperm.xlu0 %1342, %v1286
      %v1344 = vpop.permute.xlu0 %1343
      %v1346 = vmul.f32 %v1344, %v1341
      %v1347 = vadd.f32 %v1337, %v1346
      %s1348 = sadd.s32 %s27, 118
      %s1349 = sld [smem:[#allocation3 + %s1348]]
      %s1350 = scalar_lea.vmem %s2, %s1349
      %v1351 = vld [vmem:[%s1350] sm:$0x1]
      %1352 = vset.pattern.permute.xlu0 6
      %1353 = vperm.xlu0 %1352, %v1286
      %v1354 = vpop.permute.xlu0 %1353
      %v1356 = vmul.f32 %v1354, %v1351
      %v1357 = vadd.f32 %v1347, %v1356
      %s1358 = sadd.s32 %s27, 119
      %s1359 = sld [smem:[#allocation3 + %s1358]]
      %s1360 = scalar_lea.vmem %s2, %s1359
      %v1361 = vld [vmem:[%s1360] sm:$0x1]
      %1362 = vset.pattern.permute.xlu0 7
      %1363 = vperm.xlu0 %1362, %v1286
      %v1364 = vpop.permute.xlu0 %1363
      %v1366 = vmul.f32 %v1364, %v1361
      %v1367 = vadd.f32 %v1357, %v1366
      %1369 = vrot.lane.b32.xlu0 %v1367, 112
      %v1370 = vpop.permute.xlu0 %1369
      %vm1372 = vcmask 975744
      %1373 = vst.msk [vmem:[%s111] sm:$0x1] %vm1372, %v1370
      %s1374 = sadd.s32 %s28, 15
      %s1375 = scalar_lea.vmem %s1, %s1374
      %v1376 = vld [vmem:[%s1375] sm:$0x1]
      %s1377 = sadd.s32 %s27, 120
      %s1378 = sld [smem:[#allocation3 + %s1377]]
      %s1379 = scalar_lea.vmem %s2, %s1378
      %v1380 = vld [vmem:[%s1379] sm:$0x1]
      %1382 = vset.pattern.permute.xlu0 0
      %1383 = vperm.xlu0 %1382, %v1376
      %v1384 = vpop.permute.xlu0 %1383
      %v1386 = vmul.f32 %v1384, %v1380
      %v1387 = vadd.f32 %v1386, 0.0
      %s1388 = sadd.s32 %s27, 121
      %s1389 = sld [smem:[#allocation3 + %s1388]]
      %s1390 = scalar_lea.vmem %s2, %s1389
      %v1391 = vld [vmem:[%s1390] sm:$0x1]
      %1392 = vset.pattern.permute.xlu0 1
      %1393 = vperm.xlu0 %1392, %v1376
      %v1394 = vpop.permute.xlu0 %1393
      %v1396 = vmul.f32 %v1394, %v1391
      %v1397 = vadd.f32 %v1387, %v1396
      %s1398 = sadd.s32 %s27, 122
      %s1399 = sld [smem:[#allocation3 + %s1398]]
      %s1400 = scalar_lea.vmem %s2, %s1399
      %v1401 = vld [vmem:[%s1400] sm:$0x1]
      %1402 = vset.pattern.permute.xlu0 2
      %1403 = vperm.xlu0 %1402, %v1376
      %v1404 = vpop.permute.xlu0 %1403
      %v1406 = vmul.f32 %v1404, %v1401
      %v1407 = vadd.f32 %v1397, %v1406
      %s1408 = sadd.s32 %s27, 123
      %s1409 = sld [smem:[#allocation3 + %s1408]]
      %s1410 = scalar_lea.vmem %s2, %s1409
      %v1411 = vld [vmem:[%s1410] sm:$0x1]
      %1412 = vset.pattern.permute.xlu0 3
      %1413 = vperm.xlu0 %1412, %v1376
      %v1414 = vpop.permute.xlu0 %1413
      %v1416 = vmul.f32 %v1414, %v1411
      %v1417 = vadd.f32 %v1407, %v1416
      %s1418 = sadd.s32 %s27, 124
      %s1419 = sld [smem:[#allocation3 + %s1418]]
      %s1420 = scalar_lea.vmem %s2, %s1419
      %v1421 = vld [vmem:[%s1420] sm:$0x1]
      %1422 = vset.pattern.permute.xlu0 4
      %1423 = vperm.xlu0 %1422, %v1376
      %v1424 = vpop.permute.xlu0 %1423
      %v1426 = vmul.f32 %v1424, %v1421
      %v1427 = vadd.f32 %v1417, %v1426
      %s1428 = sadd.s32 %s27, 125
      %s1429 = sld [smem:[#allocation3 + %s1428]]
      %s1430 = scalar_lea.vmem %s2, %s1429
      %v1431 = vld [vmem:[%s1430] sm:$0x1]
      %1432 = vset.pattern.permute.xlu0 5
      %1433 = vperm.xlu0 %1432, %v1376
      %v1434 = vpop.permute.xlu0 %1433
      %v1436 = vmul.f32 %v1434, %v1431
      %v1437 = vadd.f32 %v1427, %v1436
      %s1438 = sadd.s32 %s27, 126
      %s1439 = sld [smem:[#allocation3 + %s1438]]
      %s1440 = scalar_lea.vmem %s2, %s1439
      %v1441 = vld [vmem:[%s1440] sm:$0x1]
      %1442 = vset.pattern.permute.xlu0 6
      %1443 = vperm.xlu0 %1442, %v1376
      %v1444 = vpop.permute.xlu0 %1443
      %v1446 = vmul.f32 %v1444, %v1441
      %v1447 = vadd.f32 %v1437, %v1446
      %s1448 = sadd.s32 %s27, 127
      %s1449 = sld [smem:[#allocation3 + %s1448]]
      %s1450 = scalar_lea.vmem %s2, %s1449
      %v1451 = vld [vmem:[%s1450] sm:$0x1]
      %1452 = vset.pattern.permute.xlu0 7
      %1453 = vperm.xlu0 %1452, %v1376
      %v1454 = vpop.permute.xlu0 %1453
      %v1456 = vmul.f32 %v1454, %v1451
      %v1457 = vadd.f32 %v1447, %v1456
      %1459 = vrot.lane.b32.xlu0 %v1457, 120
      %v1460 = vpop.permute.xlu0 %1459
      %vm1462 = vcmask 1041344
      %1463 = vst.msk [vmem:[%s111] sm:$0x1] %vm1462, %v1460
    $region14: #{tpu_custom_call.1} parent=1 // loop_footer
      %s25 = sadd.s32 1, %s21
    $region15: #{tpu_custom_call.1} parent=1 // loop_footer_branch
      %20 = sbr.rel target = $region11
    $region16: #{tpu_custom_call.1} parent=1 // loop_exit
      _
    // Predicated region
    $region17: #{tpu_custom_call.1} parent=1 // pred_check
      _
    $region18: #{tpu_custom_call.1} parent=1 // pred_check_branch
      %1465 = sbr.rel (0) target = $region20
    $region19: #{tpu_custom_call.1} parent=1 // pred_region
      %s1467 = ssub.s32 128, 128
      %1468 = vsyncadd [#allocation5], %s1467
      %s1470 = sshll.u32 [#allocation4], 4
      %s1471 = int_to_ptr.vmem [resolvable:$true] %s1470
      %1473 = dma.vmem_to_hbm [thread:$0]  %s1471, 128, %s3, [#allocation5]
    $region20: #{tpu_custom_call.1} parent=1 // pred_fallthru
      _
    // Predicated region
    $region21: #{tpu_custom_call.1} parent=1 // pred_check
      _
    $region22: #{tpu_custom_call.1} parent=1 // pred_check_branch
      %1475 = sbr.rel (0) target = $region24
    $region23: #{tpu_custom_call.1} parent=1 // pred_region
      %1476 = dma.done [#allocation5], 128
    $region24: #{tpu_custom_call.1} parent=1 // pred_fallthru
      _
    %1477 = vsyncpa [#allocation5], 1

</llo_original>
